<compile_context>
chip_gen: v7x
topology: tpu7x:2x2x1
jax: 0.10.0
libtpu: 0.0.40
codegen_flags: <defaults>
</compile_context>

<pallas_src>
import functools
import math

import jax
import jax.numpy as jnp
import numpy as np
from jax.experimental import pallas as pl
from jax.experimental.pallas import tpu as pltpu

MASK_VALUE = -1e30          # large-negative additive mask (avoids -inf NaNs)
_VMEM_LIMIT = 48 * 1024 * 1024      # scoped VMEM limit (fits v7x 64 MiB phys)
_W_VMEM_BUDGET = 24 * 1024 * 1024   # budget for double-buffered weight tiles


def _pick_tile(n, cap):
    """Largest tile <= cap dividing n; prefer multiples of 128, then 16, then 8."""
    if n <= cap:
        return n
    for mult in (128, 16, 8):
        t = (cap // mult) * mult
        while t >= mult:
            if n % t == 0:
                return t
            t -= mult
    return n


def _pick_head_group(num_heads, d_k):
    """Smallest head group G with G*d_k a multiple of 128 (lane-dense stores);
    fall back to all heads (full-D block, always a legal block width)."""
    for g in range(1, num_heads):
        if num_heads % g == 0 and (g * d_k) % 128 == 0:
            return g
    return num_heads


def _pick_proj_tn(D, bytes_per_elem=2, budget=_W_VMEM_BUDGET):
    """Output-dim tile for the (D, D) projection weights: three double-buffered
    (D, tn) weight tiles must fit the VMEM budget (v7x/v5e concern)."""
    def fits(tn):
        return 3 * D * tn * bytes_per_elem * 2 <= budget
    if fits(D):
        return D
    best = None
    for t in range(128, D, 128):
        if D % t == 0 and fits(t):
            best = t
    return best if best is not None else D


def _build_kv_block_map(S, tq, tk, block_size, sparsity_factor):
    """For each q tile: list of kv tiles the local+strided mask can touch.
    Padded entries repeat the last valid block id so Pallas skips the DMA."""
    nq, nk = S // tq, S // tk
    i = np.arange(S)[:, None]
    j = np.arange(S)[None, :]
    half = block_size // 2
    keep = ((j >= i - half) & (j <= i + half)) | \
           ((j % sparsity_factor) == (i % sparsity_factor))
    blk = keep.reshape(nq, tq, nk, tk).any(axis=(1, 3))           # (nq, nk)
    counts = blk.sum(axis=1).astype(np.int32)                     # (nq,)
    max_kv = int(counts.max())
    ids = np.zeros((nq, max_kv), dtype=np.int32)
    for q in range(nq):
        nz = np.nonzero(blk[q])[0]
        ids[q, :len(nz)] = nz
        if 0 < len(nz) < max_kv:
            ids[q, len(nz):] = nz[-1]     # repeat last block -> no re-fetch
    # Flatten to 1D to avoid 2-D SMEM padding blowup.
    return jnp.asarray(ids.reshape(-1)), jnp.asarray(counts), max_kv


# --------------------------------------------------------------------------
# Kernels
# --------------------------------------------------------------------------
def _qkv_proj_kernel(x_ref, wq_ref, wk_ref, wv_ref, bq_ref, bk_ref, bv_ref,
                     q_ref, k_ref, v_ref, *, scale):
    x = x_ref[0]                                                   # (ts, D)
    q = jnp.dot(x, wq_ref[...], preferred_element_type=jnp.float32) + bq_ref[...]
    k = jnp.dot(x, wk_ref[...], preferred_element_type=jnp.float32) + bk_ref[...]
    v = jnp.dot(x, wv_ref[...], preferred_element_type=jnp.float32) + bv_ref[...]
    q_ref[0] = (q * scale).astype(q_ref.dtype)   # fold 1/sqrt(d_k) into Q
    k_ref[0] = k.astype(k_ref.dtype)
    v_ref[0] = v.astype(v_ref.dtype)


def _out_proj_kernel(x_ref, w_ref, b_ref, o_ref):
    y = jnp.dot(x_ref[0], w_ref[...],
                preferred_element_type=jnp.float32) + b_ref[...]
    o_ref[0] = y.astype(o_ref.dtype)


def _flash_sparse_kernel(ids_ref, cnt_ref, q_ref, k_ref, v_ref, o_ref,
                         m_sc, l_sc, acc_sc, *,
                         tq, tk, G, d_k, max_kv, block_size, sparsity_factor):
    qi = pl.program_id(2)
    ki = pl.program_id(3)

    @pl.when(ki == 0)
    def _init():
        m_sc[...] = jnp.full_like(m_sc, MASK_VALUE)
        l_sc[...] = jnp.zeros_like(l_sc)
        acc_sc[...] = jnp.zeros_like(acc_sc)

    @pl.when(ki < cnt_ref[qi])          # skip padded kv steps entirely
    def _compute():
        q = q_ref[0]                    # (tq, G*d_k)  G packed heads
        k = k_ref[0]                    # (tk, G*d_k)
        v = v_ref[0]

        # Sparse-mask bias for this (q-tile, kv-tile); shared by all G heads.
        kv_blk = ids_ref[qi * max_kv + ki]
        row = qi * tq + jax.lax.broadcasted_iota(jnp.int32, (tq, 1), 0)
        col = kv_blk * tk + jax.lax.broadcasted_iota(jnp.int32, (1, tk), 1)
        half = block_size // 2
        local = (col >= row - half) & (col <= row + half)
        if sparsity_factor & (sparsity_factor - 1) == 0:
            sf_mask = sparsity_factor - 1
            strided = (col & sf_mask) == (row & sf_mask)
        else:
            strided = (col % sparsity_factor) == (row % sparsity_factor)
        keep = local | strided                                     # (tq, tk)

        # Statically unrolled over the G packed heads (equivalent to a batched
        # 'gqd,gkd->gqk' einsum; MXU consumes the batch sequentially anyway).
        for h in range(G):
            sl = slice(h * d_k, (h + 1) * d_k)
            s = jnp.dot(q[:, sl], k[:, sl].T,
                        preferred_element_type=jnp.float32)        # (tq, tk)
            s = jnp.where(keep, s, MASK_VALUE)
            m_prev = m_sc[h]                                        # (tq, 1)
            m_new = jnp.maximum(m_prev, jnp.max(s, axis=-1, keepdims=True))
            alpha = jnp.exp(m_prev - m_new)
            # Zero masked entries explicitly -> robust even if a row is fully
            # masked within a visited tile.
            p = jnp.where(keep, jnp.exp(s - m_new), 0.0)
            l_sc[h] = alpha * l_sc[h] + jnp.sum(p, axis=-1, keepdims=True)
            acc_sc[h] = alpha * acc_sc[h] + jnp.dot(
                p.astype(v.dtype), v[:, sl],
                preferred_element_type=jnp.float32)
            m_sc[h] = m_new

    @pl.when(ki == pl.num_programs(3) - 1)
    def _finalize():
        parts = []
        for h in range(G):
            l = l_sc[h]
            inv_l = pl.reciprocal(jnp.where(l == 0.0, 1.0, l), approx=True)
            parts.append(acc_sc[h] * inv_l)
        # Lane-dense (tq, G*d_k) store straight into the (B, S, D) output.
        o_ref[0] = jnp.concatenate(parts, axis=-1).astype(o_ref.dtype)


# --------------------------------------------------------------------------
# Wrapper
# --------------------------------------------------------------------------
@functools.partial(jax.jit, static_argnames=("num_heads", "block_size",
                                             "sparsity_factor", "compute_dtype"))
def sparse_attention(x, params, *, num_heads, block_size, sparsity_factor,
                     compute_dtype=jnp.bfloat16):
    B, S, D = x.shape
    assert D % num_heads == 0
    d_k = D // num_heads
    wq, bq, wk, bk, wv, bv, wo, bo = params

    x_c = x.astype(compute_dtype)
    wq_c, wk_c, wv_c, wo_c = (w.astype(compute_dtype) for w in (wq, wk, wv, wo))
    bq_c, bk_c, bv_c, bo_c = (b.reshape(1, D).astype(jnp.float32)
                              for b in (bq, bk, bv, bo))

    ts = _pick_tile(S, 256)
    tn = _pick_proj_tn(D)

    x_spec = pl.BlockSpec((1, ts, D), lambda b, s, n: (b, s, 0))
    w_spec = pl.BlockSpec((D, tn), lambda b, s, n: (0, n))
    b_spec = pl.BlockSpec((1, tn), lambda b, s, n: (0, n))
    p_out_spec = pl.BlockSpec((1, ts, tn), lambda b, s, n: (b, s, n))
    proj_params = pltpu.CompilerParams(
        dimension_semantics=("parallel", "parallel", "parallel"),
        vmem_limit_bytes=_VMEM_LIMIT)

    # ---- fused QKV projection (x read once, bf16 matmuls, f32 acc) --------
    q, k, v = pl.pallas_call(
        functools.partial(_qkv_proj_kernel, scale=1.0 / math.sqrt(d_k)),
        out_shape=tuple(jax.ShapeDtypeStruct((B, S, D), compute_dtype)
                        for _ in range(3)),
        grid_spec=pltpu.PrefetchScalarGridSpec(
            num_scalar_prefetch=0,
            grid=(B, S // ts, D // tn),
            in_specs=[x_spec, w_spec, w_spec, w_spec,
                      b_spec, b_spec, b_spec],
            out_specs=(p_out_spec, p_out_spec, p_out_spec)),
        compiler_params=proj_params,
    )(x_c, wq_c, wk_c, wv_c, bq_c, bk_c, bv_c)

    # ---- block-sparse flash attention (Q/K/V stay in (B, S, D) layout) ----
    G = _pick_head_group(num_heads, d_k)       # heads packed per grid step
    n_groups = num_heads // G
    gd = G * d_k

    tq = _pick_tile(S, 256)
    tk = _pick_tile(S, 512)
    kv_ids, kv_counts, max_kv = _build_kv_block_map(
        S, tq, tk, block_size, sparsity_factor)

    def q_map(b, g, qi, ki, ids, cnt):
        return (b, qi, g)

    def kv_map(b, g, qi, ki, ids, cnt):
        return (b, ids[qi * max_kv + ki], g)

    q_spec = pl.BlockSpec((1, tq, gd), q_map)
    kv_spec = pl.BlockSpec((1, tk, gd), kv_map)
    o_spec = pl.BlockSpec((1, tq, gd), q_map)

    attn = pl.pallas_call(
        functools.partial(_flash_sparse_kernel, tq=tq, tk=tk, G=G, d_k=d_k,
                          max_kv=max_kv, block_size=block_size,
                          sparsity_factor=sparsity_factor),
        out_shape=jax.ShapeDtypeStruct((B, S, D), compute_dtype),
        grid_spec=pltpu.PrefetchScalarGridSpec(
            num_scalar_prefetch=2,
            grid=(B, n_groups, S // tq, max_kv),
            in_specs=[q_spec, kv_spec, kv_spec],
            out_specs=o_spec,
            scratch_shapes=[pltpu.VMEM((G, tq, 1), jnp.float32),
                            pltpu.VMEM((G, tq, 1), jnp.float32),
                            pltpu.VMEM((G, tq, d_k), jnp.float32)]),
        compiler_params=pltpu.CompilerParams(
            dimension_semantics=("parallel", "parallel", "parallel",
                                 "arbitrary"),
            vmem_limit_bytes=_VMEM_LIMIT),
    )(kv_ids, kv_counts, q, k, v)

    # ---- output projection (input already (B, S, D); no transpose) --------
    out = pl.pallas_call(
        _out_proj_kernel,
        out_shape=jax.ShapeDtypeStruct((B, S, D), x.dtype),
        grid_spec=pltpu.PrefetchScalarGridSpec(
            num_scalar_prefetch=0,
            grid=(B, S // ts, D // tn),
            in_specs=[x_spec, w_spec, b_spec],
            out_specs=p_out_spec),
        compiler_params=proj_params,
    )(attn, wo_c, bo_c)
    return out


# --------------------------------------------------------------------------
# Reference & test harness
# --------------------------------------------------------------------------
def create_sparse_mask(seq_length, block_size, sparsity_factor):
    i = jnp.arange(seq_length)[:, None]
    j = jnp.arange(seq_length)[None, :]
    half = block_size // 2
    local = (j >= i - half) & (j <= i + half)
    strided = (j % sparsity_factor) == (i % sparsity_factor)
    return jnp.where(local | strided, 0.0, -jnp.inf).astype(jnp.float32)


def reference_sparse_attention(x, params, *, num_heads, block_size,
                               sparsity_factor):
    B, S, D = x.shape
    d_k = D // num_heads
    wq, bq, wk, bk, wv, bv, wo, bo = params
    q = (x @ wq + bq).reshape(B, S, num_heads, d_k).transpose(0, 2, 1, 3)
    k = (x @ wk + bk).reshape(B, S, num_heads, d_k).transpose(0, 2, 1, 3)
    v = (x @ wv + bv).reshape(B, S, num_heads, d_k).transpose(0, 2, 1, 3)
    scores = jnp.einsum("bhqd,bhkd->bhqk", q, k) / math.sqrt(d_k)
    scores = scores + create_sparse_mask(S, block_size,
                                         sparsity_factor)[None, None]
    probs = jax.nn.softmax(scores, axis=-1)
    out = jnp.einsum("bhqk,bhkd->bhqd", probs, v)
    out = out.transpose(0, 2, 1, 3).reshape(B, S, D)
    return out @ wo + bo


def init_params(key, d_model):
    """nn.Linear-style U(-1/sqrt(fan_in), 1/sqrt(fan_in)); weights [D_in, D_out]."""
    bound = 1.0 / math.sqrt(d_model)
    keys = jax.random.split(key, 8)
    params = []
    for idx in range(4):
        w = jax.random.uniform(keys[2 * idx], (d_model, d_model),
                               minval=-bound, maxval=bound, dtype=jnp.float32)
        b = jax.random.uniform(keys[2 * idx + 1], (d_model,),
                               minval=-bound, maxval=bound, dtype=jnp.float32)
        params += [w, b]
    return tuple(params)


if __name__ == "__main__":
    B, S, D = 2, 8, 32
    num_heads = 4
    block_size = 4
    sparsity_factor = 2

    key = jax.random.PRNGKey(0)
    kx, kp = jax.random.split(key)
    x = jax.random.normal(kx, (B, S, D), dtype=jnp.float32)
    params = init_params(kp, D)

    out = sparse_attention(x, params, num_heads=num_heads,
                           block_size=block_size,
                           sparsity_factor=sparsity_factor)
    out = jax.block_until_ready(out)

    ref = reference_sparse_attention(x, params, num_heads=num_heads,
                                     block_size=block_size,
                                     sparsity_factor=sparsity_factor)
    assert out.shape == (B, S, D)
    # bf16 matmuls + approx reciprocal -> modest tolerance vs f32 reference.
    assert jnp.allclose(out, ref, atol=2e-2, rtol=2e-2), \
        f"max abs err {jnp.max(jnp.abs(out - ref))}"

    print("KERNEL_OK")
</pallas_src>

<mosaic_0001>
module attributes {stable_mosaic.version = 11 : i64} {
  func.func @_flash_sparse_kernel(%arg0: i32, %arg1: i32, %arg2: i32, %arg3: i32, %arg4: memref<1xi32, #tpu.memory_space<smem>>, %arg5: memref<1xi32, #tpu.memory_space<smem>>, %arg6: memref<1x8x32xbf16, #tpu.memory_space<vmem>>, %arg7: memref<1x8x32xbf16, #tpu.memory_space<vmem>>, %arg8: memref<1x8x32xbf16, #tpu.memory_space<vmem>>, %arg9: memref<1x8x32xbf16, #tpu.memory_space<vmem>>, %arg10: memref<4x8x1xf32, #tpu.memory_space<vmem>>, %arg11: memref<4x8x1xf32, #tpu.memory_space<vmem>>, %arg12: memref<4x8x8xf32, #tpu.memory_space<vmem>>) attributes {dimension_semantics = [#tpu.dimension_semantics<parallel>, #tpu.dimension_semantics<parallel>, #tpu.dimension_semantics<parallel>, #tpu.dimension_semantics<arbitrary>], iteration_bounds = array<i64: 2, 1, 1, 1>, scalar_prefetch = 2 : i64, scratch_operands = 3 : i64, tpu.core_type = #tpu.core_type<tc>, window_params = [{transform_indices = @transform_0, window_bounds = array<i64: 1, 8, 32>}, {transform_indices = @transform_1, window_bounds = array<i64: 1, 8, 32>}, {transform_indices = @transform_2, window_bounds = array<i64: 1, 8, 32>}, {transform_indices = @transform_3, window_bounds = array<i64: 1, 8, 32>}]} {
    %c0_i32 = arith.constant 0 : i32
    %0 = arith.cmpi eq, %arg3, %c0_i32 : i32
    %1 = arith.extui %0 : i1 to i32
    %c0_i32_0 = arith.constant 0 : i32
    %2 = arith.cmpi ne, %1, %c0_i32_0 : i32
    scf.if %2 {
      %cst = arith.constant -1.000000e+30 : f32
      %11 = vector.broadcast %cst : f32 to vector<4x8x1xf32>
      %c0 = arith.constant 0 : index
      %c0_4 = arith.constant 0 : index
      %c0_5 = arith.constant 0 : index
      %12 = vector.load %arg10[%c0, %c0_4, %c0_5] : memref<4x8x1xf32, #tpu.memory_space<vmem>>, vector<4x8x1xf32>
      tpu.vector_store %arg10[%c0, %c0_4, %c0_5], %11 {strides = array<i32>} : memref<4x8x1xf32, #tpu.memory_space<vmem>>, vector<4x8x1xf32>,
      %cst_6 = arith.constant 0.000000e+00 : f32
      %13 = vector.broadcast %cst_6 : f32 to vector<4x8x1xf32>
      %c0_7 = arith.constant 0 : index
      %c0_8 = arith.constant 0 : index
      %c0_9 = arith.constant 0 : index
      %14 = vector.load %arg11[%c0_7, %c0_8, %c0_9] : memref<4x8x1xf32, #tpu.memory_space<vmem>>, vector<4x8x1xf32>
      tpu.vector_store %arg11[%c0_7, %c0_8, %c0_9], %13 {strides = array<i32>} : memref<4x8x1xf32, #tpu.memory_space<vmem>>, vector<4x8x1xf32>,
      %cst_10 = arith.constant 0.000000e+00 : f32
      %15 = vector.broadcast %cst_10 : f32 to vector<4x8x8xf32>
      %c0_11 = arith.constant 0 : index
      %c0_12 = arith.constant 0 : index
      %c0_13 = arith.constant 0 : index
      %16 = vector.load %arg12[%c0_11, %c0_12, %c0_13] : memref<4x8x8xf32, #tpu.memory_space<vmem>>, vector<4x8x8xf32>
      tpu.vector_store %arg12[%c0_11, %c0_12, %c0_13], %15 {strides = array<i32>} : memref<4x8x8xf32, #tpu.memory_space<vmem>>, vector<4x8x8xf32>,
    } else {
    }
    %3 = arith.index_cast %arg2 : i32 to index
    %4 = memref.load %arg5[%3] : memref<1xi32, #tpu.memory_space<smem>>
    %5 = arith.cmpi slt, %arg3, %4 : i32
    %6 = arith.extui %5 : i1 to i32
    %c0_i32_1 = arith.constant 0 : i32
    %7 = arith.cmpi ne, %6, %c0_i32_1 : i32
    scf.if %7 {
      %c0 = arith.constant 0 : index
      %c0_4 = arith.constant 0 : index
      %c0_5 = arith.constant 0 : index
      %11 = vector.load %arg6[%c0, %c0_4, %c0_5] : memref<1x8x32xbf16, #tpu.memory_space<vmem>>, vector<1x8x32xbf16>
      %12 = vector.shape_cast %11 : vector<1x8x32xbf16> to vector<8x32xbf16>
      %c0_6 = arith.constant 0 : index
      %c0_7 = arith.constant 0 : index
      %c0_8 = arith.constant 0 : index
      %13 = vector.load %arg7[%c0_6, %c0_7, %c0_8] : memref<1x8x32xbf16, #tpu.memory_space<vmem>>, vector<1x8x32xbf16>
      %14 = vector.shape_cast %13 : vector<1x8x32xbf16> to vector<8x32xbf16>
      %c0_9 = arith.constant 0 : index
      %c0_10 = arith.constant 0 : index
      %c0_11 = arith.constant 0 : index
      %15 = vector.load %arg8[%c0_9, %c0_10, %c0_11] : memref<1x8x32xbf16, #tpu.memory_space<vmem>>, vector<1x8x32xbf16>
      %16 = vector.shape_cast %15 : vector<1x8x32xbf16> to vector<8x32xbf16>
      %c1_i32 = arith.constant 1 : i32
      %17 = arith.muli %arg2, %c1_i32 : i32
      %18 = arith.addi %17, %arg3 : i32
      %19 = arith.index_cast %18 : i32 to index
      %20 = memref.load %arg4[%19] : memref<1xi32, #tpu.memory_space<smem>>
      %c8_i32 = arith.constant 8 : i32
      %21 = arith.muli %arg2, %c8_i32 : i32
      %22 = tpu.iota {dimensions = array<i32: 0>} : vector<8x1xi32>
      %23 = vector.broadcast %21 : i32 to vector<8x1xi32>
      %24 = arith.addi %23, %22 : vector<8x1xi32>
      %c8_i32_12 = arith.constant 8 : i32
      %25 = arith.muli %20, %c8_i32_12 : i32
      %26 = tpu.iota {dimensions = array<i32: 1>} : vector<1x8xi32>
      %27 = vector.broadcast %25 : i32 to vector<1x8xi32>
      %28 = arith.addi %27, %26 : vector<1x8xi32>
      %c2_i32 = arith.constant 2 : i32
      %29 = vector.broadcast %c2_i32 : i32 to vector<8x1xi32>
      %30 = arith.subi %24, %29 : vector<8x1xi32>
      %31 = vector.broadcast %28 : vector<1x8xi32> to vector<8x8xi32>
      %32 = vector.broadcast %30 : vector<8x1xi32> to vector<8x8xi32>
      %33 = arith.cmpi sge, %31, %32 : vector<8x8xi32>
      %c2_i32_13 = arith.constant 2 : i32
      %34 = vector.broadcast %c2_i32_13 : i32 to vector<8x1xi32>
      %35 = arith.addi %24, %34 : vector<8x1xi32>
      %36 = vector.broadcast %28 : vector<1x8xi32> to vector<8x8xi32>
      %37 = vector.broadcast %35 : vector<8x1xi32> to vector<8x8xi32>
      %38 = arith.cmpi sle, %36, %37 : vector<8x8xi32>
      %39 = arith.andi %33, %38 : vector<8x8xi1>
      %c1_i32_14 = arith.constant 1 : i32
      %40 = vector.broadcast %c1_i32_14 : i32 to vector<1x8xi32>
      %41 = arith.andi %28, %40 : vector<1x8xi32>
      %c1_i32_15 = arith.constant 1 : i32
      %42 = vector.broadcast %c1_i32_15 : i32 to vector<8x1xi32>
      %43 = arith.andi %24, %42 : vector<8x1xi32>
      %44 = vector.broadcast %41 : vector<1x8xi32> to vector<8x8xi32>
      %45 = vector.broadcast %43 : vector<8x1xi32> to vector<8x8xi32>
      %46 = arith.cmpi eq, %44, %45 : vector<8x8xi32>
      %47 = arith.ori %39, %46 : vector<8x8xi1>
      %48 = vector.extract_strided_slice %12 {offsets = [0, 0], sizes = [8, 8], strides = [1, 1]} : vector<8x32xbf16> to vector<8x8xbf16>
      %49 = vector.extract_strided_slice %14 {offsets = [0, 0], sizes = [8, 8], strides = [1, 1]} : vector<8x32xbf16> to vector<8x8xbf16>
      %50 = tpu.transpose %49, [1, 0] : vector<8x8xbf16> -> vector<8x8xbf16>
      %cst = arith.constant dense<0.000000e+00> : vector<8x8xf32>
      %51 = tpu.matmul %48, %50, %cst {dimension_numbers = #tpu.dot_dimension_numbers<[1], [0], [0], [1], [0, 0, 1, 1], [], []>} : vector<8x8xbf16>, vector<8x8xbf16>, vector<8x8xf32> -> vector<8x8xf32>
      %cst_16 = arith.constant -1.000000e+30 : f32
      %52 = vector.broadcast %cst_16 : f32 to vector<8x8xf32>
      %53 = arith.select %47, %51, %52 : vector<8x8xi1>, vector<8x8xf32>
      %c0_17 = arith.constant 0 : index
      %c0_18 = arith.constant 0 : index
      %c0_19 = arith.constant 0 : index
      %54 = vector.load %arg10[%c0_17, %c0_18, %c0_19] : memref<4x8x1xf32, #tpu.memory_space<vmem>>, vector<1x8x1xf32>
      %55 = vector.shape_cast %54 : vector<1x8x1xf32> to vector<8x1xf32>
      %cst_20 = arith.constant dense<0xFF800000> : vector<8xf32>
      %56 = vector.multi_reduction <maximumf>, %53, %cst_20 [1] : vector<8x8xf32> to vector<8xf32>
      %57 = vector.shape_cast %56 : vector<8xf32> to vector<8x1xf32>
      %58 = arith.maximumf %55, %57 : vector<8x1xf32>
      %59 = arith.subf %55, %58 : vector<8x1xf32>
      %60 = math.exp %59 : vector<8x1xf32>
      %61 = vector.broadcast %58 : vector<8x1xf32> to vector<8x8xf32>
      %62 = arith.subf %53, %61 : vector<8x8xf32>
      %63 = math.exp %62 : vector<8x8xf32>
      %cst_21 = arith.constant 0.000000e+00 : f32
      %64 = vector.broadcast %cst_21 : f32 to vector<8x8xf32>
      %65 = arith.select %47, %63, %64 : vector<8x8xi1>, vector<8x8xf32>
      %c0_22 = arith.constant 0 : index
      %c0_23 = arith.constant 0 : index
      %c0_24 = arith.constant 0 : index
      %66 = vector.load %arg11[%c0_22, %c0_23, %c0_24] : memref<4x8x1xf32, #tpu.memory_space<vmem>>, vector<1x8x1xf32>
      %67 = vector.shape_cast %66 : vector<1x8x1xf32> to vector<8x1xf32>
      %68 = arith.mulf %60, %67 : vector<8x1xf32>
      %cst_25 = arith.constant dense<0.000000e+00> : vector<8xf32>
      %69 = vector.multi_reduction <add>, %65, %cst_25 [1] : vector<8x8xf32> to vector<8xf32>
      %70 = vector.shape_cast %69 : vector<8xf32> to vector<8x1xf32>
      %71 = arith.addf %68, %70 : vector<8x1xf32>
      %c0_26 = arith.constant 0 : index
      %c0_27 = arith.constant 0 : index
      %c0_28 = arith.constant 0 : index
      %72 = vector.load %arg11[%c0_26, %c0_27, %c0_28] : memref<4x8x1xf32, #tpu.memory_space<vmem>>, vector<1x8x1xf32>
      %73 = vector.shape_cast %72 : vector<1x8x1xf32> to vector<8x1xf32>
      %74 = vector.shape_cast %71 : vector<8x1xf32> to vector<1x8x1xf32>
      tpu.vector_store %arg11[%c0_26, %c0_27, %c0_28], %74 {strides = array<i32>} : memref<4x8x1xf32, #tpu.memory_space<vmem>>, vector<1x8x1xf32>,
      %c0_29 = arith.constant 0 : index
      %c0_30 = arith.constant 0 : index
      %c0_31 = arith.constant 0 : index
      %75 = vector.load %arg12[%c0_29, %c0_30, %c0_31] : memref<4x8x8xf32, #tpu.memory_space<vmem>>, vector<1x8x8xf32>
      %76 = vector.shape_cast %75 : vector<1x8x8xf32> to vector<8x8xf32>
      %77 = vector.broadcast %60 : vector<8x1xf32> to vector<8x8xf32>
      %78 = arith.mulf %77, %76 : vector<8x8xf32>
      %79 = arith.truncf %65 : vector<8x8xf32> to vector<8x8xbf16>
      %80 = vector.extract_strided_slice %16 {offsets = [0, 0], sizes = [8, 8], strides = [1, 1]} : vector<8x32xbf16> to vector<8x8xbf16>
      %cst_32 = arith.constant dense<0.000000e+00> : vector<8x8xf32>
      %81 = tpu.matmul %79, %80, %cst_32 {dimension_numbers = #tpu.dot_dimension_numbers<[1], [0], [0], [1], [0, 0, 1, 1], [], []>} : vector<8x8xbf16>, vector<8x8xbf16>, vector<8x8xf32> -> vector<8x8xf32>
      %82 = arith.addf %78, %81 : vector<8x8xf32>
      %c0_33 = arith.constant 0 : index
      %c0_34 = arith.constant 0 : index
      %c0_35 = arith.constant 0 : index
      %83 = vector.load %arg12[%c0_33, %c0_34, %c0_35] : memref<4x8x8xf32, #tpu.memory_space<vmem>>, vector<1x8x8xf32>
      %84 = vector.shape_cast %83 : vector<1x8x8xf32> to vector<8x8xf32>
      %85 = vector.shape_cast %82 : vector<8x8xf32> to vector<1x8x8xf32>
      tpu.vector_store %arg12[%c0_33, %c0_34, %c0_35], %85 {strides = array<i32>} : memref<4x8x8xf32, #tpu.memory_space<vmem>>, vector<1x8x8xf32>,
      %c0_36 = arith.constant 0 : index
      %c0_37 = arith.constant 0 : index
      %c0_38 = arith.constant 0 : index
      %86 = vector.load %arg10[%c0_36, %c0_37, %c0_38] : memref<4x8x1xf32, #tpu.memory_space<vmem>>, vector<1x8x1xf32>
      %87 = vector.shape_cast %86 : vector<1x8x1xf32> to vector<8x1xf32>
      %88 = vector.shape_cast %58 : vector<8x1xf32> to vector<1x8x1xf32>
      tpu.vector_store %arg10[%c0_36, %c0_37, %c0_38], %88 {strides = array<i32>} : memref<4x8x1xf32, #tpu.memory_space<vmem>>, vector<1x8x1xf32>,
      %89 = vector.extract_strided_slice %12 {offsets = [0, 8], sizes = [8, 8], strides = [1, 1]} : vector<8x32xbf16> to vector<8x8xbf16>
      %90 = vector.extract_strided_slice %14 {offsets = [0, 8], sizes = [8, 8], strides = [1, 1]} : vector<8x32xbf16> to vector<8x8xbf16>
      %91 = tpu.transpose %90, [1, 0] : vector<8x8xbf16> -> vector<8x8xbf16>
      %cst_39 = arith.constant dense<0.000000e+00> : vector<8x8xf32>
      %92 = tpu.matmul %89, %91, %cst_39 {dimension_numbers = #tpu.dot_dimension_numbers<[1], [0], [0], [1], [0, 0, 1, 1], [], []>} : vector<8x8xbf16>, vector<8x8xbf16>, vector<8x8xf32> -> vector<8x8xf32>
      %cst_40 = arith.constant -1.000000e+30 : f32
      %93 = vector.broadcast %cst_40 : f32 to vector<8x8xf32>
      %94 = arith.select %47, %92, %93 : vector<8x8xi1>, vector<8x8xf32>
      %c1 = arith.constant 1 : index
      %c0_41 = arith.constant 0 : index
      %c0_42 = arith.constant 0 : index
      %95 = vector.load %arg10[%c1, %c0_41, %c0_42] : memref<4x8x1xf32, #tpu.memory_space<vmem>>, vector<1x8x1xf32>
      %96 = vector.shape_cast %95 : vector<1x8x1xf32> to vector<8x1xf32>
      %cst_43 = arith.constant dense<0xFF800000> : vector<8xf32>
      %97 = vector.multi_reduction <maximumf>, %94, %cst_43 [1] : vector<8x8xf32> to vector<8xf32>
      %98 = vector.shape_cast %97 : vector<8xf32> to vector<8x1xf32>
      %99 = arith.maximumf %96, %98 : vector<8x1xf32>
      %100 = arith.subf %96, %99 : vector<8x1xf32>
      %101 = math.exp %100 : vector<8x1xf32>
      %102 = vector.broadcast %99 : vector<8x1xf32> to vector<8x8xf32>
      %103 = arith.subf %94, %102 : vector<8x8xf32>
      %104 = math.exp %103 : vector<8x8xf32>
      %cst_44 = arith.constant 0.000000e+00 : f32
      %105 = vector.broadcast %cst_44 : f32 to vector<8x8xf32>
      %106 = arith.select %47, %104, %105 : vector<8x8xi1>, vector<8x8xf32>
      %c1_45 = arith.constant 1 : index
      %c0_46 = arith.constant 0 : index
      %c0_47 = arith.constant 0 : index
      %107 = vector.load %arg11[%c1_45, %c0_46, %c0_47] : memref<4x8x1xf32, #tpu.memory_space<vmem>>, vector<1x8x1xf32>
      %108 = vector.shape_cast %107 : vector<1x8x1xf32> to vector<8x1xf32>
      %109 = arith.mulf %101, %108 : vector<8x1xf32>
      %cst_48 = arith.constant dense<0.000000e+00> : vector<8xf32>
      %110 = vector.multi_reduction <add>, %106, %cst_48 [1] : vector<8x8xf32> to vector<8xf32>
      %111 = vector.shape_cast %110 : vector<8xf32> to vector<8x1xf32>
      %112 = arith.addf %109, %111 : vector<8x1xf32>
      %c1_49 = arith.constant 1 : index
      %c0_50 = arith.constant 0 : index
      %c0_51 = arith.constant 0 : index
      %113 = vector.load %arg11[%c1_49, %c0_50, %c0_51] : memref<4x8x1xf32, #tpu.memory_space<vmem>>, vector<1x8x1xf32>
      %114 = vector.shape_cast %113 : vector<1x8x1xf32> to vector<8x1xf32>
      %115 = vector.shape_cast %112 : vector<8x1xf32> to vector<1x8x1xf32>
      tpu.vector_store %arg11[%c1_49, %c0_50, %c0_51], %115 {strides = array<i32>} : memref<4x8x1xf32, #tpu.memory_space<vmem>>, vector<1x8x1xf32>,
      %c1_52 = arith.constant 1 : index
      %c0_53 = arith.constant 0 : index
      %c0_54 = arith.constant 0 : index
      %116 = vector.load %arg12[%c1_52, %c0_53, %c0_54] : memref<4x8x8xf32, #tpu.memory_space<vmem>>, vector<1x8x8xf32>
      %117 = vector.shape_cast %116 : vector<1x8x8xf32> to vector<8x8xf32>
      %118 = vector.broadcast %101 : vector<8x1xf32> to vector<8x8xf32>
      %119 = arith.mulf %118, %117 : vector<8x8xf32>
      %120 = arith.truncf %106 : vector<8x8xf32> to vector<8x8xbf16>
      %121 = vector.extract_strided_slice %16 {offsets = [0, 8], sizes = [8, 8], strides = [1, 1]} : vector<8x32xbf16> to vector<8x8xbf16>
      %cst_55 = arith.constant dense<0.000000e+00> : vector<8x8xf32>
      %122 = tpu.matmul %120, %121, %cst_55 {dimension_numbers = #tpu.dot_dimension_numbers<[1], [0], [0], [1], [0, 0, 1, 1], [], []>} : vector<8x8xbf16>, vector<8x8xbf16>, vector<8x8xf32> -> vector<8x8xf32>
      %123 = arith.addf %119, %122 : vector<8x8xf32>
      %c1_56 = arith.constant 1 : index
      %c0_57 = arith.constant 0 : index
      %c0_58 = arith.constant 0 : index
      %124 = vector.load %arg12[%c1_56, %c0_57, %c0_58] : memref<4x8x8xf32, #tpu.memory_space<vmem>>, vector<1x8x8xf32>
      %125 = vector.shape_cast %124 : vector<1x8x8xf32> to vector<8x8xf32>
      %126 = vector.shape_cast %123 : vector<8x8xf32> to vector<1x8x8xf32>
      tpu.vector_store %arg12[%c1_56, %c0_57, %c0_58], %126 {strides = array<i32>} : memref<4x8x8xf32, #tpu.memory_space<vmem>>, vector<1x8x8xf32>,
      %c1_59 = arith.constant 1 : index
      %c0_60 = arith.constant 0 : index
      %c0_61 = arith.constant 0 : index
      %127 = vector.load %arg10[%c1_59, %c0_60, %c0_61] : memref<4x8x1xf32, #tpu.memory_space<vmem>>, vector<1x8x1xf32>
      %128 = vector.shape_cast %127 : vector<1x8x1xf32> to vector<8x1xf32>
      %129 = vector.shape_cast %99 : vector<8x1xf32> to vector<1x8x1xf32>
      tpu.vector_store %arg10[%c1_59, %c0_60, %c0_61], %129 {strides = array<i32>} : memref<4x8x1xf32, #tpu.memory_space<vmem>>, vector<1x8x1xf32>,
      %130 = vector.extract_strided_slice %12 {offsets = [0, 16], sizes = [8, 8], strides = [1, 1]} : vector<8x32xbf16> to vector<8x8xbf16>
      %131 = vector.extract_strided_slice %14 {offsets = [0, 16], sizes = [8, 8], strides = [1, 1]} : vector<8x32xbf16> to vector<8x8xbf16>
      %132 = tpu.transpose %131, [1, 0] : vector<8x8xbf16> -> vector<8x8xbf16>
      %cst_62 = arith.constant dense<0.000000e+00> : vector<8x8xf32>
      %133 = tpu.matmul %130, %132, %cst_62 {dimension_numbers = #tpu.dot_dimension_numbers<[1], [0], [0], [1], [0, 0, 1, 1], [], []>} : vector<8x8xbf16>, vector<8x8xbf16>, vector<8x8xf32> -> vector<8x8xf32>
      %cst_63 = arith.constant -1.000000e+30 : f32
      %134 = vector.broadcast %cst_63 : f32 to vector<8x8xf32>
      %135 = arith.select %47, %133, %134 : vector<8x8xi1>, vector<8x8xf32>
      %c2 = arith.constant 2 : index
      %c0_64 = arith.constant 0 : index
      %c0_65 = arith.constant 0 : index
      %136 = vector.load %arg10[%c2, %c0_64, %c0_65] : memref<4x8x1xf32, #tpu.memory_space<vmem>>, vector<1x8x1xf32>
      %137 = vector.shape_cast %136 : vector<1x8x1xf32> to vector<8x1xf32>
      %cst_66 = arith.constant dense<0xFF800000> : vector<8xf32>
      %138 = vector.multi_reduction <maximumf>, %135, %cst_66 [1] : vector<8x8xf32> to vector<8xf32>
      %139 = vector.shape_cast %138 : vector<8xf32> to vector<8x1xf32>
      %140 = arith.maximumf %137, %139 : vector<8x1xf32>
      %141 = arith.subf %137, %140 : vector<8x1xf32>
      %142 = math.exp %141 : vector<8x1xf32>
      %143 = vector.broadcast %140 : vector<8x1xf32> to vector<8x8xf32>
      %144 = arith.subf %135, %143 : vector<8x8xf32>
      %145 = math.exp %144 : vector<8x8xf32>
      %cst_67 = arith.constant 0.000000e+00 : f32
      %146 = vector.broadcast %cst_67 : f32 to vector<8x8xf32>
      %147 = arith.select %47, %145, %146 : vector<8x8xi1>, vector<8x8xf32>
      %c2_68 = arith.constant 2 : index
      %c0_69 = arith.constant 0 : index
      %c0_70 = arith.constant 0 : index
      %148 = vector.load %arg11[%c2_68, %c0_69, %c0_70] : memref<4x8x1xf32, #tpu.memory_space<vmem>>, vector<1x8x1xf32>
      %149 = vector.shape_cast %148 : vector<1x8x1xf32> to vector<8x1xf32>
      %150 = arith.mulf %142, %149 : vector<8x1xf32>
      %cst_71 = arith.constant dense<0.000000e+00> : vector<8xf32>
      %151 = vector.multi_reduction <add>, %147, %cst_71 [1] : vector<8x8xf32> to vector<8xf32>
      %152 = vector.shape_cast %151 : vector<8xf32> to vector<8x1xf32>
      %153 = arith.addf %150, %152 : vector<8x1xf32>
      %c2_72 = arith.constant 2 : index
      %c0_73 = arith.constant 0 : index
      %c0_74 = arith.constant 0 : index
      %154 = vector.load %arg11[%c2_72, %c0_73, %c0_74] : memref<4x8x1xf32, #tpu.memory_space<vmem>>, vector<1x8x1xf32>
      %155 = vector.shape_cast %154 : vector<1x8x1xf32> to vector<8x1xf32>
      %156 = vector.shape_cast %153 : vector<8x1xf32> to vector<1x8x1xf32>
      tpu.vector_store %arg11[%c2_72, %c0_73, %c0_74], %156 {strides = array<i32>} : memref<4x8x1xf32, #tpu.memory_space<vmem>>, vector<1x8x1xf32>,
      %c2_75 = arith.constant 2 : index
      %c0_76 = arith.constant 0 : index
      %c0_77 = arith.constant 0 : index
      %157 = vector.load %arg12[%c2_75, %c0_76, %c0_77] : memref<4x8x8xf32, #tpu.memory_space<vmem>>, vector<1x8x8xf32>
      %158 = vector.shape_cast %157 : vector<1x8x8xf32> to vector<8x8xf32>
      %159 = vector.broadcast %142 : vector<8x1xf32> to vector<8x8xf32>
      %160 = arith.mulf %159, %158 : vector<8x8xf32>
      %161 = arith.truncf %147 : vector<8x8xf32> to vector<8x8xbf16>
      %162 = vector.extract_strided_slice %16 {offsets = [0, 16], sizes = [8, 8], strides = [1, 1]} : vector<8x32xbf16> to vector<8x8xbf16>
      %cst_78 = arith.constant dense<0.000000e+00> : vector<8x8xf32>
      %163 = tpu.matmul %161, %162, %cst_78 {dimension_numbers = #tpu.dot_dimension_numbers<[1], [0], [0], [1], [0, 0, 1, 1], [], []>} : vector<8x8xbf16>, vector<8x8xbf16>, vector<8x8xf32> -> vector<8x8xf32>
      %164 = arith.addf %160, %163 : vector<8x8xf32>
      %c2_79 = arith.constant 2 : index
      %c0_80 = arith.constant 0 : index
      %c0_81 = arith.constant 0 : index
      %165 = vector.load %arg12[%c2_79, %c0_80, %c0_81] : memref<4x8x8xf32, #tpu.memory_space<vmem>>, vector<1x8x8xf32>
      %166 = vector.shape_cast %165 : vector<1x8x8xf32> to vector<8x8xf32>
      %167 = vector.shape_cast %164 : vector<8x8xf32> to vector<1x8x8xf32>
      tpu.vector_store %arg12[%c2_79, %c0_80, %c0_81], %167 {strides = array<i32>} : memref<4x8x8xf32, #tpu.memory_space<vmem>>, vector<1x8x8xf32>,
      %c2_82 = arith.constant 2 : index
      %c0_83 = arith.constant 0 : index
      %c0_84 = arith.constant 0 : index
      %168 = vector.load %arg10[%c2_82, %c0_83, %c0_84] : memref<4x8x1xf32, #tpu.memory_space<vmem>>, vector<1x8x1xf32>
      %169 = vector.shape_cast %168 : vector<1x8x1xf32> to vector<8x1xf32>
      %170 = vector.shape_cast %140 : vector<8x1xf32> to vector<1x8x1xf32>
      tpu.vector_store %arg10[%c2_82, %c0_83, %c0_84], %170 {strides = array<i32>} : memref<4x8x1xf32, #tpu.memory_space<vmem>>, vector<1x8x1xf32>,
      %171 = vector.extract_strided_slice %12 {offsets = [0, 24], sizes = [8, 8], strides = [1, 1]} : vector<8x32xbf16> to vector<8x8xbf16>
      %172 = vector.extract_strided_slice %14 {offsets = [0, 24], sizes = [8, 8], strides = [1, 1]} : vector<8x32xbf16> to vector<8x8xbf16>
      %173 = tpu.transpose %172, [1, 0] : vector<8x8xbf16> -> vector<8x8xbf16>
      %cst_85 = arith.constant dense<0.000000e+00> : vector<8x8xf32>
      %174 = tpu.matmul %171, %173, %cst_85 {dimension_numbers = #tpu.dot_dimension_numbers<[1], [0], [0], [1], [0, 0, 1, 1], [], []>} : vector<8x8xbf16>, vector<8x8xbf16>, vector<8x8xf32> -> vector<8x8xf32>
      %cst_86 = arith.constant -1.000000e+30 : f32
      %175 = vector.broadcast %cst_86 : f32 to vector<8x8xf32>
      %176 = arith.select %47, %174, %175 : vector<8x8xi1>, vector<8x8xf32>
      %c3 = arith.constant 3 : index
      %c0_87 = arith.constant 0 : index
      %c0_88 = arith.constant 0 : index
      %177 = vector.load %arg10[%c3, %c0_87, %c0_88] : memref<4x8x1xf32, #tpu.memory_space<vmem>>, vector<1x8x1xf32>
      %178 = vector.shape_cast %177 : vector<1x8x1xf32> to vector<8x1xf32>
      %cst_89 = arith.constant dense<0xFF800000> : vector<8xf32>
      %179 = vector.multi_reduction <maximumf>, %176, %cst_89 [1] : vector<8x8xf32> to vector<8xf32>
      %180 = vector.shape_cast %179 : vector<8xf32> to vector<8x1xf32>
      %181 = arith.maximumf %178, %180 : vector<8x1xf32>
      %182 = arith.subf %178, %181 : vector<8x1xf32>
      %183 = math.exp %182 : vector<8x1xf32>
      %184 = vector.broadcast %181 : vector<8x1xf32> to vector<8x8xf32>
      %185 = arith.subf %176, %184 : vector<8x8xf32>
      %186 = math.exp %185 : vector<8x8xf32>
      %cst_90 = arith.constant 0.000000e+00 : f32
      %187 = vector.broadcast %cst_90 : f32 to vector<8x8xf32>
      %188 = arith.select %47, %186, %187 : vector<8x8xi1>, vector<8x8xf32>
      %c3_91 = arith.constant 3 : index
      %c0_92 = arith.constant 0 : index
      %c0_93 = arith.constant 0 : index
      %189 = vector.load %arg11[%c3_91, %c0_92, %c0_93] : memref<4x8x1xf32, #tpu.memory_space<vmem>>, vector<1x8x1xf32>
      %190 = vector.shape_cast %189 : vector<1x8x1xf32> to vector<8x1xf32>
      %191 = arith.mulf %183, %190 : vector<8x1xf32>
      %cst_94 = arith.constant dense<0.000000e+00> : vector<8xf32>
      %192 = vector.multi_reduction <add>, %188, %cst_94 [1] : vector<8x8xf32> to vector<8xf32>
      %193 = vector.shape_cast %192 : vector<8xf32> to vector<8x1xf32>
      %194 = arith.addf %191, %193 : vector<8x1xf32>
      %c3_95 = arith.constant 3 : index
      %c0_96 = arith.constant 0 : index
      %c0_97 = arith.constant 0 : index
      %195 = vector.load %arg11[%c3_95, %c0_96, %c0_97] : memref<4x8x1xf32, #tpu.memory_space<vmem>>, vector<1x8x1xf32>
      %196 = vector.shape_cast %195 : vector<1x8x1xf32> to vector<8x1xf32>
      %197 = vector.shape_cast %194 : vector<8x1xf32> to vector<1x8x1xf32>
      tpu.vector_store %arg11[%c3_95, %c0_96, %c0_97], %197 {strides = array<i32>} : memref<4x8x1xf32, #tpu.memory_space<vmem>>, vector<1x8x1xf32>,
      %c3_98 = arith.constant 3 : index
      %c0_99 = arith.constant 0 : index
      %c0_100 = arith.constant 0 : index
      %198 = vector.load %arg12[%c3_98, %c0_99, %c0_100] : memref<4x8x8xf32, #tpu.memory_space<vmem>>, vector<1x8x8xf32>
      %199 = vector.shape_cast %198 : vector<1x8x8xf32> to vector<8x8xf32>
      %200 = vector.broadcast %183 : vector<8x1xf32> to vector<8x8xf32>
      %201 = arith.mulf %200, %199 : vector<8x8xf32>
      %202 = arith.truncf %188 : vector<8x8xf32> to vector<8x8xbf16>
      %203 = vector.extract_strided_slice %16 {offsets = [0, 24], sizes = [8, 8], strides = [1, 1]} : vector<8x32xbf16> to vector<8x8xbf16>
      %cst_101 = arith.constant dense<0.000000e+00> : vector<8x8xf32>
      %204 = tpu.matmul %202, %203, %cst_101 {dimension_numbers = #tpu.dot_dimension_numbers<[1], [0], [0], [1], [0, 0, 1, 1], [], []>} : vector<8x8xbf16>, vector<8x8xbf16>, vector<8x8xf32> -> vector<8x8xf32>
      %205 = arith.addf %201, %204 : vector<8x8xf32>
      %c3_102 = arith.constant 3 : index
      %c0_103 = arith.constant 0 : index
      %c0_104 = arith.constant 0 : index
      %206 = vector.load %arg12[%c3_102, %c0_103, %c0_104] : memref<4x8x8xf32, #tpu.memory_space<vmem>>, vector<1x8x8xf32>
      %207 = vector.shape_cast %206 : vector<1x8x8xf32> to vector<8x8xf32>
      %208 = vector.shape_cast %205 : vector<8x8xf32> to vector<1x8x8xf32>
      tpu.vector_store %arg12[%c3_102, %c0_103, %c0_104], %208 {strides = array<i32>} : memref<4x8x8xf32, #tpu.memory_space<vmem>>, vector<1x8x8xf32>,
      %c3_105 = arith.constant 3 : index
      %c0_106 = arith.constant 0 : index
      %c0_107 = arith.constant 0 : index
      %209 = vector.load %arg10[%c3_105, %c0_106, %c0_107] : memref<4x8x1xf32, #tpu.memory_space<vmem>>, vector<1x8x1xf32>
      %210 = vector.shape_cast %209 : vector<1x8x1xf32> to vector<8x1xf32>
      %211 = vector.shape_cast %181 : vector<8x1xf32> to vector<1x8x1xf32>
      tpu.vector_store %arg10[%c3_105, %c0_106, %c0_107], %211 {strides = array<i32>} : memref<4x8x1xf32, #tpu.memory_space<vmem>>, vector<1x8x1xf32>,
    } else {
    }
    %c0_i32_2 = arith.constant 0 : i32
    %8 = arith.cmpi eq, %arg3, %c0_i32_2 : i32
    %9 = arith.extui %8 : i1 to i32
    %c0_i32_3 = arith.constant 0 : i32
    %10 = arith.cmpi ne, %9, %c0_i32_3 : i32
    scf.if %10 {
      %c0 = arith.constant 0 : index
      %c0_4 = arith.constant 0 : index
      %c0_5 = arith.constant 0 : index
      %11 = vector.load %arg11[%c0, %c0_4, %c0_5] : memref<4x8x1xf32, #tpu.memory_space<vmem>>, vector<1x8x1xf32>
      %12 = vector.shape_cast %11 : vector<1x8x1xf32> to vector<8x1xf32>
      %cst = arith.constant 0.000000e+00 : f32
      %13 = vector.broadcast %cst : f32 to vector<8x1xf32>
      %14 = arith.cmpf oeq, %12, %13 : vector<8x1xf32>
      %cst_6 = arith.constant 1.000000e+00 : f32
      %15 = vector.broadcast %cst_6 : f32 to vector<8x1xf32>
      %16 = arith.select %14, %15, %12 : vector<8x1xi1>, vector<8x1xf32>
      %17 = tpu.reciprocal %16 {approx = true} : vector<8x1xf32> -> vector<8x1xf32>
      %c0_7 = arith.constant 0 : index
      %c0_8 = arith.constant 0 : index
      %c0_9 = arith.constant 0 : index
      %18 = vector.load %arg12[%c0_7, %c0_8, %c0_9] : memref<4x8x8xf32, #tpu.memory_space<vmem>>, vector<1x8x8xf32>
      %19 = vector.shape_cast %18 : vector<1x8x8xf32> to vector<8x8xf32>
      %20 = vector.broadcast %17 : vector<8x1xf32> to vector<8x8xf32>
      %21 = arith.mulf %19, %20 : vector<8x8xf32>
      %c1 = arith.constant 1 : index
      %c0_10 = arith.constant 0 : index
      %c0_11 = arith.constant 0 : index
      %22 = vector.load %arg11[%c1, %c0_10, %c0_11] : memref<4x8x1xf32, #tpu.memory_space<vmem>>, vector<1x8x1xf32>
      %23 = vector.shape_cast %22 : vector<1x8x1xf32> to vector<8x1xf32>
      %cst_12 = arith.constant 0.000000e+00 : f32
      %24 = vector.broadcast %cst_12 : f32 to vector<8x1xf32>
      %25 = arith.cmpf oeq, %23, %24 : vector<8x1xf32>
      %cst_13 = arith.constant 1.000000e+00 : f32
      %26 = vector.broadcast %cst_13 : f32 to vector<8x1xf32>
      %27 = arith.select %25, %26, %23 : vector<8x1xi1>, vector<8x1xf32>
      %28 = tpu.reciprocal %27 {approx = true} : vector<8x1xf32> -> vector<8x1xf32>
      %c1_14 = arith.constant 1 : index
      %c0_15 = arith.constant 0 : index
      %c0_16 = arith.constant 0 : index
      %29 = vector.load %arg12[%c1_14, %c0_15, %c0_16] : memref<4x8x8xf32, #tpu.memory_space<vmem>>, vector<1x8x8xf32>
      %30 = vector.shape_cast %29 : vector<1x8x8xf32> to vector<8x8xf32>
      %31 = vector.broadcast %28 : vector<8x1xf32> to vector<8x8xf32>
      %32 = arith.mulf %30, %31 : vector<8x8xf32>
      %c2 = arith.constant 2 : index
      %c0_17 = arith.constant 0 : index
      %c0_18 = arith.constant 0 : index
      %33 = vector.load %arg11[%c2, %c0_17, %c0_18] : memref<4x8x1xf32, #tpu.memory_space<vmem>>, vector<1x8x1xf32>
      %34 = vector.shape_cast %33 : vector<1x8x1xf32> to vector<8x1xf32>
      %cst_19 = arith.constant 0.000000e+00 : f32
      %35 = vector.broadcast %cst_19 : f32 to vector<8x1xf32>
      %36 = arith.cmpf oeq, %34, %35 : vector<8x1xf32>
      %cst_20 = arith.constant 1.000000e+00 : f32
      %37 = vector.broadcast %cst_20 : f32 to vector<8x1xf32>
      %38 = arith.select %36, %37, %34 : vector<8x1xi1>, vector<8x1xf32>
      %39 = tpu.reciprocal %38 {approx = true} : vector<8x1xf32> -> vector<8x1xf32>
      %c2_21 = arith.constant 2 : index
      %c0_22 = arith.constant 0 : index
      %c0_23 = arith.constant 0 : index
      %40 = vector.load %arg12[%c2_21, %c0_22, %c0_23] : memref<4x8x8xf32, #tpu.memory_space<vmem>>, vector<1x8x8xf32>
      %41 = vector.shape_cast %40 : vector<1x8x8xf32> to vector<8x8xf32>
      %42 = vector.broadcast %39 : vector<8x1xf32> to vector<8x8xf32>
      %43 = arith.mulf %41, %42 : vector<8x8xf32>
      %c3 = arith.constant 3 : index
      %c0_24 = arith.constant 0 : index
      %c0_25 = arith.constant 0 : index
      %44 = vector.load %arg11[%c3, %c0_24, %c0_25] : memref<4x8x1xf32, #tpu.memory_space<vmem>>, vector<1x8x1xf32>
      %45 = vector.shape_cast %44 : vector<1x8x1xf32> to vector<8x1xf32>
      %cst_26 = arith.constant 0.000000e+00 : f32
      %46 = vector.broadcast %cst_26 : f32 to vector<8x1xf32>
      %47 = arith.cmpf oeq, %45, %46 : vector<8x1xf32>
      %cst_27 = arith.constant 1.000000e+00 : f32
      %48 = vector.broadcast %cst_27 : f32 to vector<8x1xf32>
      %49 = arith.select %47, %48, %45 : vector<8x1xi1>, vector<8x1xf32>
      %50 = tpu.reciprocal %49 {approx = true} : vector<8x1xf32> -> vector<8x1xf32>
      %c3_28 = arith.constant 3 : index
      %c0_29 = arith.constant 0 : index
      %c0_30 = arith.constant 0 : index
      %51 = vector.load %arg12[%c3_28, %c0_29, %c0_30] : memref<4x8x8xf32, #tpu.memory_space<vmem>>, vector<1x8x8xf32>
      %52 = vector.shape_cast %51 : vector<1x8x8xf32> to vector<8x8xf32>
      %53 = vector.broadcast %50 : vector<8x1xf32> to vector<8x8xf32>
      %54 = arith.mulf %52, %53 : vector<8x8xf32>
      %55 = tpu.concatenate %21, %32, %43, %54 in 1 : vector<8x8xf32>, vector<8x8xf32>, vector<8x8xf32>, vector<8x8xf32> -> vector<8x32xf32>
      %56 = arith.truncf %55 : vector<8x32xf32> to vector<8x32xbf16>
      %c0_31 = arith.constant 0 : index
      %c0_32 = arith.constant 0 : index
      %c0_33 = arith.constant 0 : index
      %57 = vector.load %arg9[%c0_31, %c0_32, %c0_33] : memref<1x8x32xbf16, #tpu.memory_space<vmem>>, vector<1x8x32xbf16>
      %58 = vector.shape_cast %57 : vector<1x8x32xbf16> to vector<8x32xbf16>
      %59 = vector.shape_cast %56 : vector<8x32xbf16> to vector<1x8x32xbf16>
      tpu.vector_store %arg9[%c0_31, %c0_32, %c0_33], %59 {strides = array<i32>} : memref<1x8x32xbf16, #tpu.memory_space<vmem>>, vector<1x8x32xbf16>,
    } else {
    }
    return
  }
  func.func @transform_0(%arg0: i32, %arg1: i32, %arg2: i32, %arg3: i32, %arg4: memref<1xi32, #tpu.memory_space<smem>>, %arg5: memref<1xi32, #tpu.memory_space<smem>>) -> (i32, i32, i32) {
    %c0_i32 = arith.constant 0 : i32
    return %arg0, %arg2, %arg1 : i32, i32, i32
  }
  func.func @transform_1(%arg0: i32, %arg1: i32, %arg2: i32, %arg3: i32, %arg4: memref<1xi32, #tpu.memory_space<smem>>, %arg5: memref<1xi32, #tpu.memory_space<smem>>) -> (i32, i32, i32) {
    %c1_i32 = arith.constant 1 : i32
    %0 = arith.muli %arg2, %c1_i32 : i32
    %1 = arith.addi %0, %arg3 : i32
    %2 = arith.index_cast %1 : i32 to index
    %3 = memref.load %arg4[%2] : memref<1xi32, #tpu.memory_space<smem>>
    %c0_i32 = arith.constant 0 : i32
    return %arg0, %3, %arg1 : i32, i32, i32
  }
  func.func @transform_2(%arg0: i32, %arg1: i32, %arg2: i32, %arg3: i32, %arg4: memref<1xi32, #tpu.memory_space<smem>>, %arg5: memref<1xi32, #tpu.memory_space<smem>>) -> (i32, i32, i32) {
    %c1_i32 = arith.constant 1 : i32
    %0 = arith.muli %arg2, %c1_i32 : i32
    %1 = arith.addi %0, %arg3 : i32
    %2 = arith.index_cast %1 : i32 to index
    %3 = memref.load %arg4[%2] : memref<1xi32, #tpu.memory_space<smem>>
    %c0_i32 = arith.constant 0 : i32
    return %arg0, %3, %arg1 : i32, i32, i32
  }
  func.func @transform_3(%arg0: i32, %arg1: i32, %arg2: i32, %arg3: i32, %arg4: memref<1xi32, #tpu.memory_space<smem>>, %arg5: memref<1xi32, #tpu.memory_space<smem>>) -> (i32, i32, i32) {
    %c0_i32 = arith.constant 0 : i32
    return %arg0, %arg2, %arg1 : i32, i32, i32
  }
}

module attributes {stable_mosaic.version = 11 : i64} {
  func.func @_qkv_proj_kernel(%arg0: i32, %arg1: i32, %arg2: i32, %arg3: memref<1x8x32xbf16, #tpu.memory_space<vmem>>, %arg4: memref<32x32xbf16, #tpu.memory_space<vmem>>, %arg5: memref<32x32xbf16, #tpu.memory_space<vmem>>, %arg6: memref<32x32xbf16, #tpu.memory_space<vmem>>, %arg7: memref<1x32xf32, #tpu.memory_space<vmem>>, %arg8: memref<1x32xf32, #tpu.memory_space<vmem>>, %arg9: memref<1x32xf32, #tpu.memory_space<vmem>>, %arg10: memref<1x8x32xbf16, #tpu.memory_space<vmem>>, %arg11: memref<1x8x32xbf16, #tpu.memory_space<vmem>>, %arg12: memref<1x8x32xbf16, #tpu.memory_space<vmem>>) attributes {dimension_semantics = [#tpu.dimension_semantics<parallel>, #tpu.dimension_semantics<parallel>, #tpu.dimension_semantics<parallel>], iteration_bounds = array<i64: 2, 1, 1>, scalar_prefetch = 0 : i64, scratch_operands = 0 : i64, tpu.core_type = #tpu.core_type<tc>, window_params = [{transform_indices = @transform_0, window_bounds = array<i64: 1, 8, 32>}, {transform_indices = @transform_1, window_bounds = array<i64: 32, 32>}, {transform_indices = @transform_2, window_bounds = array<i64: 32, 32>}, {transform_indices = @transform_3, window_bounds = array<i64: 32, 32>}, {transform_indices = @transform_4, window_bounds = array<i64: 1, 32>}, {transform_indices = @transform_5, window_bounds = array<i64: 1, 32>}, {transform_indices = @transform_6, window_bounds = array<i64: 1, 32>}, {transform_indices = @transform_7, window_bounds = array<i64: 1, 8, 32>}, {transform_indices = @transform_8, window_bounds = array<i64: 1, 8, 32>}, {transform_indices = @transform_9, window_bounds = array<i64: 1, 8, 32>}]} {
    %c0 = arith.constant 0 : index
    %c0_0 = arith.constant 0 : index
    %c0_1 = arith.constant 0 : index
    %0 = vector.load %arg3[%c0, %c0_0, %c0_1] : memref<1x8x32xbf16, #tpu.memory_space<vmem>>, vector<1x8x32xbf16>
    %1 = vector.shape_cast %0 : vector<1x8x32xbf16> to vector<8x32xbf16>
    %c0_2 = arith.constant 0 : index
    %c0_3 = arith.constant 0 : index
    %2 = vector.load %arg4[%c0_2, %c0_3] : memref<32x32xbf16, #tpu.memory_space<vmem>>, vector<32x32xbf16>
    %cst = arith.constant dense<0.000000e+00> : vector<8x32xf32>
    %3 = tpu.matmul %1, %2, %cst {dimension_numbers = #tpu.dot_dimension_numbers<[1], [0], [0], [1], [0, 0, 1, 1], [], []>} : vector<8x32xbf16>, vector<32x32xbf16>, vector<8x32xf32> -> vector<8x32xf32>
    %c0_4 = arith.constant 0 : index
    %c0_5 = arith.constant 0 : index
    %4 = vector.load %arg7[%c0_4, %c0_5] : memref<1x32xf32, #tpu.memory_space<vmem>>, vector<1x32xf32>
    %5 = vector.broadcast %4 : vector<1x32xf32> to vector<8x32xf32>
    %6 = arith.addf %3, %5 : vector<8x32xf32>
    %c0_6 = arith.constant 0 : index
    %c0_7 = arith.constant 0 : index
    %7 = vector.load %arg5[%c0_6, %c0_7] : memref<32x32xbf16, #tpu.memory_space<vmem>>, vector<32x32xbf16>
    %cst_8 = arith.constant dense<0.000000e+00> : vector<8x32xf32>
    %8 = tpu.matmul %1, %7, %cst_8 {dimension_numbers = #tpu.dot_dimension_numbers<[1], [0], [0], [1], [0, 0, 1, 1], [], []>} : vector<8x32xbf16>, vector<32x32xbf16>, vector<8x32xf32> -> vector<8x32xf32>
    %c0_9 = arith.constant 0 : index
    %c0_10 = arith.constant 0 : index
    %9 = vector.load %arg8[%c0_9, %c0_10] : memref<1x32xf32, #tpu.memory_space<vmem>>, vector<1x32xf32>
    %10 = vector.broadcast %9 : vector<1x32xf32> to vector<8x32xf32>
    %11 = arith.addf %8, %10 : vector<8x32xf32>
    %c0_11 = arith.constant 0 : index
    %c0_12 = arith.constant 0 : index
    %12 = vector.load %arg6[%c0_11, %c0_12] : memref<32x32xbf16, #tpu.memory_space<vmem>>, vector<32x32xbf16>
    %cst_13 = arith.constant dense<0.000000e+00> : vector<8x32xf32>
    %13 = tpu.matmul %1, %12, %cst_13 {dimension_numbers = #tpu.dot_dimension_numbers<[1], [0], [0], [1], [0, 0, 1, 1], [], []>} : vector<8x32xbf16>, vector<32x32xbf16>, vector<8x32xf32> -> vector<8x32xf32>
    %c0_14 = arith.constant 0 : index
    %c0_15 = arith.constant 0 : index
    %14 = vector.load %arg9[%c0_14, %c0_15] : memref<1x32xf32, #tpu.memory_space<vmem>>, vector<1x32xf32>
    %15 = vector.broadcast %14 : vector<1x32xf32> to vector<8x32xf32>
    %16 = arith.addf %13, %15 : vector<8x32xf32>
    %cst_16 = arith.constant 0.353553385 : f32
    %17 = vector.broadcast %cst_16 : f32 to vector<8x32xf32>
    %18 = arith.mulf %6, %17 : vector<8x32xf32>
    %19 = arith.truncf %18 : vector<8x32xf32> to vector<8x32xbf16>
    %c0_17 = arith.constant 0 : index
    %c0_18 = arith.constant 0 : index
    %c0_19 = arith.constant 0 : index
    %20 = vector.load %arg10[%c0_17, %c0_18, %c0_19] : memref<1x8x32xbf16, #tpu.memory_space<vmem>>, vector<1x8x32xbf16>
    %21 = vector.shape_cast %20 : vector<1x8x32xbf16> to vector<8x32xbf16>
    %22 = vector.shape_cast %19 : vector<8x32xbf16> to vector<1x8x32xbf16>
    tpu.vector_store %arg10[%c0_17, %c0_18, %c0_19], %22 {strides = array<i32>} : memref<1x8x32xbf16, #tpu.memory_space<vmem>>, vector<1x8x32xbf16>,
    %23 = arith.truncf %11 : vector<8x32xf32> to vector<8x32xbf16>
    %c0_20 = arith.constant 0 : index
    %c0_21 = arith.constant 0 : index
    %c0_22 = arith.constant 0 : index
    %24 = vector.load %arg11[%c0_20, %c0_21, %c0_22] : memref<1x8x32xbf16, #tpu.memory_space<vmem>>, vector<1x8x32xbf16>
    %25 = vector.shape_cast %24 : vector<1x8x32xbf16> to vector<8x32xbf16>
    %26 = vector.shape_cast %23 : vector<8x32xbf16> to vector<1x8x32xbf16>
    tpu.vector_store %arg11[%c0_20, %c0_21, %c0_22], %26 {strides = array<i32>} : memref<1x8x32xbf16, #tpu.memory_space<vmem>>, vector<1x8x32xbf16>,
    %27 = arith.truncf %16 : vector<8x32xf32> to vector<8x32xbf16>
    %c0_23 = arith.constant 0 : index
    %c0_24 = arith.constant 0 : index
    %c0_25 = arith.constant 0 : index
    %28 = vector.load %arg12[%c0_23, %c0_24, %c0_25] : memref<1x8x32xbf16, #tpu.memory_space<vmem>>, vector<1x8x32xbf16>
    %29 = vector.shape_cast %28 : vector<1x8x32xbf16> to vector<8x32xbf16>
    %30 = vector.shape_cast %27 : vector<8x32xbf16> to vector<1x8x32xbf16>
    tpu.vector_store %arg12[%c0_23, %c0_24, %c0_25], %30 {strides = array<i32>} : memref<1x8x32xbf16, #tpu.memory_space<vmem>>, vector<1x8x32xbf16>,
    return
  }
  func.func @transform_0(%arg0: i32, %arg1: i32, %arg2: i32) -> (i32, i32, i32) {
    %c0_i32 = arith.constant 0 : i32
    %c0_i32_0 = arith.constant 0 : i32
    return %arg0, %arg1, %c0_i32 : i32, i32, i32
  }
  func.func @transform_1(%arg0: i32, %arg1: i32, %arg2: i32) -> (i32, i32) {
    %c0_i32 = arith.constant 0 : i32
    %c0_i32_0 = arith.constant 0 : i32
    return %c0_i32, %arg2 : i32, i32
  }
  func.func @transform_2(%arg0: i32, %arg1: i32, %arg2: i32) -> (i32, i32) {
    %c0_i32 = arith.constant 0 : i32
    %c0_i32_0 = arith.constant 0 : i32
    return %c0_i32, %arg2 : i32, i32
  }
  func.func @transform_3(%arg0: i32, %arg1: i32, %arg2: i32) -> (i32, i32) {
    %c0_i32 = arith.constant 0 : i32
    %c0_i32_0 = arith.constant 0 : i32
    return %c0_i32, %arg2 : i32, i32
  }
  func.func @transform_4(%arg0: i32, %arg1: i32, %arg2: i32) -> (i32, i32) {
    %c0_i32 = arith.constant 0 : i32
    %c0_i32_0 = arith.constant 0 : i32
    return %c0_i32, %arg2 : i32, i32
  }
  func.func @transform_5(%arg0: i32, %arg1: i32, %arg2: i32) -> (i32, i32) {
    %c0_i32 = arith.constant 0 : i32
    %c0_i32_0 = arith.constant 0 : i32
    return %c0_i32, %arg2 : i32, i32
  }
  func.func @transform_6(%arg0: i32, %arg1: i32, %arg2: i32) -> (i32, i32) {
    %c0_i32 = arith.constant 0 : i32
    %c0_i32_0 = arith.constant 0 : i32
    return %c0_i32, %arg2 : i32, i32
  }
  func.func @transform_7(%arg0: i32, %arg1: i32, %arg2: i32) -> (i32, i32, i32) {
    %c0_i32 = arith.constant 0 : i32
    return %arg0, %arg1, %arg2 : i32, i32, i32
  }
  func.func @transform_8(%arg0: i32, %arg1: i32, %arg2: i32) -> (i32, i32, i32) {
    %c0_i32 = arith.constant 0 : i32
    return %arg0, %arg1, %arg2 : i32, i32, i32
  }
  func.func @transform_9(%arg0: i32, %arg1: i32, %arg2: i32) -> (i32, i32, i32) {
    %c0_i32 = arith.constant 0 : i32
    return %arg0, %arg1, %arg2 : i32, i32, i32
  }
}

module attributes {stable_mosaic.version = 11 : i64} {
  func.func @_out_proj_kernel(%arg0: i32, %arg1: i32, %arg2: i32, %arg3: memref<1x8x32xbf16, #tpu.memory_space<vmem>>, %arg4: memref<32x32xbf16, #tpu.memory_space<vmem>>, %arg5: memref<1x32xf32, #tpu.memory_space<vmem>>, %arg6: memref<1x8x32xf32, #tpu.memory_space<vmem>>) attributes {dimension_semantics = [#tpu.dimension_semantics<parallel>, #tpu.dimension_semantics<parallel>, #tpu.dimension_semantics<parallel>], iteration_bounds = array<i64: 2, 1, 1>, scalar_prefetch = 0 : i64, scratch_operands = 0 : i64, tpu.core_type = #tpu.core_type<tc>, window_params = [{transform_indices = @transform_0, window_bounds = array<i64: 1, 8, 32>}, {transform_indices = @transform_1, window_bounds = array<i64: 32, 32>}, {transform_indices = @transform_2, window_bounds = array<i64: 1, 32>}, {transform_indices = @transform_3, window_bounds = array<i64: 1, 8, 32>}]} {
    %c0 = arith.constant 0 : index
    %c0_0 = arith.constant 0 : index
    %c0_1 = arith.constant 0 : index
    %0 = vector.load %arg3[%c0, %c0_0, %c0_1] : memref<1x8x32xbf16, #tpu.memory_space<vmem>>, vector<1x8x32xbf16>
    %1 = vector.shape_cast %0 : vector<1x8x32xbf16> to vector<8x32xbf16>
    %c0_2 = arith.constant 0 : index
    %c0_3 = arith.constant 0 : index
    %2 = vector.load %arg4[%c0_2, %c0_3] : memref<32x32xbf16, #tpu.memory_space<vmem>>, vector<32x32xbf16>
    %cst = arith.constant dense<0.000000e+00> : vector<8x32xf32>
    %3 = tpu.matmul %1, %2, %cst {dimension_numbers = #tpu.dot_dimension_numbers<[1], [0], [0], [1], [0, 0, 1, 1], [], []>} : vector<8x32xbf16>, vector<32x32xbf16>, vector<8x32xf32> -> vector<8x32xf32>
    %c0_4 = arith.constant 0 : index
    %c0_5 = arith.constant 0 : index
    %4 = vector.load %arg5[%c0_4, %c0_5] : memref<1x32xf32, #tpu.memory_space<vmem>>, vector<1x32xf32>
    %5 = vector.broadcast %4 : vector<1x32xf32> to vector<8x32xf32>
    %6 = arith.addf %3, %5 : vector<8x32xf32>
    %c0_6 = arith.constant 0 : index
    %c0_7 = arith.constant 0 : index
    %c0_8 = arith.constant 0 : index
    %7 = vector.load %arg6[%c0_6, %c0_7, %c0_8] : memref<1x8x32xf32, #tpu.memory_space<vmem>>, vector<1x8x32xf32>
    %8 = vector.shape_cast %7 : vector<1x8x32xf32> to vector<8x32xf32>
    %9 = vector.shape_cast %6 : vector<8x32xf32> to vector<1x8x32xf32>
    tpu.vector_store %arg6[%c0_6, %c0_7, %c0_8], %9 {strides = array<i32>} : memref<1x8x32xf32, #tpu.memory_space<vmem>>, vector<1x8x32xf32>,
    return
  }
  func.func @transform_0(%arg0: i32, %arg1: i32, %arg2: i32) -> (i32, i32, i32) {
    %c0_i32 = arith.constant 0 : i32
    %c0_i32_0 = arith.constant 0 : i32
    return %arg0, %arg1, %c0_i32 : i32, i32, i32
  }
  func.func @transform_1(%arg0: i32, %arg1: i32, %arg2: i32) -> (i32, i32) {
    %c0_i32 = arith.constant 0 : i32
    %c0_i32_0 = arith.constant 0 : i32
    return %c0_i32, %arg2 : i32, i32
  }
  func.func @transform_2(%arg0: i32, %arg1: i32, %arg2: i32) -> (i32, i32) {
    %c0_i32 = arith.constant 0 : i32
    %c0_i32_0 = arith.constant 0 : i32
    return %c0_i32, %arg2 : i32, i32
  }
  func.func @transform_3(%arg0: i32, %arg1: i32, %arg2: i32) -> (i32, i32, i32) {
    %c0_i32 = arith.constant 0 : i32
    return %arg0, %arg1, %arg2 : i32, i32, i32
  }
}

</mosaic_0001>

<llo_original>
// kernel: sparse_attention.3
$region0: #{sparse_attention.3}
  #allocation0 [shape = 'u32[]', space=smem, size = 0x4, offset = 0x4, fixed_abs, tag = 'smem constant byte address 0x4 - core index']
  #allocation1 [shape = 'u32[144,128]{1,0:T(1,128)}', space=vmem, size = 0x12000, scoped, tag = 'internal scratch']
  %s0 = inlined_call_operand.vmem [shape: bf16[2,8,32], index: 0, kind: input, shape index: {}]
  %s1 = inlined_call_operand.vmem [shape: bf16[32,32], index: 1, kind: input, shape index: {}]
  %s2 = inlined_call_operand.vmem [shape: bf16[32,32], index: 2, kind: input, shape index: {}]
  %s3 = inlined_call_operand.vmem [shape: bf16[32,32], index: 3, kind: input, shape index: {}]
  %s4 = inlined_call_operand.vmem [shape: f32[1,32], index: 4, kind: input, shape index: {}]
  %s5 = inlined_call_operand.vmem [shape: f32[1,32], index: 5, kind: input, shape index: {}]
  %s6 = inlined_call_operand.vmem [shape: f32[1,32], index: 6, kind: input, shape index: {}]
  %s7 = inlined_call_operand.vmem [shape: bf16[2,8,32], index: 7, kind: output, shape index: {0}]
  %s8 = inlined_call_operand.vmem [shape: bf16[2,8,32], index: 8, kind: output, shape index: {1}]
  %s9 = inlined_call_operand.vmem [shape: bf16[2,8,32], index: 9, kind: output, shape index: {2}]
  %10 = xla_tuple %s7, %s8, %s9
  %s11 = sld [smem:[#allocation0]]
  $region77: #{sparse_attention.3} parent=0
    _
  %s13 = ssub.s32 1, %s11
  %s14 = scalar_select 0, %s13, %s11
  loop: start=0, step=1, limit=4
  $region2: #{sparse_attention.3} parent=0 // loop_pre_header
    _
  $region3: #{sparse_attention.3} parent=0 // loop_header
    %s16 = sphi 0, %s20
    %p17 = scmp.ge.s32.totalorder %s16, 4
    %s23 = sphi 0, %s42
    %s24 = sphi 0, %s38
    %s25 = sphi 0, %s34
    %s26 = sphi 0, %s23
    %s27 = sphi 0, %s24
    %s28 = sphi 0, %s25
    %s29 = sphi 0, %s26
    %s30 = sphi 0, %s27
    %s31 = sphi 0, %s28
    %s47 = sphi 0, %s49
    %s50 = sphi 0, %s47
    %s51 = sphi 0, %s50
    %s67 = sphi 0, %s51
    %s73 = sphi 0, %s75
    %s76 = sphi 0, %s73
    %s77 = sphi 0, %s76
    %s93 = sphi 0, %s77
    %s99 = sphi 0, %s101
    %s102 = sphi 0, %s99
    %s103 = sphi 0, %s102
    %s119 = sphi 0, %s103
    %s125 = sphi 0, %s127
    %s128 = sphi 0, %s125
    %s129 = sphi 0, %s128
    %s145 = sphi 0, %s129
    %s151 = sphi 0, %s153
    %s154 = sphi 0, %s151
    %s155 = sphi 0, %s154
    %s171 = sphi 0, %s155
    %s177 = sphi 0, %s179
    %s180 = sphi 0, %s177
    %s181 = sphi 0, %s180
    %s197 = sphi 0, %s181
    %s203 = sphi 0, %s205
    %s206 = sphi 0, %s203
    %s207 = sphi 0, %s206
    %s223 = sphi 0, %s207
    %s233 = sphi 0, %s235
    %s236 = sphi 0, %s233
    %s237 = sphi 0, %s236
    %s253 = sphi 0, %s237
    %s263 = sphi 0, %s265
    %s266 = sphi 0, %s263
    %s267 = sphi 0, %s266
    %s283 = sphi 0, %s267
    %s293 = sphi 0, %s295
    %s296 = sphi 0, %s293
    %s297 = sphi 0, %s296
    %s313 = sphi 0, %s297
  $region4: #{sparse_attention.3} parent=0 // loop_header_branch
    %19 = sbr.rel (%p17) target = $region8
  $region5: #{sparse_attention.3} parent=0 // loop_body
    %s21 = ssub.s32 %s16, 1
    %s22 = ssub.s32 %s16, 2
    %s32 = sadd.s32 1, %s25
    %p33 = scmp.ge.s32.totalorder %s32, 1
    %s34 = scalar_select %p33, 0, %s32
    %s35 = sadd.s32 1, %s24
    %s36 = scalar_select %p33, %s35, %s24
    %p37 = scmp.ge.s32.totalorder %s36, 1
    %s38 = scalar_select %p37, 0, %s36
    %s39 = sadd.s32 1, %s23
    %s40 = scalar_select %p37, %s39, %s23
    %p41 = scmp.ge.s32.totalorder %s40, 2
    %s42 = scalar_select %p41, 0, %s40
    %s43 = ssub.s32 %s23, %s42
    %s44 = ssub.s32 %s24, %s38
    %s45 = sor.u32 %s43, %s44
    %p46 = scmp.eq.s32.totalorder %s45, 0
    %s48 = sadd.s32 %s47, 1
    %s49 = scalar_select %p46, %s47, %s48
    %p52 = pneg %p46
    %p53 = scmp.eq.s32.totalorder %s16, 1
    %p54 = por %p52, %p53
    %p55 = scmp.ne.s32.totalorder %s47, %s50
    %p56 = scmp.eq.s32.totalorder %s16, 0
    %p57 = por %p55, %p56
    %p58 = scmp.ne.s32.totalorder %s47, %s50
    %p59 = scmp.eq.s32.totalorder %s21, 1
    %p60 = por %p58, %p59
    %p61 = scmp.ne.s32.totalorder %s50, %s51
    %p62 = scmp.eq.s32.totalorder %s21, 0
    %p63 = por %p61, %p62
    %p64 = scmp.ne.s32.totalorder %s50, %s51
    %p65 = scmp.eq.s32.totalorder %s22, 1
    %p66 = por %p64, %p65
    %p68 = scmp.ne.s32.totalorder %s51, %s67
    %p69 = scmp.eq.s32.totalorder %s22, 0
    %p70 = por %p68, %p69
    %s71 = ssub.s32 %s25, %s34
    %p72 = scmp.eq.s32.totalorder %s71, 0
    %s74 = sadd.s32 %s73, 1
    %s75 = scalar_select %p72, %s73, %s74
    %p78 = pneg %p72
    %p79 = scmp.eq.s32.totalorder %s16, 1
    %p80 = por %p78, %p79
    %p81 = scmp.ne.s32.totalorder %s73, %s76
    %p82 = scmp.eq.s32.totalorder %s16, 0
    %p83 = por %p81, %p82
    %p84 = scmp.ne.s32.totalorder %s73, %s76
    %p85 = scmp.eq.s32.totalorder %s21, 1
    %p86 = por %p84, %p85
    %p87 = scmp.ne.s32.totalorder %s76, %s77
    %p88 = scmp.eq.s32.totalorder %s21, 0
    %p89 = por %p87, %p88
    %p90 = scmp.ne.s32.totalorder %s76, %s77
    %p91 = scmp.eq.s32.totalorder %s22, 1
    %p92 = por %p90, %p91
    %p94 = scmp.ne.s32.totalorder %s77, %s93
    %p95 = scmp.eq.s32.totalorder %s22, 0
    %p96 = por %p94, %p95
    %s97 = ssub.s32 %s25, %s34
    %p98 = scmp.eq.s32.totalorder %s97, 0
    %s100 = sadd.s32 %s99, 1
    %s101 = scalar_select %p98, %s99, %s100
    %p104 = pneg %p98
    %p105 = scmp.eq.s32.totalorder %s16, 1
    %p106 = por %p104, %p105
    %p107 = scmp.ne.s32.totalorder %s99, %s102
    %p108 = scmp.eq.s32.totalorder %s16, 0
    %p109 = por %p107, %p108
    %p110 = scmp.ne.s32.totalorder %s99, %s102
    %p111 = scmp.eq.s32.totalorder %s21, 1
    %p112 = por %p110, %p111
    %p113 = scmp.ne.s32.totalorder %s102, %s103
    %p114 = scmp.eq.s32.totalorder %s21, 0
    %p115 = por %p113, %p114
    %p116 = scmp.ne.s32.totalorder %s102, %s103
    %p117 = scmp.eq.s32.totalorder %s22, 1
    %p118 = por %p116, %p117
    %p120 = scmp.ne.s32.totalorder %s103, %s119
    %p121 = scmp.eq.s32.totalorder %s22, 0
    %p122 = por %p120, %p121
    %s123 = ssub.s32 %s25, %s34
    %p124 = scmp.eq.s32.totalorder %s123, 0
    %s126 = sadd.s32 %s125, 1
    %s127 = scalar_select %p124, %s125, %s126
    %p130 = pneg %p124
    %p131 = scmp.eq.s32.totalorder %s16, 1
    %p132 = por %p130, %p131
    %p133 = scmp.ne.s32.totalorder %s125, %s128
    %p134 = scmp.eq.s32.totalorder %s16, 0
    %p135 = por %p133, %p134
    %p136 = scmp.ne.s32.totalorder %s125, %s128
    %p137 = scmp.eq.s32.totalorder %s21, 1
    %p138 = por %p136, %p137
    %p139 = scmp.ne.s32.totalorder %s128, %s129
    %p140 = scmp.eq.s32.totalorder %s21, 0
    %p141 = por %p139, %p140
    %p142 = scmp.ne.s32.totalorder %s128, %s129
    %p143 = scmp.eq.s32.totalorder %s22, 1
    %p144 = por %p142, %p143
    %p146 = scmp.ne.s32.totalorder %s129, %s145
    %p147 = scmp.eq.s32.totalorder %s22, 0
    %p148 = por %p146, %p147
    %s149 = ssub.s32 %s25, %s34
    %p150 = scmp.eq.s32.totalorder %s149, 0
    %s152 = sadd.s32 %s151, 1
    %s153 = scalar_select %p150, %s151, %s152
    %p156 = pneg %p150
    %p157 = scmp.eq.s32.totalorder %s16, 1
    %p158 = por %p156, %p157
    %p159 = scmp.ne.s32.totalorder %s151, %s154
    %p160 = scmp.eq.s32.totalorder %s16, 0
    %p161 = por %p159, %p160
    %p162 = scmp.ne.s32.totalorder %s151, %s154
    %p163 = scmp.eq.s32.totalorder %s21, 1
    %p164 = por %p162, %p163
    %p165 = scmp.ne.s32.totalorder %s154, %s155
    %p166 = scmp.eq.s32.totalorder %s21, 0
    %p167 = por %p165, %p166
    %p168 = scmp.ne.s32.totalorder %s154, %s155
    %p169 = scmp.eq.s32.totalorder %s22, 1
    %p170 = por %p168, %p169
    %p172 = scmp.ne.s32.totalorder %s155, %s171
    %p173 = scmp.eq.s32.totalorder %s22, 0
    %p174 = por %p172, %p173
    %s175 = ssub.s32 %s25, %s34
    %p176 = scmp.eq.s32.totalorder %s175, 0
    %s178 = sadd.s32 %s177, 1
    %s179 = scalar_select %p176, %s177, %s178
    %p182 = pneg %p176
    %p183 = scmp.eq.s32.totalorder %s16, 1
    %p184 = por %p182, %p183
    %p185 = scmp.ne.s32.totalorder %s177, %s180
    %p186 = scmp.eq.s32.totalorder %s16, 0
    %p187 = por %p185, %p186
    %p188 = scmp.ne.s32.totalorder %s177, %s180
    %p189 = scmp.eq.s32.totalorder %s21, 1
    %p190 = por %p188, %p189
    %p191 = scmp.ne.s32.totalorder %s180, %s181
    %p192 = scmp.eq.s32.totalorder %s21, 0
    %p193 = por %p191, %p192
    %p194 = scmp.ne.s32.totalorder %s180, %s181
    %p195 = scmp.eq.s32.totalorder %s22, 1
    %p196 = por %p194, %p195
    %p198 = scmp.ne.s32.totalorder %s181, %s197
    %p199 = scmp.eq.s32.totalorder %s22, 0
    %p200 = por %p198, %p199
    %s201 = ssub.s32 %s25, %s34
    %p202 = scmp.eq.s32.totalorder %s201, 0
    %s204 = sadd.s32 %s203, 1
    %s205 = scalar_select %p202, %s203, %s204
    %p208 = pneg %p202
    %p209 = scmp.eq.s32.totalorder %s16, 1
    %p210 = por %p208, %p209
    %p211 = scmp.ne.s32.totalorder %s203, %s206
    %p212 = scmp.eq.s32.totalorder %s16, 0
    %p213 = por %p211, %p212
    %p214 = scmp.ne.s32.totalorder %s203, %s206
    %p215 = scmp.eq.s32.totalorder %s21, 1
    %p216 = por %p214, %p215
    %p217 = scmp.ne.s32.totalorder %s206, %s207
    %p218 = scmp.eq.s32.totalorder %s21, 0
    %p219 = por %p217, %p218
    %p220 = scmp.ne.s32.totalorder %s206, %s207
    %p221 = scmp.eq.s32.totalorder %s22, 1
    %p222 = por %p220, %p221
    %p224 = scmp.ne.s32.totalorder %s207, %s223
    %p225 = scmp.eq.s32.totalorder %s22, 0
    %p226 = por %p224, %p225
    %s227 = ssub.s32 %s23, %s42
    %s228 = ssub.s32 %s24, %s38
    %s229 = sor.u32 %s227, %s228
    %s230 = ssub.s32 %s25, %s34
    %s231 = sor.u32 %s229, %s230
    %p232 = scmp.eq.s32.totalorder %s231, 0
    %s234 = sadd.s32 %s233, 1
    %s235 = scalar_select %p232, %s233, %s234
    %p238 = pneg %p232
    %p239 = scmp.eq.s32.totalorder %s16, 1
    %p240 = por %p238, %p239
    %p241 = scmp.ne.s32.totalorder %s233, %s236
    %p242 = scmp.eq.s32.totalorder %s16, 0
    %p243 = por %p241, %p242
    %p244 = scmp.ne.s32.totalorder %s233, %s236
    %p245 = scmp.eq.s32.totalorder %s21, 1
    %p246 = por %p244, %p245
    %p247 = scmp.ne.s32.totalorder %s236, %s237
    %p248 = scmp.eq.s32.totalorder %s21, 0
    %p249 = por %p247, %p248
    %p250 = scmp.ne.s32.totalorder %s236, %s237
    %p251 = scmp.eq.s32.totalorder %s22, 1
    %p252 = por %p250, %p251
    %p254 = scmp.ne.s32.totalorder %s237, %s253
    %p255 = scmp.eq.s32.totalorder %s22, 0
    %p256 = por %p254, %p255
    %s257 = ssub.s32 %s23, %s42
    %s258 = ssub.s32 %s24, %s38
    %s259 = sor.u32 %s257, %s258
    %s260 = ssub.s32 %s25, %s34
    %s261 = sor.u32 %s259, %s260
    %p262 = scmp.eq.s32.totalorder %s261, 0
    %s264 = sadd.s32 %s263, 1
    %s265 = scalar_select %p262, %s263, %s264
    %p268 = pneg %p262
    %p269 = scmp.eq.s32.totalorder %s16, 1
    %p270 = por %p268, %p269
    %p271 = scmp.ne.s32.totalorder %s263, %s266
    %p272 = scmp.eq.s32.totalorder %s16, 0
    %p273 = por %p271, %p272
    %p274 = scmp.ne.s32.totalorder %s263, %s266
    %p275 = scmp.eq.s32.totalorder %s21, 1
    %p276 = por %p274, %p275
    %p277 = scmp.ne.s32.totalorder %s266, %s267
    %p278 = scmp.eq.s32.totalorder %s21, 0
    %p279 = por %p277, %p278
    %p280 = scmp.ne.s32.totalorder %s266, %s267
    %p281 = scmp.eq.s32.totalorder %s22, 1
    %p282 = por %p280, %p281
    %p284 = scmp.ne.s32.totalorder %s267, %s283
    %p285 = scmp.eq.s32.totalorder %s22, 0
    %p286 = por %p284, %p285
    %s287 = ssub.s32 %s23, %s42
    %s288 = ssub.s32 %s24, %s38
    %s289 = sor.u32 %s287, %s288
    %s290 = ssub.s32 %s25, %s34
    %s291 = sor.u32 %s289, %s290
    %p292 = scmp.eq.s32.totalorder %s291, 0
    %s294 = sadd.s32 %s293, 1
    %s295 = scalar_select %p292, %s293, %s294
    %p298 = pneg %p292
    %p299 = scmp.eq.s32.totalorder %s16, 1
    %p300 = por %p298, %p299
    %p301 = scmp.ne.s32.totalorder %s293, %s296
    %p302 = scmp.eq.s32.totalorder %s16, 0
    %p303 = por %p301, %p302
    %p304 = scmp.ne.s32.totalorder %s293, %s296
    %p305 = scmp.eq.s32.totalorder %s21, 1
    %p306 = por %p304, %p305
    %p307 = scmp.ne.s32.totalorder %s296, %s297
    %p308 = scmp.eq.s32.totalorder %s21, 0
    %p309 = por %p307, %p308
    %p310 = scmp.ne.s32.totalorder %s296, %s297
    %p311 = scmp.eq.s32.totalorder %s22, 1
    %p312 = por %p310, %p311
    %p314 = scmp.ne.s32.totalorder %s297, %s313
    %p315 = scmp.eq.s32.totalorder %s22, 0
    %p316 = por %p314, %p315
    %p317 = scmp.le.s32.totalorder 1, %s16
    %p318 = scmp.lt.s32.totalorder %s16, 3
    %p319 = pnand %p317, %p318
    %p320 = pneg %p319
    // Predicated region
    $region9: #{sparse_attention.3} parent=5 // pred_check
      _
    $region10: #{sparse_attention.3} parent=5 // pred_check_branch
      %322 = sbr.rel (%p319) target = $region12
    $region11: #{sparse_attention.3} parent=5 // pred_region
      %s323 = ssub.s32 %s16, 1
      // Predicated region
      $region13: #{sparse_attention.3} parent=11 // pred_check
        %p324 = pneg %p89
      $region14: #{sparse_attention.3} parent=11 // pred_check_branch
        %326 = sbr.rel (%p324) target = $region16
      $region15: #{sparse_attention.3} parent=11 // pred_region
        %p327 = scmp.lt.s32.totalorder %s28, 0
        %s328 = scalar_select %p327, %s28, 0
        %s329 = smul.addr %s328, 4
        %s330 = scalar_lea.vmem %s1, %s329
      $region16: #{sparse_attention.3} parent=11 // pred_fallthru
        _
      // Predicated region
      $region17: #{sparse_attention.3} parent=11 // pred_check
        %p331 = pneg %p115
      $region18: #{sparse_attention.3} parent=11 // pred_check_branch
        %333 = sbr.rel (%p331) target = $region20
      $region19: #{sparse_attention.3} parent=11 // pred_region
        %p334 = scmp.lt.s32.totalorder %s28, 0
        %s335 = scalar_select %p334, %s28, 0
        %s336 = smul.addr %s335, 4
        %s337 = scalar_lea.vmem %s2, %s336
      $region20: #{sparse_attention.3} parent=11 // pred_fallthru
        _
      // Predicated region
      $region21: #{sparse_attention.3} parent=11 // pred_check
        %p338 = pneg %p141
      $region22: #{sparse_attention.3} parent=11 // pred_check_branch
        %340 = sbr.rel (%p338) target = $region24
      $region23: #{sparse_attention.3} parent=11 // pred_region
        %p341 = scmp.lt.s32.totalorder %s28, 0
        %s342 = scalar_select %p341, %s28, 0
        %s343 = smul.addr %s342, 4
        %s344 = scalar_lea.vmem %s3, %s343
      $region24: #{sparse_attention.3} parent=11 // pred_fallthru
        _
      // Predicated region
      $region25: #{sparse_attention.3} parent=11 // pred_check
        %p345 = pneg %p167
      $region26: #{sparse_attention.3} parent=11 // pred_check_branch
        %347 = sbr.rel (%p345) target = $region28
      $region27: #{sparse_attention.3} parent=11 // pred_region
        %p348 = scmp.lt.s32.totalorder %s28, 0
        %s349 = scalar_select %p348, %s28, 0
        %s350 = scalar_lea.vmem %s4, %s349
      $region28: #{sparse_attention.3} parent=11 // pred_fallthru
        _
      // Predicated region
      $region29: #{sparse_attention.3} parent=11 // pred_check
        %p351 = pneg %p193
      $region30: #{sparse_attention.3} parent=11 // pred_check_branch
        %353 = sbr.rel (%p351) target = $region32
      $region31: #{sparse_attention.3} parent=11 // pred_region
        %p354 = scmp.lt.s32.totalorder %s28, 0
        %s355 = scalar_select %p354, %s28, 0
        %s356 = scalar_lea.vmem %s5, %s355
      $region32: #{sparse_attention.3} parent=11 // pred_fallthru
        _
      // Predicated region
      $region33: #{sparse_attention.3} parent=11 // pred_check
        %p357 = pneg %p219
      $region34: #{sparse_attention.3} parent=11 // pred_check_branch
        %359 = sbr.rel (%p357) target = $region36
      $region35: #{sparse_attention.3} parent=11 // pred_region
        %p360 = scmp.lt.s32.totalorder %s28, 0
        %s361 = scalar_select %p360, %s28, 0
        %s362 = scalar_lea.vmem %s6, %s361
      $region36: #{sparse_attention.3} parent=11 // pred_fallthru
        _
    $region12: #{sparse_attention.3} parent=5 // pred_fallthru
      _
    %p363 = scmp.lt.s32.totalorder %s16, 2
    // Predicated region
    $region37: #{sparse_attention.3} parent=5 // pred_check
      %p364 = pneg %p363
    $region38: #{sparse_attention.3} parent=5 // pred_check_branch
      %366 = sbr.rel (%p364) target = $region40
    $region39: #{sparse_attention.3} parent=5 // pred_region
      // Predicated region
      $region41: #{sparse_attention.3} parent=39 // pred_check
        %p367 = pneg %p57
      $region42: #{sparse_attention.3} parent=39 // pred_check_branch
        %369 = sbr.rel (%p367) target = $region44
      $region43: #{sparse_attention.3} parent=39 // pred_region
        %p370 = scmp.lt.s32.totalorder %s23, 1
        %s371 = scalar_select %p370, %s23, 1
        %p372 = scmp.lt.s32.totalorder %s24, 0
        %s373 = scalar_select %p372, %s24, 0
        %s374 = sadd.s32 %s373, %s371
        %s375 = smul.addr %s374, 4
        %s376 = scalar_lea.vmem %s0, %s375
      $region44: #{sparse_attention.3} parent=39 // pred_fallthru
        _
    $region40: #{sparse_attention.3} parent=5 // pred_fallthru
      _
    %p377 = scmp.le.s32.totalorder 1, %s16
    %p378 = scmp.lt.s32.totalorder %s16, 3
    %p379 = pnand %p377, %p378
    %p380 = pneg %p379
    // Predicated region
    $region45: #{sparse_attention.3} parent=5 // pred_check
      _
    $region46: #{sparse_attention.3} parent=5 // pred_check_branch
      %382 = sbr.rel (%p379) target = $region48
    $region47: #{sparse_attention.3} parent=5 // pred_region
      %s383 = ssub.s32 %s16, 1
      %p384 = scmp.lt.s32.totalorder %s26, 1
      %s385 = scalar_select %p384, %s26, 1
      %p386 = scmp.lt.s32.totalorder %s27, 0
      %s387 = scalar_select %p386, %s27, 0
      %s388 = sadd.s32 %s387, %s385
      %s389 = smul.addr %s388, 4
      %s390 = scalar_lea.vmem %s0, %s389
      %p391 = pneg %p63
      %p392 = pneg %p60
      %p393 = scmp.lt.s32.totalorder %s28, 0
      %s394 = scalar_select %p393, %s28, 0
      %s395 = smul.addr %s394, 4
      %s396 = scalar_lea.vmem %s1, %s395
      %p397 = pneg %p89
      %p398 = pneg %p86
      %p399 = scmp.lt.s32.totalorder %s28, 0
      %s400 = scalar_select %p399, %s28, 0
      %s401 = smul.addr %s400, 4
      %s402 = scalar_lea.vmem %s2, %s401
      %p403 = pneg %p115
      %p404 = pneg %p112
      %p405 = scmp.lt.s32.totalorder %s28, 0
      %s406 = scalar_select %p405, %s28, 0
      %s407 = smul.addr %s406, 4
      %s408 = scalar_lea.vmem %s3, %s407
      %p409 = pneg %p141
      %p410 = pneg %p138
      %p411 = scmp.lt.s32.totalorder %s28, 0
      %s412 = scalar_select %p411, %s28, 0
      %s413 = scalar_lea.vmem %s4, %s412
      %p414 = pneg %p167
      %p415 = pneg %p164
      %p416 = scmp.lt.s32.totalorder %s28, 0
      %s417 = scalar_select %p416, %s28, 0
      %s418 = scalar_lea.vmem %s5, %s417
      %p419 = pneg %p193
      %p420 = pneg %p190
      %p421 = scmp.lt.s32.totalorder %s28, 0
      %s422 = scalar_select %p421, %s28, 0
      %s423 = scalar_lea.vmem %s6, %s422
      %p424 = pneg %p219
      %p425 = pneg %p216
      %p426 = pneg %p249
      %p427 = pneg %p246
      %p428 = scmp.lt.s32.totalorder %s26, 1
      %s429 = scalar_select %p428, %s26, 1
      %p430 = scmp.lt.s32.totalorder %s27, 0
      %s431 = scalar_select %p430, %s27, 0
      %p432 = scmp.lt.s32.totalorder %s28, 0
      %s433 = scalar_select %p432, %s28, 0
      %s434 = sadd.s32 %s433, %s431
      %s435 = sadd.s32 %s434, %s429
      %s436 = smul.addr %s435, 4
      %s437 = scalar_lea.vmem %s7, %s436
      %p438 = pneg %p279
      %p439 = pneg %p276
      %p440 = scmp.lt.s32.totalorder %s26, 1
      %s441 = scalar_select %p440, %s26, 1
      %p442 = scmp.lt.s32.totalorder %s27, 0
      %s443 = scalar_select %p442, %s27, 0
      %p444 = scmp.lt.s32.totalorder %s28, 0
      %s445 = scalar_select %p444, %s28, 0
      %s446 = sadd.s32 %s445, %s443
      %s447 = sadd.s32 %s446, %s441
      %s448 = smul.addr %s447, 4
      %s449 = scalar_lea.vmem %s8, %s448
      %p450 = pneg %p309
      %p451 = pneg %p306
      %p452 = scmp.lt.s32.totalorder %s26, 1
      %s453 = scalar_select %p452, %s26, 1
      %p454 = scmp.lt.s32.totalorder %s27, 0
      %s455 = scalar_select %p454, %s27, 0
      %p456 = scmp.lt.s32.totalorder %s28, 0
      %s457 = scalar_select %p456, %s28, 0
      %s458 = sadd.s32 %s457, %s455
      %s459 = sadd.s32 %s458, %s453
      %s460 = smul.addr %s459, 4
      %s461 = scalar_lea.vmem %s9, %s460
      %p462 = scmp.lt.s32.totalorder %s26, 1
      %s463 = scalar_select %p462, %s26, 1
      %p464 = scmp.lt.s32.totalorder %s27, 0
      %s465 = scalar_select %p464, %s27, 0
      %s466 = sadd.s32 %s465, %s463
      %s467 = smul.addr %s466, 4
      %s468 = scalar_lea.vmem %s0, %s467
      %p469 = scmp.lt.s32.totalorder %s28, 0
      %s470 = scalar_select %p469, %s28, 0
      %s471 = smul.addr %s470, 4
      %s472 = scalar_lea.vmem %s1, %s471
      %p473 = scmp.lt.s32.totalorder %s28, 0
      %s474 = scalar_select %p473, %s28, 0
      %s475 = smul.addr %s474, 4
      %s476 = scalar_lea.vmem %s2, %s475
      %p477 = scmp.lt.s32.totalorder %s28, 0
      %s478 = scalar_select %p477, %s28, 0
      %s479 = smul.addr %s478, 4
      %s480 = scalar_lea.vmem %s3, %s479
      %p481 = scmp.lt.s32.totalorder %s28, 0
      %s482 = scalar_select %p481, %s28, 0
      %s483 = scalar_lea.vmem %s4, %s482
      %p484 = scmp.lt.s32.totalorder %s28, 0
      %s485 = scalar_select %p484, %s28, 0
      %s486 = scalar_lea.vmem %s5, %s485
      %p487 = scmp.lt.s32.totalorder %s28, 0
      %s488 = scalar_select %p487, %s28, 0
      %s489 = scalar_lea.vmem %s6, %s488
      %p490 = scmp.lt.s32.totalorder %s26, 1
      %s491 = scalar_select %p490, %s26, 1
      %p492 = scmp.lt.s32.totalorder %s27, 0
      %s493 = scalar_select %p492, %s27, 0
      %p494 = scmp.lt.s32.totalorder %s28, 0
      %s495 = scalar_select %p494, %s28, 0
      %s496 = sadd.s32 %s495, %s493
      %s497 = sadd.s32 %s496, %s491
      %s498 = smul.addr %s497, 4
      %s499 = scalar_lea.vmem %s7, %s498
      %p500 = scmp.lt.s32.totalorder %s26, 1
      %s501 = scalar_select %p500, %s26, 1
      %p502 = scmp.lt.s32.totalorder %s27, 0
      %s503 = scalar_select %p502, %s27, 0
      %p504 = scmp.lt.s32.totalorder %s28, 0
      %s505 = scalar_select %p504, %s28, 0
      %s506 = sadd.s32 %s505, %s503
      %s507 = sadd.s32 %s506, %s501
      %s508 = smul.addr %s507, 4
      %s509 = scalar_lea.vmem %s8, %s508
      %p510 = scmp.lt.s32.totalorder %s26, 1
      %s511 = scalar_select %p510, %s26, 1
      %p512 = scmp.lt.s32.totalorder %s27, 0
      %s513 = scalar_select %p512, %s27, 0
      %p514 = scmp.lt.s32.totalorder %s28, 0
      %s515 = scalar_select %p514, %s28, 0
      %s516 = sadd.s32 %s515, %s513
      %s517 = sadd.s32 %s516, %s511
      %s518 = smul.addr %s517, 4
      %s519 = scalar_lea.vmem %s9, %s518
      %v521 = vld [vmem:[%s468] sm:$0xf]
      %v522 = vld [vmem:[%s472] sm:$0xf]
      %v523 = vld [vmem:[%s472 + $0x4] sm:$0xf]
      %v524 = vld [vmem:[%s472 + $0x8] sm:$0xf]
      %v525 = vld [vmem:[%s472 + $0xc] sm:$0xf]
      %v526 = vld [vmem:[%s483] sm:$0x1]
      %v528 = vlaneseq
      %v529 = vshrl.u32 %v528, 7
      %v530 = vsub.s32 0, %v529
      %v531 = vrot.slane %v526, %v530
      %v537 = vunpack.c.l.b16 %v522
      %v538 = vunpack.c.l.b16 %v523
      %v539 = vunpack.c.l.b16 %v524
      %v540 = vunpack.c.l.b16 %v525
      %v541 = vpack.c.b16 %v538, %v537
      %v542 = vpack.c.b16 %v540, %v539
      %vm545 = vcmask 261120
      %v547 = vsel %vm545, %v521, 0
      %549 = vmatprep.subr.bf16.mxu0 0
      %550 = vmatpush1.bf16.msra.mxu0 %v541
      %551 = vmatprep.subr.bf16.mxu0 0
      %552 = vmatpush1.bf16.msra.mxu0 %v542
      %553 = vmatprep.subr.bf16.mxu0 0
      %554 = vmatpush1.bf16.msra.mxu0 0
      %555 = vmatprep.subr.bf16.mxu0 0
      %556 = vmatpush1.bf16.msra.mxu0 0
      %557 = vmatprep.subr.bf16.mxu0 0
      %558 = vmatpush1.bf16.msra.mxu0 0
      %559 = vmatprep.subr.bf16.mxu0 0
      %560 = vmatpush1.bf16.msra.mxu0 0
      %561 = vmatprep.subr.bf16.mxu0 0
      %562 = vmatpush1.bf16.msra.mxu0 0
      %563 = vmatprep.subr.bf16.mxu0 0
      %564 = vmatpush1.bf16.msra.mxu0 0
      %565 = vmatprep.subr.bf16.mxu0 0
      %566 = vmatpush1.bf16.msra.mxu0 0
      %567 = vmatprep.subr.bf16.mxu0 0
      %568 = vmatpush1.bf16.msra.mxu0 0
      %569 = vmatprep.subr.bf16.mxu0 0
      %570 = vmatpush1.bf16.msra.mxu0 0
      %571 = vmatprep.subr.bf16.mxu0 0
      %572 = vmatpush1.bf16.msra.mxu0 0
      %573 = vmatprep.subr.bf16.mxu0 0
      %574 = vmatpush1.bf16.msra.mxu0 0
      %575 = vmatprep.subr.bf16.mxu0 0
      %576 = vmatpush1.bf16.msra.mxu0 0
      %577 = vmatprep.subr.bf16.mxu0 0
      %578 = vmatpush1.bf16.msra.mxu0 0
      %579 = vmatprep.subr.bf16.mxu0 0
      %580 = vmatpush1.bf16.msra.mxu0 0
      %581 = vmatprep.mubr.bf16.mxu0 0
      %582 = vmatmul.mubr.bf16.gmra.mrb[0].mxu0 %v547
      %v583 = vpop.f32.mrb[0].mxu0
      %v584 = vadd.f32 %v531, %v583
      %v585 = vpop.f32.mrb[0].mxu0
      %v586 = vpop.f32.mrb[0].mxu0
      %v587 = vpop.f32.mrb[0].mxu0
      %588 = vdwg.mxu0
      %v589 = vld [vmem:[%s476] sm:$0xf]
      %v590 = vld [vmem:[%s476 + $0x4] sm:$0xf]
      %v591 = vld [vmem:[%s476 + $0x8] sm:$0xf]
      %v592 = vld [vmem:[%s476 + $0xc] sm:$0xf]
      %v593 = vld [vmem:[%s486] sm:$0x1]
      %v595 = vlaneseq
      %v596 = vshrl.u32 %v595, 7
      %v597 = vsub.s32 0, %v596
      %v598 = vrot.slane %v593, %v597
      %v604 = vunpack.c.l.b16 %v589
      %v605 = vunpack.c.l.b16 %v590
      %v606 = vunpack.c.l.b16 %v591
      %v607 = vunpack.c.l.b16 %v592
      %v608 = vpack.c.b16 %v605, %v604
      %v609 = vpack.c.b16 %v607, %v606
      %612 = vmatprep.subr.bf16.mxu0 0
      %613 = vmatpush1.bf16.msra.mxu0 %v608
      %614 = vmatprep.subr.bf16.mxu0 0
      %615 = vmatpush1.bf16.msra.mxu0 %v609
      %616 = vmatprep.subr.bf16.mxu0 0
      %617 = vmatpush1.bf16.msra.mxu0 0
      %618 = vmatprep.subr.bf16.mxu0 0
      %619 = vmatpush1.bf16.msra.mxu0 0
      %620 = vmatprep.subr.bf16.mxu0 0
      %621 = vmatpush1.bf16.msra.mxu0 0
      %622 = vmatprep.subr.bf16.mxu0 0
      %623 = vmatpush1.bf16.msra.mxu0 0
      %624 = vmatprep.subr.bf16.mxu0 0
      %625 = vmatpush1.bf16.msra.mxu0 0
      %626 = vmatprep.subr.bf16.mxu0 0
      %627 = vmatpush1.bf16.msra.mxu0 0
      %628 = vmatprep.subr.bf16.mxu0 0
      %629 = vmatpush1.bf16.msra.mxu0 0
      %630 = vmatprep.subr.bf16.mxu0 0
      %631 = vmatpush1.bf16.msra.mxu0 0
      %632 = vmatprep.subr.bf16.mxu0 0
      %633 = vmatpush1.bf16.msra.mxu0 0
      %634 = vmatprep.subr.bf16.mxu0 0
      %635 = vmatpush1.bf16.msra.mxu0 0
      %636 = vmatprep.subr.bf16.mxu0 0
      %637 = vmatpush1.bf16.msra.mxu0 0
      %638 = vmatprep.subr.bf16.mxu0 0
      %639 = vmatpush1.bf16.msra.mxu0 0
      %640 = vmatprep.subr.bf16.mxu0 0
      %641 = vmatpush1.bf16.msra.mxu0 0
      %642 = vmatprep.subr.bf16.mxu0 0
      %643 = vmatpush1.bf16.msra.mxu0 0
      %644 = vmatprep.mubr.bf16.mxu0 0
      %645 = vmatmul.mubr.bf16.gmra.mrb[0].mxu0 %v547
      %v646 = vpop.f32.mrb[0].mxu0
      %v647 = vadd.f32 %v598, %v646
      %v648 = vpop.f32.mrb[0].mxu0
      %v649 = vpop.f32.mrb[0].mxu0
      %v650 = vpop.f32.mrb[0].mxu0
      %651 = vdwg.mxu0
      %v652 = vld [vmem:[%s480] sm:$0xf]
      %v653 = vld [vmem:[%s480 + $0x4] sm:$0xf]
      %v654 = vld [vmem:[%s480 + $0x8] sm:$0xf]
      %v655 = vld [vmem:[%s480 + $0xc] sm:$0xf]
      %v656 = vld [vmem:[%s489] sm:$0x1]
      %v658 = vlaneseq
      %v659 = vshrl.u32 %v658, 7
      %v660 = vsub.s32 0, %v659
      %v661 = vrot.slane %v656, %v660
      %v667 = vunpack.c.l.b16 %v652
      %v668 = vunpack.c.l.b16 %v653
      %v669 = vunpack.c.l.b16 %v654
      %v670 = vunpack.c.l.b16 %v655
      %v671 = vpack.c.b16 %v668, %v667
      %v672 = vpack.c.b16 %v670, %v669
      %675 = vmatprep.subr.bf16.mxu0 0
      %676 = vmatpush1.bf16.msra.mxu0 %v671
      %677 = vmatprep.subr.bf16.mxu0 0
      %678 = vmatpush1.bf16.msra.mxu0 %v672
      %679 = vmatprep.subr.bf16.mxu0 0
      %680 = vmatpush1.bf16.msra.mxu0 0
      %681 = vmatprep.subr.bf16.mxu0 0
      %682 = vmatpush1.bf16.msra.mxu0 0
      %683 = vmatprep.subr.bf16.mxu0 0
      %684 = vmatpush1.bf16.msra.mxu0 0
      %685 = vmatprep.subr.bf16.mxu0 0
      %686 = vmatpush1.bf16.msra.mxu0 0
      %687 = vmatprep.subr.bf16.mxu0 0
      %688 = vmatpush1.bf16.msra.mxu0 0
      %689 = vmatprep.subr.bf16.mxu0 0
      %690 = vmatpush1.bf16.msra.mxu0 0
      %691 = vmatprep.subr.bf16.mxu0 0
      %692 = vmatpush1.bf16.msra.mxu0 0
      %693 = vmatprep.subr.bf16.mxu0 0
      %694 = vmatpush1.bf16.msra.mxu0 0
      %695 = vmatprep.subr.bf16.mxu0 0
      %696 = vmatpush1.bf16.msra.mxu0 0
      %697 = vmatprep.subr.bf16.mxu0 0
      %698 = vmatpush1.bf16.msra.mxu0 0
      %699 = vmatprep.subr.bf16.mxu0 0
      %700 = vmatpush1.bf16.msra.mxu0 0
      %701 = vmatprep.subr.bf16.mxu0 0
      %702 = vmatpush1.bf16.msra.mxu0 0
      %703 = vmatprep.subr.bf16.mxu0 0
      %704 = vmatpush1.bf16.msra.mxu0 0
      %705 = vmatprep.subr.bf16.mxu0 0
      %706 = vmatpush1.bf16.msra.mxu0 0
      %707 = vmatprep.mubr.bf16.mxu0 0
      %708 = vmatmul.mubr.bf16.gmra.mrb[0].mxu0 %v547
      %v709 = vpop.f32.mrb[0].mxu0
      %v710 = vadd.f32 %v661, %v709
      %v711 = vpop.f32.mrb[0].mxu0
      %v712 = vpop.f32.mrb[0].mxu0
      %v713 = vpop.f32.mrb[0].mxu0
      %714 = vdwg.mxu0
      %v715 = vmul.f32 %v584, 0.35355338
      %v716 = vpack.c.bf16 %v715, %v715
      %vm717 = vcmask 257024
      %718 = vst.msk [vmem:[%s499] sm:$0xf] %vm717, %v716
      %v719 = vpack.c.bf16 %v647, %v647
      %720 = vst.msk [vmem:[%s509] sm:$0xf] %vm717, %v719
      %v721 = vpack.c.bf16 %v710, %v710
      %722 = vst.msk [vmem:[%s519] sm:$0xf] %vm717, %v721
      %p723 = scmp.lt.s32.totalorder %s26, 1
      %s724 = scalar_select %p723, %s26, 1
      %p725 = scmp.lt.s32.totalorder %s27, 0
      %s726 = scalar_select %p725, %s27, 0
      %p727 = scmp.lt.s32.totalorder %s28, 0
      %s728 = scalar_select %p727, %s28, 0
      %s729 = sadd.s32 %s728, %s726
      %s730 = sadd.s32 %s729, %s724
      %s731 = smul.addr %s730, 4
      %s732 = scalar_lea.vmem %s7, %s731
      %p733 = scmp.lt.s32.totalorder %s26, 1
      %s734 = scalar_select %p733, %s26, 1
      %p735 = scmp.lt.s32.totalorder %s27, 0
      %s736 = scalar_select %p735, %s27, 0
      %p737 = scmp.lt.s32.totalorder %s28, 0
      %s738 = scalar_select %p737, %s28, 0
      %s739 = sadd.s32 %s738, %s736
      %s740 = sadd.s32 %s739, %s734
      %s741 = smul.addr %s740, 4
      %s742 = scalar_lea.vmem %s8, %s741
      %p743 = scmp.lt.s32.totalorder %s26, 1
      %s744 = scalar_select %p743, %s26, 1
      %p745 = scmp.lt.s32.totalorder %s27, 0
      %s746 = scalar_select %p745, %s27, 0
      %p747 = scmp.lt.s32.totalorder %s28, 0
      %s748 = scalar_select %p747, %s28, 0
      %s749 = sadd.s32 %s748, %s746
      %s750 = sadd.s32 %s749, %s744
      %s751 = smul.addr %s750, 4
      %s752 = scalar_lea.vmem %s9, %s751
      // Predicated region
      $region49: #{sparse_attention.3} parent=47 // pred_check
        %p753 = pneg %p246
      $region50: #{sparse_attention.3} parent=47 // pred_check_branch
        %755 = sbr.rel (%p753) target = $region52
      $region51: #{sparse_attention.3} parent=47 // pred_region
        _
      $region52: #{sparse_attention.3} parent=47 // pred_fallthru
        _
      // Predicated region
      $region53: #{sparse_attention.3} parent=47 // pred_check
        %p756 = pneg %p276
      $region54: #{sparse_attention.3} parent=47 // pred_check_branch
        %758 = sbr.rel (%p756) target = $region56
      $region55: #{sparse_attention.3} parent=47 // pred_region
        _
      $region56: #{sparse_attention.3} parent=47 // pred_fallthru
        _
      // Predicated region
      $region57: #{sparse_attention.3} parent=47 // pred_check
        %p759 = pneg %p306
      $region58: #{sparse_attention.3} parent=47 // pred_check_branch
        %761 = sbr.rel (%p759) target = $region60
      $region59: #{sparse_attention.3} parent=47 // pred_region
        _
      $region60: #{sparse_attention.3} parent=47 // pred_fallthru
        _
    $region48: #{sparse_attention.3} parent=5 // pred_fallthru
      _
    %p762 = scmp.le.s32.totalorder 2, %s16
    // Predicated region
    $region61: #{sparse_attention.3} parent=5 // pred_check
      %p763 = pneg %p762
    $region62: #{sparse_attention.3} parent=5 // pred_check_branch
      %765 = sbr.rel (%p763) target = $region64
    $region63: #{sparse_attention.3} parent=5 // pred_region
      %s766 = ssub.s32 %s16, 2
      // Predicated region
      $region65: #{sparse_attention.3} parent=63 // pred_check
        %p767 = pneg %p252
      $region66: #{sparse_attention.3} parent=63 // pred_check_branch
        %769 = sbr.rel (%p767) target = $region68
      $region67: #{sparse_attention.3} parent=63 // pred_region
        %p770 = scmp.lt.s32.totalorder %s29, 1
        %s771 = scalar_select %p770, %s29, 1
        %p772 = scmp.lt.s32.totalorder %s30, 0
        %s773 = scalar_select %p772, %s30, 0
        %p774 = scmp.lt.s32.totalorder %s31, 0
        %s775 = scalar_select %p774, %s31, 0
        %s776 = sadd.s32 %s775, %s773
        %s777 = sadd.s32 %s776, %s771
        %s778 = smul.addr %s777, 4
        %s779 = scalar_lea.vmem %s7, %s778
      $region68: #{sparse_attention.3} parent=63 // pred_fallthru
        _
      // Predicated region
      $region69: #{sparse_attention.3} parent=63 // pred_check
        %p780 = pneg %p282
      $region70: #{sparse_attention.3} parent=63 // pred_check_branch
        %782 = sbr.rel (%p780) target = $region72
      $region71: #{sparse_attention.3} parent=63 // pred_region
        %p783 = scmp.lt.s32.totalorder %s29, 1
        %s784 = scalar_select %p783, %s29, 1
        %p785 = scmp.lt.s32.totalorder %s30, 0
        %s786 = scalar_select %p785, %s30, 0
        %p787 = scmp.lt.s32.totalorder %s31, 0
        %s788 = scalar_select %p787, %s31, 0
        %s789 = sadd.s32 %s788, %s786
        %s790 = sadd.s32 %s789, %s784
        %s791 = smul.addr %s790, 4
        %s792 = scalar_lea.vmem %s8, %s791
      $region72: #{sparse_attention.3} parent=63 // pred_fallthru
        _
      // Predicated region
      $region73: #{sparse_attention.3} parent=63 // pred_check
        %p793 = pneg %p312
      $region74: #{sparse_attention.3} parent=63 // pred_check_branch
        %795 = sbr.rel (%p793) target = $region76
      $region75: #{sparse_attention.3} parent=63 // pred_region
        %p796 = scmp.lt.s32.totalorder %s29, 1
        %s797 = scalar_select %p796, %s29, 1
        %p798 = scmp.lt.s32.totalorder %s30, 0
        %s799 = scalar_select %p798, %s30, 0
        %p800 = scmp.lt.s32.totalorder %s31, 0
        %s801 = scalar_select %p800, %s31, 0
        %s802 = sadd.s32 %s801, %s799
        %s803 = sadd.s32 %s802, %s797
        %s804 = smul.addr %s803, 4
        %s805 = scalar_lea.vmem %s9, %s804
      $region76: #{sparse_attention.3} parent=63 // pred_fallthru
        _
    $region64: #{sparse_attention.3} parent=5 // pred_fallthru
      _
  $region6: #{sparse_attention.3} parent=0 // loop_footer
    %s20 = sadd.s32 1, %s16
  $region7: #{sparse_attention.3} parent=0 // loop_footer_branch
    %15 = sbr.rel target = $region3
  $region8: #{sparse_attention.3} parent=0 // loop_exit
    _

// kernel: sparse_attention.5
$region0: #{sparse_attention.5}
  #allocation0 [shape = 'u32[]', space=smem, size = 0x4, offset = 0x4, fixed_abs, tag = 'smem constant byte address 0x4 - core index']
  #allocation1 [shape = 'u32[144,128]{1,0:T(1,128)}', space=vmem, size = 0x12000, scoped, tag = 'internal scratch']
  %s0 = inlined_call_operand.vmem [shape: bf16[2,8,32], index: 0, kind: input, shape index: {}]
  %s1 = inlined_call_operand.vmem [shape: bf16[32,32], index: 1, kind: input, shape index: {}]
  %s2 = inlined_call_operand.vmem [shape: f32[1,32], index: 2, kind: input, shape index: {}]
  %s3 = inlined_call_operand.hbm [shape: f32[2,8,32], index: 3, kind: output, shape index: {}]
  %s4 = sld [smem:[#allocation0]]
  $region45: #{sparse_attention.5} parent=0
    _
  %s6 = ssub.s32 1, %s4
  %s7 = scalar_select 0, %s6, %s4
  $region1: #{sparse_attention.5} parent=0
    #allocation2 [shape = 'u8[8192]{0}', space=vmem, size = 0x2000, scoped, tag = 'output window, operand 0']
    #allocation3 [shape = 's32[2]{0}', space=sflag, size = 0x8, scoped, tag = 'scoped memory for sparse_attention.5']
    %8 = vsyncpa [#allocation3], 0
    %s9 = scalar_lea.sflag [#allocation3], 1
    %10 = vsyncpa %s9, 0
    loop: start=0, step=1, limit=4
    $region2: #{sparse_attention.5} parent=1 // loop_pre_header
      _
    $region3: #{sparse_attention.5} parent=1 // loop_header
      %s12 = sphi 0, %s16
      %p13 = scmp.ge.s32.totalorder %s12, 4
      %s19 = sphi 0, %s38
      %s20 = sphi 0, %s34
      %s21 = sphi 0, %s30
      %s22 = sphi 0, %s19
      %s23 = sphi 0, %s20
      %s24 = sphi 0, %s21
      %s25 = sphi 0, %s22
      %s26 = sphi 0, %s23
      %s27 = sphi 0, %s24
      %s43 = sphi 0, %s45
      %s46 = sphi 0, %s43
      %s47 = sphi 0, %s46
      %s63 = sphi 0, %s47
      %s69 = sphi 0, %s71
      %s72 = sphi 0, %s69
      %s73 = sphi 0, %s72
      %s89 = sphi 0, %s73
      %s95 = sphi 0, %s97
      %s98 = sphi 0, %s95
      %s99 = sphi 0, %s98
      %s115 = sphi 0, %s99
      %s125 = sphi 0, %s127
      %s128 = sphi 0, %s125
      %s129 = sphi 0, %s128
      %s145 = sphi 0, %s129
    $region4: #{sparse_attention.5} parent=1 // loop_header_branch
      %15 = sbr.rel (%p13) target = $region8
    $region5: #{sparse_attention.5} parent=1 // loop_body
      %s17 = ssub.s32 %s12, 1
      %s18 = ssub.s32 %s12, 2
      %s28 = sadd.s32 1, %s21
      %p29 = scmp.ge.s32.totalorder %s28, 1
      %s30 = scalar_select %p29, 0, %s28
      %s31 = sadd.s32 1, %s20
      %s32 = scalar_select %p29, %s31, %s20
      %p33 = scmp.ge.s32.totalorder %s32, 1
      %s34 = scalar_select %p33, 0, %s32
      %s35 = sadd.s32 1, %s19
      %s36 = scalar_select %p33, %s35, %s19
      %p37 = scmp.ge.s32.totalorder %s36, 2
      %s38 = scalar_select %p37, 0, %s36
      %s39 = ssub.s32 %s19, %s38
      %s40 = ssub.s32 %s20, %s34
      %s41 = sor.u32 %s39, %s40
      %p42 = scmp.eq.s32.totalorder %s41, 0
      %s44 = sadd.s32 %s43, 1
      %s45 = scalar_select %p42, %s43, %s44
      %p48 = pneg %p42
      %p49 = scmp.eq.s32.totalorder %s12, 1
      %p50 = por %p48, %p49
      %p51 = scmp.ne.s32.totalorder %s43, %s46
      %p52 = scmp.eq.s32.totalorder %s12, 0
      %p53 = por %p51, %p52
      %p54 = scmp.ne.s32.totalorder %s43, %s46
      %p55 = scmp.eq.s32.totalorder %s17, 1
      %p56 = por %p54, %p55
      %p57 = scmp.ne.s32.totalorder %s46, %s47
      %p58 = scmp.eq.s32.totalorder %s17, 0
      %p59 = por %p57, %p58
      %p60 = scmp.ne.s32.totalorder %s46, %s47
      %p61 = scmp.eq.s32.totalorder %s18, 1
      %p62 = por %p60, %p61
      %p64 = scmp.ne.s32.totalorder %s47, %s63
      %p65 = scmp.eq.s32.totalorder %s18, 0
      %p66 = por %p64, %p65
      %s67 = ssub.s32 %s21, %s30
      %p68 = scmp.eq.s32.totalorder %s67, 0
      %s70 = sadd.s32 %s69, 1
      %s71 = scalar_select %p68, %s69, %s70
      %p74 = pneg %p68
      %p75 = scmp.eq.s32.totalorder %s12, 1
      %p76 = por %p74, %p75
      %p77 = scmp.ne.s32.totalorder %s69, %s72
      %p78 = scmp.eq.s32.totalorder %s12, 0
      %p79 = por %p77, %p78
      %p80 = scmp.ne.s32.totalorder %s69, %s72
      %p81 = scmp.eq.s32.totalorder %s17, 1
      %p82 = por %p80, %p81
      %p83 = scmp.ne.s32.totalorder %s72, %s73
      %p84 = scmp.eq.s32.totalorder %s17, 0
      %p85 = por %p83, %p84
      %p86 = scmp.ne.s32.totalorder %s72, %s73
      %p87 = scmp.eq.s32.totalorder %s18, 1
      %p88 = por %p86, %p87
      %p90 = scmp.ne.s32.totalorder %s73, %s89
      %p91 = scmp.eq.s32.totalorder %s18, 0
      %p92 = por %p90, %p91
      %s93 = ssub.s32 %s21, %s30
      %p94 = scmp.eq.s32.totalorder %s93, 0
      %s96 = sadd.s32 %s95, 1
      %s97 = scalar_select %p94, %s95, %s96
      %p100 = pneg %p94
      %p101 = scmp.eq.s32.totalorder %s12, 1
      %p102 = por %p100, %p101
      %p103 = scmp.ne.s32.totalorder %s95, %s98
      %p104 = scmp.eq.s32.totalorder %s12, 0
      %p105 = por %p103, %p104
      %p106 = scmp.ne.s32.totalorder %s95, %s98
      %p107 = scmp.eq.s32.totalorder %s17, 1
      %p108 = por %p106, %p107
      %p109 = scmp.ne.s32.totalorder %s98, %s99
      %p110 = scmp.eq.s32.totalorder %s17, 0
      %p111 = por %p109, %p110
      %p112 = scmp.ne.s32.totalorder %s98, %s99
      %p113 = scmp.eq.s32.totalorder %s18, 1
      %p114 = por %p112, %p113
      %p116 = scmp.ne.s32.totalorder %s99, %s115
      %p117 = scmp.eq.s32.totalorder %s18, 0
      %p118 = por %p116, %p117
      %s119 = ssub.s32 %s19, %s38
      %s120 = ssub.s32 %s20, %s34
      %s121 = sor.u32 %s119, %s120
      %s122 = ssub.s32 %s21, %s30
      %s123 = sor.u32 %s121, %s122
      %p124 = scmp.eq.s32.totalorder %s123, 0
      %s126 = sadd.s32 %s125, 1
      %s127 = scalar_select %p124, %s125, %s126
      %p130 = pneg %p124
      %p131 = scmp.eq.s32.totalorder %s12, 1
      %p132 = por %p130, %p131
      %p133 = scmp.ne.s32.totalorder %s125, %s128
      %p134 = scmp.eq.s32.totalorder %s12, 0
      %p135 = por %p133, %p134
      %p136 = scmp.ne.s32.totalorder %s125, %s128
      %p137 = scmp.eq.s32.totalorder %s17, 1
      %p138 = por %p136, %p137
      %p139 = scmp.ne.s32.totalorder %s128, %s129
      %p140 = scmp.eq.s32.totalorder %s17, 0
      %p141 = por %p139, %p140
      %p142 = scmp.ne.s32.totalorder %s128, %s129
      %p143 = scmp.eq.s32.totalorder %s18, 1
      %p144 = por %p142, %p143
      %p146 = scmp.ne.s32.totalorder %s129, %s145
      %p147 = scmp.eq.s32.totalorder %s18, 0
      %p148 = por %p146, %p147
      %p149 = scmp.le.s32.totalorder 1, %s12
      %p150 = scmp.lt.s32.totalorder %s12, 3
      %p151 = pnand %p149, %p150
      %p152 = pneg %p151
      // Predicated region
      $region9: #{sparse_attention.5} parent=5 // pred_check
        _
      $region10: #{sparse_attention.5} parent=5 // pred_check_branch
        %154 = sbr.rel (%p151) target = $region12
      $region11: #{sparse_attention.5} parent=5 // pred_region
        %s155 = ssub.s32 %s12, 1
        // Predicated region
        $region13: #{sparse_attention.5} parent=11 // pred_check
          %p156 = pneg %p85
        $region14: #{sparse_attention.5} parent=11 // pred_check_branch
          %158 = sbr.rel (%p156) target = $region16
        $region15: #{sparse_attention.5} parent=11 // pred_region
          %p159 = scmp.lt.s32.totalorder %s24, 0
          %s160 = scalar_select %p159, %s24, 0
          %s161 = smul.addr %s160, 4
          %s162 = scalar_lea.vmem %s1, %s161
        $region16: #{sparse_attention.5} parent=11 // pred_fallthru
          _
        // Predicated region
        $region17: #{sparse_attention.5} parent=11 // pred_check
          %p163 = pneg %p111
        $region18: #{sparse_attention.5} parent=11 // pred_check_branch
          %165 = sbr.rel (%p163) target = $region20
        $region19: #{sparse_attention.5} parent=11 // pred_region
          %p166 = scmp.lt.s32.totalorder %s24, 0
          %s167 = scalar_select %p166, %s24, 0
          %s168 = scalar_lea.vmem %s2, %s167
        $region20: #{sparse_attention.5} parent=11 // pred_fallthru
          _
      $region12: #{sparse_attention.5} parent=5 // pred_fallthru
        _
      %p169 = scmp.lt.s32.totalorder %s12, 2
      // Predicated region
      $region21: #{sparse_attention.5} parent=5 // pred_check
        %p170 = pneg %p169
      $region22: #{sparse_attention.5} parent=5 // pred_check_branch
        %172 = sbr.rel (%p170) target = $region24
      $region23: #{sparse_attention.5} parent=5 // pred_region
        // Predicated region
        $region25: #{sparse_attention.5} parent=23 // pred_check
          %p173 = pneg %p53
        $region26: #{sparse_attention.5} parent=23 // pred_check_branch
          %175 = sbr.rel (%p173) target = $region28
        $region27: #{sparse_attention.5} parent=23 // pred_region
          %p176 = scmp.lt.s32.totalorder %s19, 1
          %s177 = scalar_select %p176, %s19, 1
          %p178 = scmp.lt.s32.totalorder %s20, 0
          %s179 = scalar_select %p178, %s20, 0
          %s180 = sadd.s32 %s179, %s177
          %s181 = smul.addr %s180, 4
          %s182 = scalar_lea.vmem %s0, %s181
        $region28: #{sparse_attention.5} parent=23 // pred_fallthru
          _
      $region24: #{sparse_attention.5} parent=5 // pred_fallthru
        _
      %p183 = scmp.le.s32.totalorder 1, %s12
      %p184 = scmp.lt.s32.totalorder %s12, 3
      %p185 = pnand %p183, %p184
      %p186 = pneg %p185
      // Predicated region
      $region29: #{sparse_attention.5} parent=5 // pred_check
        _
      $region30: #{sparse_attention.5} parent=5 // pred_check_branch
        %188 = sbr.rel (%p185) target = $region32
      $region31: #{sparse_attention.5} parent=5 // pred_region
        %s189 = ssub.s32 %s12, 1
        %p190 = scmp.lt.s32.totalorder %s22, 1
        %s191 = scalar_select %p190, %s22, 1
        %p192 = scmp.lt.s32.totalorder %s23, 0
        %s193 = scalar_select %p192, %s23, 0
        %s194 = sadd.s32 %s193, %s191
        %s195 = smul.addr %s194, 4
        %s196 = scalar_lea.vmem %s0, %s195
        %p197 = pneg %p59
        %p198 = pneg %p56
        %p199 = scmp.lt.s32.totalorder %s24, 0
        %s200 = scalar_select %p199, %s24, 0
        %s201 = smul.addr %s200, 4
        %s202 = scalar_lea.vmem %s1, %s201
        %p203 = pneg %p85
        %p204 = pneg %p82
        %p205 = scmp.lt.s32.totalorder %s24, 0
        %s206 = scalar_select %p205, %s24, 0
        %s207 = scalar_lea.vmem %s2, %s206
        %p208 = pneg %p111
        %p209 = pneg %p108
        %p210 = pneg %p141
        %p211 = pneg %p138
        %s212 = sand.u32 %s128, 1
        %s213 = scalar_lea.sflag [#allocation3], %s212
        %s214 = sand.u32 %s128, 1
        %s215 = smul.addr %s214, 8
        %s216 = scalar_lea.vmem [#allocation2], %s215
        %p217 = scmp.lt.s32.totalorder %s22, 1
        %s218 = scalar_select %p217, %s22, 1
        %p219 = scmp.lt.s32.totalorder %s23, 0
        %s220 = scalar_select %p219, %s23, 0
        %s221 = sadd.s32 %s220, %s218
        %s222 = smul.addr %s221, 4
        %s223 = scalar_lea.vmem %s0, %s222
        %p224 = scmp.lt.s32.totalorder %s24, 0
        %s225 = scalar_select %p224, %s24, 0
        %s226 = smul.addr %s225, 4
        %s227 = scalar_lea.vmem %s1, %s226
        %p228 = scmp.lt.s32.totalorder %s24, 0
        %s229 = scalar_select %p228, %s24, 0
        %s230 = scalar_lea.vmem %s2, %s229
        %v232 = vld [vmem:[%s223] sm:$0xf]
        %v233 = vld [vmem:[%s227] sm:$0xf]
        %v234 = vld [vmem:[%s227 + $0x4] sm:$0xf]
        %v235 = vld [vmem:[%s227 + $0x8] sm:$0xf]
        %v236 = vld [vmem:[%s227 + $0xc] sm:$0xf]
        %v237 = vld [vmem:[%s230] sm:$0x1]
        %v239 = vlaneseq
        %v240 = vshrl.u32 %v239, 7
        %v241 = vsub.s32 0, %v240
        %v242 = vrot.slane %v237, %v241
        %v248 = vunpack.c.l.b16 %v233
        %v249 = vunpack.c.l.b16 %v234
        %v250 = vunpack.c.l.b16 %v235
        %v251 = vunpack.c.l.b16 %v236
        %v252 = vpack.c.b16 %v249, %v248
        %v253 = vpack.c.b16 %v251, %v250
        %vm256 = vcmask 261120
        %v258 = vsel %vm256, %v232, 0
        %260 = vmatprep.subr.bf16.mxu0 0
        %261 = vmatpush1.bf16.msra.mxu0 %v252
        %262 = vmatprep.subr.bf16.mxu0 0
        %263 = vmatpush1.bf16.msra.mxu0 %v253
        %264 = vmatprep.subr.bf16.mxu0 0
        %265 = vmatpush1.bf16.msra.mxu0 0
        %266 = vmatprep.subr.bf16.mxu0 0
        %267 = vmatpush1.bf16.msra.mxu0 0
        %268 = vmatprep.subr.bf16.mxu0 0
        %269 = vmatpush1.bf16.msra.mxu0 0
        %270 = vmatprep.subr.bf16.mxu0 0
        %271 = vmatpush1.bf16.msra.mxu0 0
        %272 = vmatprep.subr.bf16.mxu0 0
        %273 = vmatpush1.bf16.msra.mxu0 0
        %274 = vmatprep.subr.bf16.mxu0 0
        %275 = vmatpush1.bf16.msra.mxu0 0
        %276 = vmatprep.subr.bf16.mxu0 0
        %277 = vmatpush1.bf16.msra.mxu0 0
        %278 = vmatprep.subr.bf16.mxu0 0
        %279 = vmatpush1.bf16.msra.mxu0 0
        %280 = vmatprep.subr.bf16.mxu0 0
        %281 = vmatpush1.bf16.msra.mxu0 0
        %282 = vmatprep.subr.bf16.mxu0 0
        %283 = vmatpush1.bf16.msra.mxu0 0
        %284 = vmatprep.subr.bf16.mxu0 0
        %285 = vmatpush1.bf16.msra.mxu0 0
        %286 = vmatprep.subr.bf16.mxu0 0
        %287 = vmatpush1.bf16.msra.mxu0 0
        %288 = vmatprep.subr.bf16.mxu0 0
        %289 = vmatpush1.bf16.msra.mxu0 0
        %290 = vmatprep.subr.bf16.mxu0 0
        %291 = vmatpush1.bf16.msra.mxu0 0
        %292 = vmatprep.mubr.bf16.mxu0 0
        %293 = vmatmul.mubr.bf16.gmra.mrb[0].mxu0 %v258
        %v294 = vpop.f32.mrb[0].mxu0
        %v295 = vadd.f32 %v242, %v294
        %v296 = vpop.f32.mrb[0].mxu0
        %v297 = vpop.f32.mrb[0].mxu0
        %v298 = vpop.f32.mrb[0].mxu0
        %299 = vdwg.mxu0
        %300 = vst.msk [vmem:[%s216] sm:$0xff] %vm256, %v295
        %s301 = sand.u32 %s128, 1
        %s302 = scalar_lea.sflag [#allocation3], %s301
        %s303 = sand.u32 %s128, 1
        %s304 = smul.addr %s303, 8
        %s305 = scalar_lea.vmem [#allocation2], %s304
        // Predicated region
        $region33: #{sparse_attention.5} parent=31 // pred_check
          %p306 = pneg %p138
        $region34: #{sparse_attention.5} parent=31 // pred_check_branch
          %308 = sbr.rel (%p306) target = $region36
        $region35: #{sparse_attention.5} parent=31 // pred_region
          %s310 = ssub.s32 128, 128
          %311 = vsyncadd %s302, %s310
          %s312 = sadd.s32 %s24, %s23
          %s313 = sadd.s32 %s312, %s22
          %s314 = smul.addr %s313, 128
          %s315 = scalar_lea.hbm %s3, %s314
          %s317 = sshll.u32 %s305, 4
          %s318 = int_to_ptr.vmem [resolvable:$true] %s317
          %320 = dma.vmem_to_hbm [thread:$0]  %s318, 128, %s315, %s302
        $region36: #{sparse_attention.5} parent=31 // pred_fallthru
          _
      $region32: #{sparse_attention.5} parent=5 // pred_fallthru
        _
      %p321 = scmp.le.s32.totalorder 2, %s12
      // Predicated region
      $region37: #{sparse_attention.5} parent=5 // pred_check
        %p322 = pneg %p321
      $region38: #{sparse_attention.5} parent=5 // pred_check_branch
        %324 = sbr.rel (%p322) target = $region40
      $region39: #{sparse_attention.5} parent=5 // pred_region
        %s325 = ssub.s32 %s12, 2
        // Predicated region
        $region41: #{sparse_attention.5} parent=39 // pred_check
          %p326 = pneg %p144
        $region42: #{sparse_attention.5} parent=39 // pred_check_branch
          %328 = sbr.rel (%p326) target = $region44
        $region43: #{sparse_attention.5} parent=39 // pred_region
          %s329 = sand.u32 %s129, 1
          %s330 = scalar_lea.sflag [#allocation3], %s329
          %s331 = sand.u32 %s129, 1
          %s332 = smul.addr %s331, 8
          %s333 = scalar_lea.vmem [#allocation2], %s332
          %334 = dma.done %s330, 128
        $region44: #{sparse_attention.5} parent=39 // pred_fallthru
          _
      $region40: #{sparse_attention.5} parent=5 // pred_fallthru
        _
    $region6: #{sparse_attention.5} parent=1 // loop_footer
      %s16 = sadd.s32 1, %s12
    $region7: #{sparse_attention.5} parent=1 // loop_footer_branch
      %11 = sbr.rel target = $region3
    $region8: #{sparse_attention.5} parent=1 // loop_exit
      _
    %335 = vsyncpa [#allocation3], 1
    %s336 = scalar_lea.sflag [#allocation3], 1
    %337 = vsyncpa %s336, 1

// kernel: sparse_attention.4
$region0: #{sparse_attention.4}
  #allocation0 [shape = 'u32[]', space=smem, size = 0x4, offset = 0x4, fixed_abs, tag = 'smem constant byte address 0x4 - core index']
  #allocation1 [shape = 'u32[144,128]{1,0:T(1,128)}', space=vmem, size = 0x12000, scoped, tag = 'internal scratch']
  #allocation2 [shape = 'f32[4,8,1]{2,1,0:T(8,128)}', space=vmem, size = 0x4000, scoped, tag = 'scratch operand']
  #allocation3 [shape = 'f32[4,8,1]{2,1,0:T(8,128)}', space=vmem, size = 0x4000, scoped, tag = 'scratch operand']
  #allocation4 [shape = 'f32[4,8,8]{2,1,0:T(8,128)}', space=vmem, size = 0x4000, scoped, tag = 'scratch operand']
  #allocation5 [shape = 's32[1]{0}', space=sflag, size = 0x4, scoped, tag = 'scoped memory for sparse_attention.4']
  #allocation6 [shape = 's32[1]{0:T(128)S(6)}', space=smem, size = 0x200, scoped, tag = 'prefetched SMEM operand 0']
  #allocation7 [shape = 's32[1]{0:T(128)S(6)}', space=smem, size = 0x200, scoped, tag = 'prefetched SMEM operand 1']
  %s0 = inlined_call_operand.<no memory space> [shape: s32[1], index: 0, kind: input, shape index: {}]
  %s1 = inlined_call_operand.<no memory space> [shape: s32[1], index: 1, kind: input, shape index: {}]
  %s2 = inlined_call_operand.vmem [shape: bf16[2,8,32], index: 2, kind: input, shape index: {}]
  %s3 = inlined_call_operand.vmem [shape: bf16[2,8,32], index: 3, kind: input, shape index: {}]
  %s4 = inlined_call_operand.vmem [shape: bf16[2,8,32], index: 4, kind: input, shape index: {}]
  %s5 = inlined_call_operand.vmem [shape: bf16[2,8,32], index: 5, kind: output, shape index: {}]
  %s6 = sld [smem:[#allocation0]]
  $region57: #{sparse_attention.4} parent=0
    _
  %s8 = ssub.s32 1, %s6
  %s9 = scalar_select 0, %s8, %s6
  %10 = sst [smem:[#allocation6]] %s0
  %11 = sst [smem:[#allocation7]] %s1
  loop: start=0, step=1, limit=4
  $region2: #{sparse_attention.4} parent=0 // loop_pre_header
    _
  $region3: #{sparse_attention.4} parent=0 // loop_header
    %s13 = sphi 0, %s17
    %p14 = scmp.ge.s32.totalorder %s13, 4
    %s20 = sphi 0, %s46
    %s21 = sphi 0, %s42
    %s22 = sphi 0, %s38
    %s23 = sphi 0, %s34
    %s24 = sphi 0, %s20
    %s25 = sphi 0, %s21
    %s26 = sphi 0, %s22
    %s27 = sphi 0, %s23
    %s28 = sphi 0, %s24
    %s29 = sphi 0, %s25
    %s30 = sphi 0, %s26
    %s31 = sphi 0, %s27
    %s53 = sphi 0, %s55
    %s56 = sphi 0, %s53
    %s57 = sphi 0, %s56
    %s73 = sphi 0, %s57
    %s87 = sphi 0, %s89
    %s90 = sphi 0, %s87
    %s91 = sphi 0, %s90
    %s107 = sphi 0, %s91
    %s121 = sphi 0, %s123
    %s124 = sphi 0, %s121
    %s125 = sphi 0, %s124
    %s141 = sphi 0, %s125
    %s151 = sphi 0, %s153
    %s154 = sphi 0, %s151
    %s155 = sphi 0, %s154
    %s171 = sphi 0, %s155
  $region4: #{sparse_attention.4} parent=0 // loop_header_branch
    %16 = sbr.rel (%p14) target = $region8
  $region5: #{sparse_attention.4} parent=0 // loop_body
    %s18 = ssub.s32 %s13, 1
    %s19 = ssub.s32 %s13, 2
    %s32 = sadd.s32 1, %s23
    %p33 = scmp.ge.s32.totalorder %s32, 1
    %s34 = scalar_select %p33, 0, %s32
    %s35 = sadd.s32 1, %s22
    %s36 = scalar_select %p33, %s35, %s22
    %p37 = scmp.ge.s32.totalorder %s36, 1
    %s38 = scalar_select %p37, 0, %s36
    %s39 = sadd.s32 1, %s21
    %s40 = scalar_select %p37, %s39, %s21
    %p41 = scmp.ge.s32.totalorder %s40, 1
    %s42 = scalar_select %p41, 0, %s40
    %s43 = sadd.s32 1, %s20
    %s44 = scalar_select %p41, %s43, %s20
    %p45 = scmp.ge.s32.totalorder %s44, 2
    %s46 = scalar_select %p45, 0, %s44
    %s47 = ssub.s32 %s20, %s46
    %s48 = ssub.s32 %s22, %s38
    %s49 = sor.u32 %s47, %s48
    %s50 = ssub.s32 %s21, %s42
    %s51 = sor.u32 %s49, %s50
    %p52 = scmp.eq.s32.totalorder %s51, 0
    %s54 = sadd.s32 %s53, 1
    %s55 = scalar_select %p52, %s53, %s54
    %p58 = pneg %p52
    %p59 = scmp.eq.s32.totalorder %s13, 1
    %p60 = por %p58, %p59
    %p61 = scmp.ne.s32.totalorder %s53, %s56
    %p62 = scmp.eq.s32.totalorder %s13, 0
    %p63 = por %p61, %p62
    %p64 = scmp.ne.s32.totalorder %s53, %s56
    %p65 = scmp.eq.s32.totalorder %s18, 1
    %p66 = por %p64, %p65
    %p67 = scmp.ne.s32.totalorder %s56, %s57
    %p68 = scmp.eq.s32.totalorder %s18, 0
    %p69 = por %p67, %p68
    %p70 = scmp.ne.s32.totalorder %s56, %s57
    %p71 = scmp.eq.s32.totalorder %s19, 1
    %p72 = por %p70, %p71
    %p74 = scmp.ne.s32.totalorder %s57, %s73
    %p75 = scmp.eq.s32.totalorder %s19, 0
    %p76 = por %p74, %p75
    %s77 = sadd.s32 %s22, %s23
    %s78 = sld [smem:[#allocation6 + %s77]]
    %s79 = sadd.s32 %s38, %s34
    %s80 = sld [smem:[#allocation6 + %s79]]
    %s81 = ssub.s32 %s20, %s46
    %s82 = ssub.s32 %s78, %s80
    %s83 = sor.u32 %s81, %s82
    %s84 = ssub.s32 %s21, %s42
    %s85 = sor.u32 %s83, %s84
    %p86 = scmp.eq.s32.totalorder %s85, 0
    %s88 = sadd.s32 %s87, 1
    %s89 = scalar_select %p86, %s87, %s88
    %p92 = pneg %p86
    %p93 = scmp.eq.s32.totalorder %s13, 1
    %p94 = por %p92, %p93
    %p95 = scmp.ne.s32.totalorder %s87, %s90
    %p96 = scmp.eq.s32.totalorder %s13, 0
    %p97 = por %p95, %p96
    %p98 = scmp.ne.s32.totalorder %s87, %s90
    %p99 = scmp.eq.s32.totalorder %s18, 1
    %p100 = por %p98, %p99
    %p101 = scmp.ne.s32.totalorder %s90, %s91
    %p102 = scmp.eq.s32.totalorder %s18, 0
    %p103 = por %p101, %p102
    %p104 = scmp.ne.s32.totalorder %s90, %s91
    %p105 = scmp.eq.s32.totalorder %s19, 1
    %p106 = por %p104, %p105
    %p108 = scmp.ne.s32.totalorder %s91, %s107
    %p109 = scmp.eq.s32.totalorder %s19, 0
    %p110 = por %p108, %p109
    %s111 = sadd.s32 %s22, %s23
    %s112 = sld [smem:[#allocation6 + %s111]]
    %s113 = sadd.s32 %s38, %s34
    %s114 = sld [smem:[#allocation6 + %s113]]
    %s115 = ssub.s32 %s20, %s46
    %s116 = ssub.s32 %s112, %s114
    %s117 = sor.u32 %s115, %s116
    %s118 = ssub.s32 %s21, %s42
    %s119 = sor.u32 %s117, %s118
    %p120 = scmp.eq.s32.totalorder %s119, 0
    %s122 = sadd.s32 %s121, 1
    %s123 = scalar_select %p120, %s121, %s122
    %p126 = pneg %p120
    %p127 = scmp.eq.s32.totalorder %s13, 1
    %p128 = por %p126, %p127
    %p129 = scmp.ne.s32.totalorder %s121, %s124
    %p130 = scmp.eq.s32.totalorder %s13, 0
    %p131 = por %p129, %p130
    %p132 = scmp.ne.s32.totalorder %s121, %s124
    %p133 = scmp.eq.s32.totalorder %s18, 1
    %p134 = por %p132, %p133
    %p135 = scmp.ne.s32.totalorder %s124, %s125
    %p136 = scmp.eq.s32.totalorder %s18, 0
    %p137 = por %p135, %p136
    %p138 = scmp.ne.s32.totalorder %s124, %s125
    %p139 = scmp.eq.s32.totalorder %s19, 1
    %p140 = por %p138, %p139
    %p142 = scmp.ne.s32.totalorder %s125, %s141
    %p143 = scmp.eq.s32.totalorder %s19, 0
    %p144 = por %p142, %p143
    %s145 = ssub.s32 %s20, %s46
    %s146 = ssub.s32 %s22, %s38
    %s147 = sor.u32 %s145, %s146
    %s148 = ssub.s32 %s21, %s42
    %s149 = sor.u32 %s147, %s148
    %p150 = scmp.eq.s32.totalorder %s149, 0
    %s152 = sadd.s32 %s151, 1
    %s153 = scalar_select %p150, %s151, %s152
    %p156 = pneg %p150
    %p157 = scmp.eq.s32.totalorder %s13, 1
    %p158 = por %p156, %p157
    %p159 = scmp.ne.s32.totalorder %s151, %s154
    %p160 = scmp.eq.s32.totalorder %s13, 0
    %p161 = por %p159, %p160
    %p162 = scmp.ne.s32.totalorder %s151, %s154
    %p163 = scmp.eq.s32.totalorder %s18, 1
    %p164 = por %p162, %p163
    %p165 = scmp.ne.s32.totalorder %s154, %s155
    %p166 = scmp.eq.s32.totalorder %s18, 0
    %p167 = por %p165, %p166
    %p168 = scmp.ne.s32.totalorder %s154, %s155
    %p169 = scmp.eq.s32.totalorder %s19, 1
    %p170 = por %p168, %p169
    %p172 = scmp.ne.s32.totalorder %s155, %s171
    %p173 = scmp.eq.s32.totalorder %s19, 0
    %p174 = por %p172, %p173
    %p175 = scmp.le.s32.totalorder 1, %s13
    %p176 = scmp.lt.s32.totalorder %s13, 3
    %p177 = pnand %p175, %p176
    %p178 = pneg %p177
    // Predicated region
    $region9: #{sparse_attention.4} parent=5 // pred_check
      _
    $region10: #{sparse_attention.4} parent=5 // pred_check_branch
      %180 = sbr.rel (%p177) target = $region12
    $region11: #{sparse_attention.4} parent=5 // pred_region
      %s181 = ssub.s32 %s13, 1
    $region12: #{sparse_attention.4} parent=5 // pred_fallthru
      _
    %p182 = scmp.lt.s32.totalorder %s13, 2
    // Predicated region
    $region13: #{sparse_attention.4} parent=5 // pred_check
      %p183 = pneg %p182
    $region14: #{sparse_attention.4} parent=5 // pred_check_branch
      %185 = sbr.rel (%p183) target = $region16
    $region15: #{sparse_attention.4} parent=5 // pred_region
      // Predicated region
      $region17: #{sparse_attention.4} parent=15 // pred_check
        %p186 = pneg %p63
      $region18: #{sparse_attention.4} parent=15 // pred_check_branch
        %188 = sbr.rel (%p186) target = $region20
      $region19: #{sparse_attention.4} parent=15 // pred_region
        %p189 = scmp.lt.s32.totalorder %s20, 1
        %s190 = scalar_select %p189, %s20, 1
        %p191 = scmp.lt.s32.totalorder %s22, 0
        %s192 = scalar_select %p191, %s22, 0
        %p193 = scmp.lt.s32.totalorder %s21, 0
        %s194 = scalar_select %p193, %s21, 0
        %s195 = sadd.s32 %s194, %s192
        %s196 = sadd.s32 %s195, %s190
        %s197 = smul.addr %s196, 4
        %s198 = scalar_lea.vmem %s2, %s197
      $region20: #{sparse_attention.4} parent=15 // pred_fallthru
        _
      // Predicated region
      $region21: #{sparse_attention.4} parent=15 // pred_check
        %p199 = pneg %p97
      $region22: #{sparse_attention.4} parent=15 // pred_check_branch
        %201 = sbr.rel (%p199) target = $region24
      $region23: #{sparse_attention.4} parent=15 // pred_region
        %s202 = sadd.s32 %s22, %s23
        %s203 = sld [smem:[#allocation6 + %s202]]
        %p204 = scmp.lt.s32.totalorder %s20, 1
        %s205 = scalar_select %p204, %s20, 1
        %p206 = scmp.lt.s32.totalorder %s203, 0
        %s207 = scalar_select %p206, %s203, 0
        %p208 = scmp.lt.s32.totalorder %s21, 0
        %s209 = scalar_select %p208, %s21, 0
        %s210 = sadd.s32 %s209, %s207
        %s211 = sadd.s32 %s210, %s205
        %s212 = smul.addr %s211, 4
        %s213 = scalar_lea.vmem %s3, %s212
        %s214 = sadd.s32 %s22, %s23
        %s215 = sld [smem:[#allocation6 + %s214]]
      $region24: #{sparse_attention.4} parent=15 // pred_fallthru
        _
      // Predicated region
      $region25: #{sparse_attention.4} parent=15 // pred_check
        %p216 = pneg %p131
      $region26: #{sparse_attention.4} parent=15 // pred_check_branch
        %218 = sbr.rel (%p216) target = $region28
      $region27: #{sparse_attention.4} parent=15 // pred_region
        %s219 = sadd.s32 %s22, %s23
        %s220 = sld [smem:[#allocation6 + %s219]]
        %p221 = scmp.lt.s32.totalorder %s20, 1
        %s222 = scalar_select %p221, %s20, 1
        %p223 = scmp.lt.s32.totalorder %s220, 0
        %s224 = scalar_select %p223, %s220, 0
        %p225 = scmp.lt.s32.totalorder %s21, 0
        %s226 = scalar_select %p225, %s21, 0
        %s227 = sadd.s32 %s226, %s224
        %s228 = sadd.s32 %s227, %s222
        %s229 = smul.addr %s228, 4
        %s230 = scalar_lea.vmem %s4, %s229
        %s231 = sadd.s32 %s22, %s23
        %s232 = sld [smem:[#allocation6 + %s231]]
      $region28: #{sparse_attention.4} parent=15 // pred_fallthru
        _
    $region16: #{sparse_attention.4} parent=5 // pred_fallthru
      _
    %p233 = scmp.le.s32.totalorder 1, %s13
    %p234 = scmp.lt.s32.totalorder %s13, 3
    %p235 = pnand %p233, %p234
    %p236 = pneg %p235
    // Predicated region
    $region29: #{sparse_attention.4} parent=5 // pred_check
      _
    $region30: #{sparse_attention.4} parent=5 // pred_check_branch
      %238 = sbr.rel (%p235) target = $region32
    $region31: #{sparse_attention.4} parent=5 // pred_region
      %s239 = ssub.s32 %s13, 1
      %p240 = scmp.lt.s32.totalorder %s24, 1
      %s241 = scalar_select %p240, %s24, 1
      %p242 = scmp.lt.s32.totalorder %s26, 0
      %s243 = scalar_select %p242, %s26, 0
      %p244 = scmp.lt.s32.totalorder %s25, 0
      %s245 = scalar_select %p244, %s25, 0
      %s246 = sadd.s32 %s245, %s243
      %s247 = sadd.s32 %s246, %s241
      %s248 = smul.addr %s247, 4
      %s249 = scalar_lea.vmem %s2, %s248
      %p250 = pneg %p69
      %p251 = pneg %p66
      %s252 = sadd.s32 %s26, %s27
      %s253 = sld [smem:[#allocation6 + %s252]]
      %p254 = scmp.lt.s32.totalorder %s24, 1
      %s255 = scalar_select %p254, %s24, 1
      %p256 = scmp.lt.s32.totalorder %s253, 0
      %s257 = scalar_select %p256, %s253, 0
      %p258 = scmp.lt.s32.totalorder %s25, 0
      %s259 = scalar_select %p258, %s25, 0
      %s260 = sadd.s32 %s259, %s257
      %s261 = sadd.s32 %s260, %s255
      %s262 = smul.addr %s261, 4
      %s263 = scalar_lea.vmem %s3, %s262
      %p264 = pneg %p103
      %p265 = pneg %p100
      %s266 = sadd.s32 %s26, %s27
      %s267 = sld [smem:[#allocation6 + %s266]]
      %p268 = scmp.lt.s32.totalorder %s24, 1
      %s269 = scalar_select %p268, %s24, 1
      %p270 = scmp.lt.s32.totalorder %s267, 0
      %s271 = scalar_select %p270, %s267, 0
      %p272 = scmp.lt.s32.totalorder %s25, 0
      %s273 = scalar_select %p272, %s25, 0
      %s274 = sadd.s32 %s273, %s271
      %s275 = sadd.s32 %s274, %s269
      %s276 = smul.addr %s275, 4
      %s277 = scalar_lea.vmem %s4, %s276
      %p278 = pneg %p137
      %p279 = pneg %p134
      %p280 = pneg %p167
      %p281 = pneg %p164
      %p282 = scmp.lt.s32.totalorder %s24, 1
      %s283 = scalar_select %p282, %s24, 1
      %p284 = scmp.lt.s32.totalorder %s26, 0
      %s285 = scalar_select %p284, %s26, 0
      %p286 = scmp.lt.s32.totalorder %s25, 0
      %s287 = scalar_select %p286, %s25, 0
      %s288 = sadd.s32 %s287, %s285
      %s289 = sadd.s32 %s288, %s283
      %s290 = smul.addr %s289, 4
      %s291 = scalar_lea.vmem %s5, %s290
      %p292 = scmp.lt.s32.totalorder %s24, 1
      %s293 = scalar_select %p292, %s24, 1
      %p294 = scmp.lt.s32.totalorder %s26, 0
      %s295 = scalar_select %p294, %s26, 0
      %p296 = scmp.lt.s32.totalorder %s25, 0
      %s297 = scalar_select %p296, %s25, 0
      %s298 = sadd.s32 %s297, %s295
      %s299 = sadd.s32 %s298, %s293
      %s300 = smul.addr %s299, 4
      %s301 = scalar_lea.vmem %s2, %s300
      %s302 = sadd.s32 %s26, %s27
      %s303 = sld [smem:[#allocation6 + %s302]]
      %p304 = scmp.lt.s32.totalorder %s24, 1
      %s305 = scalar_select %p304, %s24, 1
      %p306 = scmp.lt.s32.totalorder %s303, 0
      %s307 = scalar_select %p306, %s303, 0
      %p308 = scmp.lt.s32.totalorder %s25, 0
      %s309 = scalar_select %p308, %s25, 0
      %s310 = sadd.s32 %s309, %s307
      %s311 = sadd.s32 %s310, %s305
      %s312 = smul.addr %s311, 4
      %s313 = scalar_lea.vmem %s3, %s312
      %s314 = sadd.s32 %s26, %s27
      %s315 = sld [smem:[#allocation6 + %s314]]
      %s316 = sadd.s32 %s26, %s27
      %s317 = sld [smem:[#allocation6 + %s316]]
      %p318 = scmp.lt.s32.totalorder %s24, 1
      %s319 = scalar_select %p318, %s24, 1
      %p320 = scmp.lt.s32.totalorder %s317, 0
      %s321 = scalar_select %p320, %s317, 0
      %p322 = scmp.lt.s32.totalorder %s25, 0
      %s323 = scalar_select %p322, %s25, 0
      %s324 = sadd.s32 %s323, %s321
      %s325 = sadd.s32 %s324, %s319
      %s326 = smul.addr %s325, 4
      %s327 = scalar_lea.vmem %s4, %s326
      %s328 = sadd.s32 %s26, %s27
      %s329 = sld [smem:[#allocation6 + %s328]]
      %p330 = scmp.lt.s32.totalorder %s24, 1
      %s331 = scalar_select %p330, %s24, 1
      %p332 = scmp.lt.s32.totalorder %s26, 0
      %s333 = scalar_select %p332, %s26, 0
      %p334 = scmp.lt.s32.totalorder %s25, 0
      %s335 = scalar_select %p334, %s25, 0
      %s336 = sadd.s32 %s335, %s333
      %s337 = sadd.s32 %s336, %s331
      %s338 = smul.addr %s337, 4
      %s339 = scalar_lea.vmem %s5, %s338
      %p341 = scmp.eq.s32.totalorder %s27, 0
      // Predicated region
      $region33: #{sparse_attention.4} parent=31 // pred_check
        %p342 = pneg %p341
      $region34: #{sparse_attention.4} parent=31 // pred_check_branch
        %344 = sbr.rel (%p342) target = $region36
      $region35: #{sparse_attention.4} parent=31 // pred_region
        %vm345 = vcmask 7168
        %346 = vst.msk [vmem:[#allocation2] sm:$0xff] %vm345, -1e+30
        %347 = vst.msk [vmem:[#allocation2 + $0x8] sm:$0xff] %vm345, -1e+30
        %348 = vst.msk [vmem:[#allocation2 + $0x10] sm:$0xff] %vm345, -1e+30
        %349 = vst.msk [vmem:[#allocation2 + $0x18] sm:$0xff] %vm345, -1e+30
        %350 = vst.msk [vmem:[#allocation3] sm:$0xff] %vm345, 0.0
        %351 = vst.msk [vmem:[#allocation3 + $0x8] sm:$0xff] %vm345, 0.0
        %352 = vst.msk [vmem:[#allocation3 + $0x10] sm:$0xff] %vm345, 0.0
        %353 = vst.msk [vmem:[#allocation3 + $0x18] sm:$0xff] %vm345, 0.0
        %vm354 = vcmask 64512
        %355 = vst.msk [vmem:[#allocation4] sm:$0xff] %vm354, 0.0
        %356 = vst.msk [vmem:[#allocation4 + $0x8] sm:$0xff] %vm354, 0.0
        %357 = vst.msk [vmem:[#allocation4 + $0x10] sm:$0xff] %vm354, 0.0
        %358 = vst.msk [vmem:[#allocation4 + $0x18] sm:$0xff] %vm354, 0.0
      $region36: #{sparse_attention.4} parent=31 // pred_fallthru
        _
      %s359 = sld [smem:[#allocation7 + %s26]]
      %p360 = scmp.lt.s32.totalorder %s27, %s359
      // Predicated region
      $region37: #{sparse_attention.4} parent=31 // pred_check
        %p361 = pneg %p360
      $region38: #{sparse_attention.4} parent=31 // pred_check_branch
        %363 = sbr.rel (%p361) target = $region40
      $region39: #{sparse_attention.4} parent=31 // pred_region
        %v364 = vld [vmem:[%s301] sm:$0xf]
        %v365 = vld [vmem:[%s313] sm:$0xf]
        %v366 = vld [vmem:[%s327] sm:$0xf]
        %s367 = sadd.s32 %s26, %s27
        %s368 = sld [smem:[#allocation6 + %s367]]
        %s369 = smul.u32 %s26, 8
        %v370 = vlaneseq
        %v371 = vshrl.u32 %v370, 7
        %v372 = vstv %s369
        %v373 = vadd.s32 %v372, %v371
        %s374 = smul.u32 %s368, 8
        %v375 = vlaneseq
        %v376 = vand.u32 %v375, 127
        %v377 = vstv %s374
        %v378 = vadd.s32 %v377, %v376
        %v379 = vsub.s32 %v373, 2
        %vm380 = vcmp.ge.s32.totalorder %v378, %v379
        %v381 = vadd.s32 %v373, 2
        %vm382 = vcmp.le.s32.totalorder %v378, %v381
        %vm383 = vmand %vm380, %vm382
        %v384 = vand.u32 %v378, 1
        %v385 = vand.u32 %v373, 1
        %vm386 = vcmp.eq.s32.totalorder %v384, %v385
        %vm387 = vmor %vm383, %vm386
        %vm388 = vcmask 64512
        %v390 = vsel %vm388, %v364, 0
        %v393 = vsel %vm388, %v365, 0
        %395 = vmatprep.subr.bf16.mxu0 0
        %396 = vmatpush1.bf16.xpose.msra.mxu0 %v393
        %397 = vmatprep.subr.bf16.mxu0 0
        %398 = vmatpush1.bf16.xpose.msra.mxu0 0
        %399 = vmatprep.subr.bf16.mxu0 0
        %400 = vmatpush1.bf16.xpose.msra.mxu0 0
        %401 = vmatprep.subr.bf16.mxu0 0
        %402 = vmatpush1.bf16.xpose.msra.mxu0 0
        %403 = vmatprep.subr.bf16.mxu0 0
        %404 = vmatpush1.bf16.xpose.msra.mxu0 0
        %405 = vmatprep.subr.bf16.mxu0 0
        %406 = vmatpush1.bf16.xpose.msra.mxu0 0
        %407 = vmatprep.subr.bf16.mxu0 0
        %408 = vmatpush1.bf16.xpose.msra.mxu0 0
        %409 = vmatprep.subr.bf16.mxu0 0
        %410 = vmatpush1.bf16.xpose.msra.mxu0 0
        %411 = vmatprep.subr.bf16.mxu0 0
        %412 = vmatpush1.bf16.xpose.msra.mxu0 0
        %413 = vmatprep.subr.bf16.mxu0 0
        %414 = vmatpush1.bf16.xpose.msra.mxu0 0
        %415 = vmatprep.subr.bf16.mxu0 0
        %416 = vmatpush1.bf16.xpose.msra.mxu0 0
        %417 = vmatprep.subr.bf16.mxu0 0
        %418 = vmatpush1.bf16.xpose.msra.mxu0 0
        %419 = vmatprep.subr.bf16.mxu0 0
        %420 = vmatpush1.bf16.xpose.msra.mxu0 0
        %421 = vmatprep.subr.bf16.mxu0 0
        %422 = vmatpush1.bf16.xpose.msra.mxu0 0
        %423 = vmatprep.subr.bf16.mxu0 0
        %424 = vmatpush1.bf16.xpose.msra.mxu0 0
        %425 = vmatprep.subr.bf16.mxu0 0
        %426 = vmatpush1.bf16.xpose.msra.mxu0 0
        %427 = vmatprep.mubr.bf16.mxu0 0
        %428 = vmatmul.mubr.bf16.gmra.mrb[0].mxu0 %v390
        %v429 = vpop.f32.mrb[0].mxu0
        %v430 = vadd.f32 0.0, %v429
        %v431 = vpop.f32.mrb[0].mxu0
        %v432 = vpop.f32.mrb[0].mxu0
        %v433 = vpop.f32.mrb[0].mxu0
        %434 = vdwg.mxu0
        %v435 = vsel %vm387, %v430, -1e+30
        %v436 = vld [vmem:[#allocation2] sm:$0xff]
        %v437 = vsel %vm388, %v435, -inf
        %438 = vmax.xlane.f32.xlu0 %v437
        %v439 = vpop.xlane.xlu0 %438
        %v440 = vmax.f32 %v436, %v439
        %v441 = vsub.f32 %v436, %v440
        %v442 = vmul.f32 %v441, 1.442695
        %v443 = vpow.pop %v442
        %445 = vset.pattern.permute.xlu0 0
        %446 = vperm.xlu0 %445, %v440
        %v447 = vpop.permute.xlu0 %446
        %v449 = vsub.f32 %v435, %v447
        %v450 = vmul.f32 %v449, 1.442695
        %v451 = vpow.pop %v450
        %v452 = vsel %vm387, %v451, 0.0
        %v453 = vld [vmem:[#allocation3] sm:$0xff]
        %v454 = vmul.f32 %v443, %v453
        %v455 = vsel %vm388, %v452, 0.0
        %456 = vadd.xlane.f32.xlu0 %v455
        %v457 = vpop.xlane.xlu0 %456
        %v458 = vadd.f32 %v454, %v457
        %vm459 = vcmask 7168
        %460 = vst.msk [vmem:[#allocation3] sm:$0xff] %vm459, %v458
        %v461 = vld [vmem:[#allocation4] sm:$0xff]
        %463 = vset.pattern.permute.xlu0 0
        %464 = vperm.xlu0 %463, %v443
        %v465 = vpop.permute.xlu0 %464
        %v467 = vmul.f32 %v465, %v461
        %v468 = vpack.c.bf16 %v452, %v452
        %v470 = vsel %vm388, %v468, 0
        %vm472 = vcmask 1043456
        %v474 = vsel %vm472, %v366, 0
        %476 = vmatprep.subr.bf16.mxu0 0
        %477 = vmatpush1.bf16.msra.mxu0 %v474
        %478 = vmatprep.subr.bf16.mxu0 0
        %479 = vmatpush1.bf16.msra.mxu0 0
        %480 = vmatprep.subr.bf16.mxu0 0
        %481 = vmatpush1.bf16.msra.mxu0 0
        %482 = vmatprep.subr.bf16.mxu0 0
        %483 = vmatpush1.bf16.msra.mxu0 0
        %484 = vmatprep.subr.bf16.mxu0 0
        %485 = vmatpush1.bf16.msra.mxu0 0
        %486 = vmatprep.subr.bf16.mxu0 0
        %487 = vmatpush1.bf16.msra.mxu0 0
        %488 = vmatprep.subr.bf16.mxu0 0
        %489 = vmatpush1.bf16.msra.mxu0 0
        %490 = vmatprep.subr.bf16.mxu0 0
        %491 = vmatpush1.bf16.msra.mxu0 0
        %492 = vmatprep.subr.bf16.mxu0 0
        %493 = vmatpush1.bf16.msra.mxu0 0
        %494 = vmatprep.subr.bf16.mxu0 0
        %495 = vmatpush1.bf16.msra.mxu0 0
        %496 = vmatprep.subr.bf16.mxu0 0
        %497 = vmatpush1.bf16.msra.mxu0 0
        %498 = vmatprep.subr.bf16.mxu0 0
        %499 = vmatpush1.bf16.msra.mxu0 0
        %500 = vmatprep.subr.bf16.mxu0 0
        %501 = vmatpush1.bf16.msra.mxu0 0
        %502 = vmatprep.subr.bf16.mxu0 0
        %503 = vmatpush1.bf16.msra.mxu0 0
        %504 = vmatprep.subr.bf16.mxu0 0
        %505 = vmatpush1.bf16.msra.mxu0 0
        %506 = vmatprep.subr.bf16.mxu0 0
        %507 = vmatpush1.bf16.msra.mxu0 0
        %508 = vmatprep.mubr.bf16.mxu0 0
        %509 = vmatmul.mubr.bf16.gmra.mrb[0].mxu0 %v470
        %v510 = vpop.f32.mrb[0].mxu0
        %v511 = vadd.f32 0.0, %v510
        %v512 = vpop.f32.mrb[0].mxu0
        %v513 = vpop.f32.mrb[0].mxu0
        %v514 = vpop.f32.mrb[0].mxu0
        %515 = vdwg.mxu0
        %v516 = vadd.f32 %v467, %v511
        %517 = vst.msk [vmem:[#allocation4] sm:$0xff] %vm388, %v516
        %518 = vst.msk [vmem:[#allocation2] sm:$0xff] %vm459, %v440
        %v520 = vunpack.c.l.b16 %v364
        %v521 = vpack.c.b16 %v520, %v520
        %522 = vrot.lane.b32.xlu0 %v521, 120
        %v523 = vpop.permute.xlu0 %522
        %v525 = vunpack.c.l.b16 %v365
        %v526 = vpack.c.b16 %v525, %v525
        %527 = vrot.lane.b32.xlu0 %v526, 120
        %v528 = vpop.permute.xlu0 %527
        %v530 = vsel %vm388, %v523, 0
        %v533 = vsel %vm388, %v528, 0
        %535 = vmatprep.subr.bf16.mxu0 0
        %536 = vmatpush1.bf16.xpose.msra.mxu0 %v533
        %537 = vmatprep.subr.bf16.mxu0 0
        %538 = vmatpush1.bf16.xpose.msra.mxu0 0
        %539 = vmatprep.subr.bf16.mxu0 0
        %540 = vmatpush1.bf16.xpose.msra.mxu0 0
        %541 = vmatprep.subr.bf16.mxu0 0
        %542 = vmatpush1.bf16.xpose.msra.mxu0 0
        %543 = vmatprep.subr.bf16.mxu0 0
        %544 = vmatpush1.bf16.xpose.msra.mxu0 0
        %545 = vmatprep.subr.bf16.mxu0 0
        %546 = vmatpush1.bf16.xpose.msra.mxu0 0
        %547 = vmatprep.subr.bf16.mxu0 0
        %548 = vmatpush1.bf16.xpose.msra.mxu0 0
        %549 = vmatprep.subr.bf16.mxu0 0
        %550 = vmatpush1.bf16.xpose.msra.mxu0 0
        %551 = vmatprep.subr.bf16.mxu0 0
        %552 = vmatpush1.bf16.xpose.msra.mxu0 0
        %553 = vmatprep.subr.bf16.mxu0 0
        %554 = vmatpush1.bf16.xpose.msra.mxu0 0
        %555 = vmatprep.subr.bf16.mxu0 0
        %556 = vmatpush1.bf16.xpose.msra.mxu0 0
        %557 = vmatprep.subr.bf16.mxu0 0
        %558 = vmatpush1.bf16.xpose.msra.mxu0 0
        %559 = vmatprep.subr.bf16.mxu0 0
        %560 = vmatpush1.bf16.xpose.msra.mxu0 0
        %561 = vmatprep.subr.bf16.mxu0 0
        %562 = vmatpush1.bf16.xpose.msra.mxu0 0
        %563 = vmatprep.subr.bf16.mxu0 0
        %564 = vmatpush1.bf16.xpose.msra.mxu0 0
        %565 = vmatprep.subr.bf16.mxu0 0
        %566 = vmatpush1.bf16.xpose.msra.mxu0 0
        %567 = vmatprep.mubr.bf16.mxu0 0
        %568 = vmatmul.mubr.bf16.gmra.mrb[0].mxu0 %v530
        %v569 = vpop.f32.mrb[0].mxu0
        %v570 = vadd.f32 0.0, %v569
        %v571 = vpop.f32.mrb[0].mxu0
        %v572 = vpop.f32.mrb[0].mxu0
        %v573 = vpop.f32.mrb[0].mxu0
        %574 = vdwg.mxu0
        %v575 = vsel %vm387, %v570, -1e+30
        %s576 = scalar_lea.vmem [#allocation2], 8
        %v577 = vld [vmem:[%s576] sm:$0xff]
        %v578 = vsel %vm388, %v575, -inf
        %579 = vmax.xlane.f32.xlu0 %v578
        %v580 = vpop.xlane.xlu0 %579
        %v581 = vmax.f32 %v577, %v580
        %v582 = vsub.f32 %v577, %v581
        %v583 = vmul.f32 %v582, 1.442695
        %v584 = vpow.pop %v583
        %586 = vset.pattern.permute.xlu0 0
        %587 = vperm.xlu0 %586, %v581
        %v588 = vpop.permute.xlu0 %587
        %v590 = vsub.f32 %v575, %v588
        %v591 = vmul.f32 %v590, 1.442695
        %v592 = vpow.pop %v591
        %v593 = vsel %vm387, %v592, 0.0
        %s594 = scalar_lea.vmem [#allocation3], 8
        %v595 = vld [vmem:[%s594] sm:$0xff]
        %v596 = vmul.f32 %v584, %v595
        %v597 = vsel %vm388, %v593, 0.0
        %598 = vadd.xlane.f32.xlu0 %v597
        %v599 = vpop.xlane.xlu0 %598
        %v600 = vadd.f32 %v596, %v599
        %601 = vst.msk [vmem:[%s594] sm:$0xff] %vm459, %v600
        %s602 = scalar_lea.vmem [#allocation4], 8
        %v603 = vld [vmem:[%s602] sm:$0xff]
        %605 = vset.pattern.permute.xlu0 0
        %606 = vperm.xlu0 %605, %v584
        %v607 = vpop.permute.xlu0 %606
        %v609 = vmul.f32 %v607, %v603
        %v610 = vpack.c.bf16 %v593, %v593
        %v612 = vunpack.c.l.b16 %v366
        %v613 = vpack.c.b16 %v612, %v612
        %614 = vrot.lane.b32.xlu0 %v613, 120
        %v615 = vpop.permute.xlu0 %614
        %v617 = vsel %vm388, %v610, 0
        %v620 = vsel %vm472, %v615, 0
        %622 = vmatprep.subr.bf16.mxu0 0
        %623 = vmatpush1.bf16.msra.mxu0 %v620
        %624 = vmatprep.subr.bf16.mxu0 0
        %625 = vmatpush1.bf16.msra.mxu0 0
        %626 = vmatprep.subr.bf16.mxu0 0
        %627 = vmatpush1.bf16.msra.mxu0 0
        %628 = vmatprep.subr.bf16.mxu0 0
        %629 = vmatpush1.bf16.msra.mxu0 0
        %630 = vmatprep.subr.bf16.mxu0 0
        %631 = vmatpush1.bf16.msra.mxu0 0
        %632 = vmatprep.subr.bf16.mxu0 0
        %633 = vmatpush1.bf16.msra.mxu0 0
        %634 = vmatprep.subr.bf16.mxu0 0
        %635 = vmatpush1.bf16.msra.mxu0 0
        %636 = vmatprep.subr.bf16.mxu0 0
        %637 = vmatpush1.bf16.msra.mxu0 0
        %638 = vmatprep.subr.bf16.mxu0 0
        %639 = vmatpush1.bf16.msra.mxu0 0
        %640 = vmatprep.subr.bf16.mxu0 0
        %641 = vmatpush1.bf16.msra.mxu0 0
        %642 = vmatprep.subr.bf16.mxu0 0
        %643 = vmatpush1.bf16.msra.mxu0 0
        %644 = vmatprep.subr.bf16.mxu0 0
        %645 = vmatpush1.bf16.msra.mxu0 0
        %646 = vmatprep.subr.bf16.mxu0 0
        %647 = vmatpush1.bf16.msra.mxu0 0
        %648 = vmatprep.subr.bf16.mxu0 0
        %649 = vmatpush1.bf16.msra.mxu0 0
        %650 = vmatprep.subr.bf16.mxu0 0
        %651 = vmatpush1.bf16.msra.mxu0 0
        %652 = vmatprep.subr.bf16.mxu0 0
        %653 = vmatpush1.bf16.msra.mxu0 0
        %654 = vmatprep.mubr.bf16.mxu0 0
        %655 = vmatmul.mubr.bf16.gmra.mrb[0].mxu0 %v617
        %v656 = vpop.f32.mrb[0].mxu0
        %v657 = vadd.f32 0.0, %v656
        %v658 = vpop.f32.mrb[0].mxu0
        %v659 = vpop.f32.mrb[0].mxu0
        %v660 = vpop.f32.mrb[0].mxu0
        %661 = vdwg.mxu0
        %v662 = vadd.f32 %v609, %v657
        %663 = vst.msk [vmem:[%s602] sm:$0xff] %vm388, %v662
        %664 = vst.msk [vmem:[%s576] sm:$0xff] %vm459, %v581
        %665 = vrot.lane.b32.xlu0 %v521, 112
        %v666 = vpop.permute.xlu0 %665
        %667 = vrot.lane.b32.xlu0 %v526, 112
        %v668 = vpop.permute.xlu0 %667
        %v670 = vsel %vm388, %v666, 0
        %v673 = vsel %vm388, %v668, 0
        %675 = vmatprep.subr.bf16.mxu0 0
        %676 = vmatpush1.bf16.xpose.msra.mxu0 %v673
        %677 = vmatprep.subr.bf16.mxu0 0
        %678 = vmatpush1.bf16.xpose.msra.mxu0 0
        %679 = vmatprep.subr.bf16.mxu0 0
        %680 = vmatpush1.bf16.xpose.msra.mxu0 0
        %681 = vmatprep.subr.bf16.mxu0 0
        %682 = vmatpush1.bf16.xpose.msra.mxu0 0
        %683 = vmatprep.subr.bf16.mxu0 0
        %684 = vmatpush1.bf16.xpose.msra.mxu0 0
        %685 = vmatprep.subr.bf16.mxu0 0
        %686 = vmatpush1.bf16.xpose.msra.mxu0 0
        %687 = vmatprep.subr.bf16.mxu0 0
        %688 = vmatpush1.bf16.xpose.msra.mxu0 0
        %689 = vmatprep.subr.bf16.mxu0 0
        %690 = vmatpush1.bf16.xpose.msra.mxu0 0
        %691 = vmatprep.subr.bf16.mxu0 0
        %692 = vmatpush1.bf16.xpose.msra.mxu0 0
        %693 = vmatprep.subr.bf16.mxu0 0
        %694 = vmatpush1.bf16.xpose.msra.mxu0 0
        %695 = vmatprep.subr.bf16.mxu0 0
        %696 = vmatpush1.bf16.xpose.msra.mxu0 0
        %697 = vmatprep.subr.bf16.mxu0 0
        %698 = vmatpush1.bf16.xpose.msra.mxu0 0
        %699 = vmatprep.subr.bf16.mxu0 0
        %700 = vmatpush1.bf16.xpose.msra.mxu0 0
        %701 = vmatprep.subr.bf16.mxu0 0
        %702 = vmatpush1.bf16.xpose.msra.mxu0 0
        %703 = vmatprep.subr.bf16.mxu0 0
        %704 = vmatpush1.bf16.xpose.msra.mxu0 0
        %705 = vmatprep.subr.bf16.mxu0 0
        %706 = vmatpush1.bf16.xpose.msra.mxu0 0
        %707 = vmatprep.mubr.bf16.mxu0 0
        %708 = vmatmul.mubr.bf16.gmra.mrb[0].mxu0 %v670
        %v709 = vpop.f32.mrb[0].mxu0
        %v710 = vadd.f32 0.0, %v709
        %v711 = vpop.f32.mrb[0].mxu0
        %v712 = vpop.f32.mrb[0].mxu0
        %v713 = vpop.f32.mrb[0].mxu0
        %714 = vdwg.mxu0
        %v715 = vsel %vm387, %v710, -1e+30
        %s716 = scalar_lea.vmem [#allocation2], 16
        %v717 = vld [vmem:[%s716] sm:$0xff]
        %v718 = vsel %vm388, %v715, -inf
        %719 = vmax.xlane.f32.xlu0 %v718
        %v720 = vpop.xlane.xlu0 %719
        %v721 = vmax.f32 %v717, %v720
        %v722 = vsub.f32 %v717, %v721
        %v723 = vmul.f32 %v722, 1.442695
        %v724 = vpow.pop %v723
        %726 = vset.pattern.permute.xlu0 0
        %727 = vperm.xlu0 %726, %v721
        %v728 = vpop.permute.xlu0 %727
        %v730 = vsub.f32 %v715, %v728
        %v731 = vmul.f32 %v730, 1.442695
        %v732 = vpow.pop %v731
        %v733 = vsel %vm387, %v732, 0.0
        %s734 = scalar_lea.vmem [#allocation3], 16
        %v735 = vld [vmem:[%s734] sm:$0xff]
        %v736 = vmul.f32 %v724, %v735
        %v737 = vsel %vm388, %v733, 0.0
        %738 = vadd.xlane.f32.xlu0 %v737
        %v739 = vpop.xlane.xlu0 %738
        %v740 = vadd.f32 %v736, %v739
        %741 = vst.msk [vmem:[%s734] sm:$0xff] %vm459, %v740
        %s742 = scalar_lea.vmem [#allocation4], 16
        %v743 = vld [vmem:[%s742] sm:$0xff]
        %745 = vset.pattern.permute.xlu0 0
        %746 = vperm.xlu0 %745, %v724
        %v747 = vpop.permute.xlu0 %746
        %v749 = vmul.f32 %v747, %v743
        %v750 = vpack.c.bf16 %v733, %v733
        %751 = vrot.lane.b32.xlu0 %v613, 112
        %v752 = vpop.permute.xlu0 %751
        %v754 = vsel %vm388, %v750, 0
        %v757 = vsel %vm472, %v752, 0
        %759 = vmatprep.subr.bf16.mxu0 0
        %760 = vmatpush1.bf16.msra.mxu0 %v757
        %761 = vmatprep.subr.bf16.mxu0 0
        %762 = vmatpush1.bf16.msra.mxu0 0
        %763 = vmatprep.subr.bf16.mxu0 0
        %764 = vmatpush1.bf16.msra.mxu0 0
        %765 = vmatprep.subr.bf16.mxu0 0
        %766 = vmatpush1.bf16.msra.mxu0 0
        %767 = vmatprep.subr.bf16.mxu0 0
        %768 = vmatpush1.bf16.msra.mxu0 0
        %769 = vmatprep.subr.bf16.mxu0 0
        %770 = vmatpush1.bf16.msra.mxu0 0
        %771 = vmatprep.subr.bf16.mxu0 0
        %772 = vmatpush1.bf16.msra.mxu0 0
        %773 = vmatprep.subr.bf16.mxu0 0
        %774 = vmatpush1.bf16.msra.mxu0 0
        %775 = vmatprep.subr.bf16.mxu0 0
        %776 = vmatpush1.bf16.msra.mxu0 0
        %777 = vmatprep.subr.bf16.mxu0 0
        %778 = vmatpush1.bf16.msra.mxu0 0
        %779 = vmatprep.subr.bf16.mxu0 0
        %780 = vmatpush1.bf16.msra.mxu0 0
        %781 = vmatprep.subr.bf16.mxu0 0
        %782 = vmatpush1.bf16.msra.mxu0 0
        %783 = vmatprep.subr.bf16.mxu0 0
        %784 = vmatpush1.bf16.msra.mxu0 0
        %785 = vmatprep.subr.bf16.mxu0 0
        %786 = vmatpush1.bf16.msra.mxu0 0
        %787 = vmatprep.subr.bf16.mxu0 0
        %788 = vmatpush1.bf16.msra.mxu0 0
        %789 = vmatprep.subr.bf16.mxu0 0
        %790 = vmatpush1.bf16.msra.mxu0 0
        %791 = vmatprep.mubr.bf16.mxu0 0
        %792 = vmatmul.mubr.bf16.gmra.mrb[0].mxu0 %v754
        %v793 = vpop.f32.mrb[0].mxu0
        %v794 = vadd.f32 0.0, %v793
        %v795 = vpop.f32.mrb[0].mxu0
        %v796 = vpop.f32.mrb[0].mxu0
        %v797 = vpop.f32.mrb[0].mxu0
        %798 = vdwg.mxu0
        %v799 = vadd.f32 %v749, %v794
        %800 = vst.msk [vmem:[%s742] sm:$0xff] %vm388, %v799
        %801 = vst.msk [vmem:[%s716] sm:$0xff] %vm459, %v721
        %802 = vrot.lane.b32.xlu0 %v521, 104
        %v803 = vpop.permute.xlu0 %802
        %804 = vrot.lane.b32.xlu0 %v526, 104
        %v805 = vpop.permute.xlu0 %804
        %v807 = vsel %vm388, %v803, 0
        %v810 = vsel %vm388, %v805, 0
        %812 = vmatprep.subr.bf16.mxu0 0
        %813 = vmatpush1.bf16.xpose.msra.mxu0 %v810
        %814 = vmatprep.subr.bf16.mxu0 0
        %815 = vmatpush1.bf16.xpose.msra.mxu0 0
        %816 = vmatprep.subr.bf16.mxu0 0
        %817 = vmatpush1.bf16.xpose.msra.mxu0 0
        %818 = vmatprep.subr.bf16.mxu0 0
        %819 = vmatpush1.bf16.xpose.msra.mxu0 0
        %820 = vmatprep.subr.bf16.mxu0 0
        %821 = vmatpush1.bf16.xpose.msra.mxu0 0
        %822 = vmatprep.subr.bf16.mxu0 0
        %823 = vmatpush1.bf16.xpose.msra.mxu0 0
        %824 = vmatprep.subr.bf16.mxu0 0
        %825 = vmatpush1.bf16.xpose.msra.mxu0 0
        %826 = vmatprep.subr.bf16.mxu0 0
        %827 = vmatpush1.bf16.xpose.msra.mxu0 0
        %828 = vmatprep.subr.bf16.mxu0 0
        %829 = vmatpush1.bf16.xpose.msra.mxu0 0
        %830 = vmatprep.subr.bf16.mxu0 0
        %831 = vmatpush1.bf16.xpose.msra.mxu0 0
        %832 = vmatprep.subr.bf16.mxu0 0
        %833 = vmatpush1.bf16.xpose.msra.mxu0 0
        %834 = vmatprep.subr.bf16.mxu0 0
        %835 = vmatpush1.bf16.xpose.msra.mxu0 0
        %836 = vmatprep.subr.bf16.mxu0 0
        %837 = vmatpush1.bf16.xpose.msra.mxu0 0
        %838 = vmatprep.subr.bf16.mxu0 0
        %839 = vmatpush1.bf16.xpose.msra.mxu0 0
        %840 = vmatprep.subr.bf16.mxu0 0
        %841 = vmatpush1.bf16.xpose.msra.mxu0 0
        %842 = vmatprep.subr.bf16.mxu0 0
        %843 = vmatpush1.bf16.xpose.msra.mxu0 0
        %844 = vmatprep.mubr.bf16.mxu0 0
        %845 = vmatmul.mubr.bf16.gmra.mrb[0].mxu0 %v807
        %v846 = vpop.f32.mrb[0].mxu0
        %v847 = vadd.f32 0.0, %v846
        %v848 = vpop.f32.mrb[0].mxu0
        %v849 = vpop.f32.mrb[0].mxu0
        %v850 = vpop.f32.mrb[0].mxu0
        %851 = vdwg.mxu0
        %v852 = vsel %vm387, %v847, -1e+30
        %s853 = scalar_lea.vmem [#allocation2], 24
        %v854 = vld [vmem:[%s853] sm:$0xff]
        %v855 = vsel %vm388, %v852, -inf
        %856 = vmax.xlane.f32.xlu0 %v855
        %v857 = vpop.xlane.xlu0 %856
        %v858 = vmax.f32 %v854, %v857
        %v859 = vsub.f32 %v854, %v858
        %v860 = vmul.f32 %v859, 1.442695
        %v861 = vpow.pop %v860
        %863 = vset.pattern.permute.xlu0 0
        %864 = vperm.xlu0 %863, %v858
        %v865 = vpop.permute.xlu0 %864
        %v867 = vsub.f32 %v852, %v865
        %v868 = vmul.f32 %v867, 1.442695
        %v869 = vpow.pop %v868
        %v870 = vsel %vm387, %v869, 0.0
        %s871 = scalar_lea.vmem [#allocation3], 24
        %v872 = vld [vmem:[%s871] sm:$0xff]
        %v873 = vmul.f32 %v861, %v872
        %v874 = vsel %vm388, %v870, 0.0
        %875 = vadd.xlane.f32.xlu0 %v874
        %v876 = vpop.xlane.xlu0 %875
        %v877 = vadd.f32 %v873, %v876
        %878 = vst.msk [vmem:[%s871] sm:$0xff] %vm459, %v877
        %s879 = scalar_lea.vmem [#allocation4], 24
        %v880 = vld [vmem:[%s879] sm:$0xff]
        %882 = vset.pattern.permute.xlu0 0
        %883 = vperm.xlu0 %882, %v861
        %v884 = vpop.permute.xlu0 %883
        %v886 = vmul.f32 %v884, %v880
        %v887 = vpack.c.bf16 %v870, %v870
        %888 = vrot.lane.b32.xlu0 %v613, 104
        %v889 = vpop.permute.xlu0 %888
        %v891 = vsel %vm388, %v887, 0
        %v894 = vsel %vm472, %v889, 0
        %896 = vmatprep.subr.bf16.mxu0 0
        %897 = vmatpush1.bf16.msra.mxu0 %v894
        %898 = vmatprep.subr.bf16.mxu0 0
        %899 = vmatpush1.bf16.msra.mxu0 0
        %900 = vmatprep.subr.bf16.mxu0 0
        %901 = vmatpush1.bf16.msra.mxu0 0
        %902 = vmatprep.subr.bf16.mxu0 0
        %903 = vmatpush1.bf16.msra.mxu0 0
        %904 = vmatprep.subr.bf16.mxu0 0
        %905 = vmatpush1.bf16.msra.mxu0 0
        %906 = vmatprep.subr.bf16.mxu0 0
        %907 = vmatpush1.bf16.msra.mxu0 0
        %908 = vmatprep.subr.bf16.mxu0 0
        %909 = vmatpush1.bf16.msra.mxu0 0
        %910 = vmatprep.subr.bf16.mxu0 0
        %911 = vmatpush1.bf16.msra.mxu0 0
        %912 = vmatprep.subr.bf16.mxu0 0
        %913 = vmatpush1.bf16.msra.mxu0 0
        %914 = vmatprep.subr.bf16.mxu0 0
        %915 = vmatpush1.bf16.msra.mxu0 0
        %916 = vmatprep.subr.bf16.mxu0 0
        %917 = vmatpush1.bf16.msra.mxu0 0
        %918 = vmatprep.subr.bf16.mxu0 0
        %919 = vmatpush1.bf16.msra.mxu0 0
        %920 = vmatprep.subr.bf16.mxu0 0
        %921 = vmatpush1.bf16.msra.mxu0 0
        %922 = vmatprep.subr.bf16.mxu0 0
        %923 = vmatpush1.bf16.msra.mxu0 0
        %924 = vmatprep.subr.bf16.mxu0 0
        %925 = vmatpush1.bf16.msra.mxu0 0
        %926 = vmatprep.subr.bf16.mxu0 0
        %927 = vmatpush1.bf16.msra.mxu0 0
        %928 = vmatprep.mubr.bf16.mxu0 0
        %929 = vmatmul.mubr.bf16.gmra.mrb[0].mxu0 %v891
        %v930 = vpop.f32.mrb[0].mxu0
        %v931 = vadd.f32 0.0, %v930
        %v932 = vpop.f32.mrb[0].mxu0
        %v933 = vpop.f32.mrb[0].mxu0
        %v934 = vpop.f32.mrb[0].mxu0
        %935 = vdwg.mxu0
        %v936 = vadd.f32 %v886, %v931
        %937 = vst.msk [vmem:[%s879] sm:$0xff] %vm388, %v936
        %938 = vst.msk [vmem:[%s853] sm:$0xff] %vm459, %v858
      $region40: #{sparse_attention.4} parent=31 // pred_fallthru
        _
      // Predicated region
      $region41: #{sparse_attention.4} parent=31 // pred_check
        %p939 = pneg %p341
      $region42: #{sparse_attention.4} parent=31 // pred_check_branch
        %941 = sbr.rel (%p939) target = $region44
      $region43: #{sparse_attention.4} parent=31 // pred_region
        %v942 = vld [vmem:[#allocation3] sm:$0xff]
        %vm943 = vcmp.eq.f32.partialorder %v942, 0.0
        %v944 = vsel %vm943, 1.0, %v942
        %v945 = vrcp.pop %v944
        %v946 = vld [vmem:[#allocation4] sm:$0xff]
        %948 = vset.pattern.permute.xlu0 0
        %949 = vperm.xlu0 %948, %v945
        %v950 = vpop.permute.xlu0 %949
        %v952 = vmul.f32 %v946, %v950
        %s953 = scalar_lea.vmem [#allocation3], 8
        %v954 = vld [vmem:[%s953] sm:$0xff]
        %vm955 = vcmp.eq.f32.partialorder %v954, 0.0
        %v956 = vsel %vm955, 1.0, %v954
        %v957 = vrcp.pop %v956
        %s958 = scalar_lea.vmem [#allocation4], 8
        %v959 = vld [vmem:[%s958] sm:$0xff]
        %961 = vset.pattern.permute.xlu0 0
        %962 = vperm.xlu0 %961, %v957
        %v963 = vpop.permute.xlu0 %962
        %v965 = vmul.f32 %v959, %v963
        %s966 = scalar_lea.vmem [#allocation3], 16
        %v967 = vld [vmem:[%s966] sm:$0xff]
        %vm968 = vcmp.eq.f32.partialorder %v967, 0.0
        %v969 = vsel %vm968, 1.0, %v967
        %v970 = vrcp.pop %v969
        %s971 = scalar_lea.vmem [#allocation4], 16
        %v972 = vld [vmem:[%s971] sm:$0xff]
        %974 = vset.pattern.permute.xlu0 0
        %975 = vperm.xlu0 %974, %v970
        %v976 = vpop.permute.xlu0 %975
        %v978 = vmul.f32 %v972, %v976
        %s979 = scalar_lea.vmem [#allocation3], 24
        %v980 = vld [vmem:[%s979] sm:$0xff]
        %vm981 = vcmp.eq.f32.partialorder %v980, 0.0
        %v982 = vsel %vm981, 1.0, %v980
        %v983 = vrcp.pop %v982
        %s984 = scalar_lea.vmem [#allocation4], 24
        %v985 = vld [vmem:[%s984] sm:$0xff]
        %987 = vset.pattern.permute.xlu0 0
        %988 = vperm.xlu0 %987, %v983
        %v989 = vpop.permute.xlu0 %988
        %v991 = vmul.f32 %v985, %v989
        %993 = vrot.lane.b32.xlu0 %v965, 8
        %v994 = vpop.permute.xlu0 %993
        %997 = vrot.lane.b32.xlu0 %v978, 16
        %v998 = vpop.permute.xlu0 %997
        %1001 = vrot.lane.b32.xlu0 %v991, 24
        %v1002 = vpop.permute.xlu0 %1001
        %vm1004 = vcmask 64512
        %v1005 = vsel %vm1004, %v952, %v994
        %vm1006 = vcmask 130048
        %v1007 = vsel %vm1006, %v1005, %v998
        %vm1008 = vcmask 195584
        %v1009 = vsel %vm1008, %v1007, %v1002
        %v1010 = vpack.c.bf16 %v1009, %v1009
        %vm1011 = vcmask 257024
        %1012 = vst.msk [vmem:[%s339] sm:$0xf] %vm1011, %v1010
      $region44: #{sparse_attention.4} parent=31 // pred_fallthru
        _
      %p1013 = scmp.lt.s32.totalorder %s24, 1
      %s1014 = scalar_select %p1013, %s24, 1
      %p1015 = scmp.lt.s32.totalorder %s26, 0
      %s1016 = scalar_select %p1015, %s26, 0
      %p1017 = scmp.lt.s32.totalorder %s25, 0
      %s1018 = scalar_select %p1017, %s25, 0
      %s1019 = sadd.s32 %s1018, %s1016
      %s1020 = sadd.s32 %s1019, %s1014
      %s1021 = smul.addr %s1020, 4
      %s1022 = scalar_lea.vmem %s5, %s1021
      // Predicated region
      $region45: #{sparse_attention.4} parent=31 // pred_check
        %p1023 = pneg %p164
      $region46: #{sparse_attention.4} parent=31 // pred_check_branch
        %1025 = sbr.rel (%p1023) target = $region48
      $region47: #{sparse_attention.4} parent=31 // pred_region
        _
      $region48: #{sparse_attention.4} parent=31 // pred_fallthru
        _
    $region32: #{sparse_attention.4} parent=5 // pred_fallthru
      _
    %p1026 = scmp.le.s32.totalorder 2, %s13
    // Predicated region
    $region49: #{sparse_attention.4} parent=5 // pred_check
      %p1027 = pneg %p1026
    $region50: #{sparse_attention.4} parent=5 // pred_check_branch
      %1029 = sbr.rel (%p1027) target = $region52
    $region51: #{sparse_attention.4} parent=5 // pred_region
      %s1030 = ssub.s32 %s13, 2
      // Predicated region
      $region53: #{sparse_attention.4} parent=51 // pred_check
        %p1031 = pneg %p170
      $region54: #{sparse_attention.4} parent=51 // pred_check_branch
        %1033 = sbr.rel (%p1031) target = $region56
      $region55: #{sparse_attention.4} parent=51 // pred_region
        %p1034 = scmp.lt.s32.totalorder %s28, 1
        %s1035 = scalar_select %p1034, %s28, 1
        %p1036 = scmp.lt.s32.totalorder %s30, 0
        %s1037 = scalar_select %p1036, %s30, 0
        %p1038 = scmp.lt.s32.totalorder %s29, 0
        %s1039 = scalar_select %p1038, %s29, 0
        %s1040 = sadd.s32 %s1039, %s1037
        %s1041 = sadd.s32 %s1040, %s1035
        %s1042 = smul.addr %s1041, 4
        %s1043 = scalar_lea.vmem %s5, %s1042
      $region56: #{sparse_attention.4} parent=51 // pred_fallthru
        _
    $region52: #{sparse_attention.4} parent=5 // pred_fallthru
      _
  $region6: #{sparse_attention.4} parent=0 // loop_footer
    %s17 = sadd.s32 1, %s13
  $region7: #{sparse_attention.4} parent=0 // loop_footer_branch
    %12 = sbr.rel target = $region3
  $region8: #{sparse_attention.4} parent=0 // loop_exit
    _

</llo_original>
